<compile_context>
chip_gen: v5e
topology: v5e:2x2
jax: 0.10.0
libtpu: 0.0.40
codegen_flags: <defaults>
</compile_context>

<pallas_src>
import math

import numpy as np

import jax
import jax.numpy as jnp
from jax.experimental import pallas as pl
from jax.experimental.pallas import tpu as pltpu


# --------------------------------------------------------------------------- Pallas kernels


def _mm_bias_kernel(a_ref, w_ref, b_ref, o_ref):
    # out = A @ W + bias.  A is cast in-kernel to W's dtype (bf16 for convs), accumulation
    # and bias epilogue stay f32.
    a = a_ref[...].astype(w_ref.dtype)
    acc = jnp.dot(a, w_ref[...], preferred_element_type=jnp.float32)
    o_ref[...] = (acc + b_ref[...]).astype(o_ref.dtype)


def _resize_kernel(mk_ref, y_ref, o_ref):
    # Bilinear resize as an f32 matmul (exact interp weights); bf16 output (feeds mix).
    o_ref[...] = jnp.dot(mk_ref[...], y_ref[...],
                         preferred_element_type=jnp.float32).astype(o_ref.dtype)


def _resize_res_kernel(mk_ref, y_ref, r_ref, o_ref, s_ref):
    # val = resize(y); emits val (bf16, feeds mix) and val + residual (f32, feeds next conv).
    val = jnp.dot(mk_ref[...], y_ref[...], preferred_element_type=jnp.float32)
    o_ref[...] = val.astype(o_ref.dtype)
    s_ref[...] = (val + r_ref[...]).astype(s_ref.dtype)


def _mix_fused_kernel(x_ref, o0_ref, o1_ref, o2_ref, o3_ref,
                      wm_ref, bm_ref, wmm_ref, bmm_ref, o_ref):
    # mix:  cat(out0..out3) @ Wm + bm   — split-K in-kernel, no concatenate materialized.
    acc = jnp.dot(o0_ref[...].astype(jnp.bfloat16), wm_ref[0:64, :],
                  preferred_element_type=jnp.float32)
    acc = acc + jnp.dot(o1_ref[...], wm_ref[64:128, :], preferred_element_type=jnp.float32)
    acc = acc + jnp.dot(o2_ref[...], wm_ref[128:192, :], preferred_element_type=jnp.float32)
    acc = acc + jnp.dot(o3_ref[...], wm_ref[192:256, :], preferred_element_type=jnp.float32)
    mix_out = (acc + bm_ref[...]).astype(jnp.bfloat16)   # never leaves VMEM

    # mix_: cat(x, mix_out) @ Wmm + bmm
    acc2 = jnp.dot(x_ref[...].astype(jnp.bfloat16), wmm_ref[0:128, :],
                   preferred_element_type=jnp.float32)
    acc2 = acc2 + jnp.dot(mix_out, wmm_ref[128:256, :], preferred_element_type=jnp.float32)
    o_ref[...] = (acc2 + bmm_ref[...]).astype(o_ref.dtype)


# --------------------------------------------------------------------------- call helpers


def _bytes(*arrs):
    return int(sum(math.prod(a.shape) * jnp.dtype(a.dtype).itemsize for a in arrs))


def _full_spec(shape):
    nd = len(shape)
    return pl.BlockSpec(tuple(shape), lambda i, _nd=nd: (0,) * _nd)


def _single_block_call(kernel, inputs, out_shapes, flops):
    """pallas_call with a single full-array block per operand (grid=(1,)).

    All operand sets in this network are <~1 MB, so a single VMEM-resident block is both
    the fastest and the simplest tiling on v5e/v6e/v7x.
    """
    multi = isinstance(out_shapes, (tuple, list))
    outs = tuple(out_shapes) if multi else (out_shapes,)
    cost = pl.CostEstimate(flops=int(flops), transcendentals=0,
                           bytes_accessed=_bytes(*inputs, *outs))
    in_specs = [_full_spec(x.shape) for x in inputs]
    out_specs = tuple(_full_spec(s.shape) for s in outs)
    return pl.pallas_call(
        kernel,
        out_shape=tuple(outs) if multi else outs[0],
        grid_spec=pltpu.PrefetchScalarGridSpec(
            num_scalar_prefetch=0,
            grid=(1,),
            in_specs=in_specs,
            out_specs=out_specs if multi else out_specs[0],
        ),
        compiler_params=pltpu.CompilerParams(dimension_semantics=("arbitrary",)),
        cost_estimate=cost,
    )(*inputs)


def matmul_bias(a, w_packed, b_row, out_dtype=jnp.float32):
    """Fused (a @ W) + bias; W is pre-packed (K, N) bf16, bias pre-packed (1, N) f32."""
    M, K = a.shape
    _, N = w_packed.shape
    return _single_block_call(
        _mm_bias_kernel, [a, w_packed, b_row],
        jax.ShapeDtypeStruct((M, N), out_dtype),
        flops=2 * M * N * K)


# --------------------------------------------------------------------------- conv / resize glue


def conv2d_hwnc(x_hwnc, w_packed, b_row, ksize, stride):
    """Conv2d (PyTorch cross-correlation, padding=0) + bias on a (H, W, N, Cin) tensor.

    w_packed is the pre-packed (KH*KW*Cin, Cout) bf16 matrix (column order (kh, kw, cin)).
    Returns the flat output (Ho*Wo*N, Cout) with rows ordered (h, w, n), plus (Ho, Wo).
    """
    H, W, N, Cin = x_hwnc.shape
    KH, KW = ksize
    Ho = (H - KH) // stride + 1
    Wo = (W - KW) // stride + 1

    if KH == 1 and KW == 1 and stride == 1:
        patches = x_hwnc.reshape(H * W * N, Cin)
    else:
        # TODO(synk): at larger H/W, fold im2col into the matmul kernel as an "arbitrary"
        # (kh,kw) reduction grid axis; at 16x16 the patches tensor is ~226 KB and harmless.
        taps = [x_hwnc[kh:kh + Ho * stride:stride, kw:kw + Wo * stride:stride]
                for kh in range(KH) for kw in range(KW)]
        patches = jnp.stack(taps, axis=3).reshape(Ho * Wo * N, KH * KW * Cin)

    out = matmul_bias(patches, w_packed, b_row)
    return out, Ho, Wo


def _interp_matrix(out_size, in_size):
    """F.interpolate(mode='bilinear', align_corners=False) weights, as a numpy constant."""
    scale = in_size / out_size
    i = np.arange(out_size, dtype=np.float64)
    s = np.maximum((i + 0.5) * scale - 0.5, 0.0)
    i0 = np.clip(np.floor(s).astype(np.int64), 0, in_size - 1)
    i1 = np.minimum(i0 + 1, in_size - 1)
    frac = s - i0
    m = np.zeros((out_size, in_size), np.float64)
    rows = np.arange(out_size)
    np.add.at(m, (rows, i0), 1.0 - frac)
    np.add.at(m, (rows, i1), frac)
    return m.astype(np.float32)


def bilinear_upsample(y_flat, hi, wi, ho, wo, nb, c, residual_flat=None):
    """Bilinear resize of y_flat ((hi*wi*nb, c), rows (h, w, n)) to (ho*wo*nb, c).

    One Pallas f32 matmul with a baked-in interpolation matrix (exact align_corners=False
    weights).  The resized branch is written bf16 (its only consumer is the mix matmul);
    when `residual_flat` is given the fused f32 `resized + residual` (next conv's input)
    is produced as a second output in the same pass.
    """
    k = hi * wi
    m, n = ho * wo, nb * c
    mk = jnp.asarray(np.kron(_interp_matrix(ho, hi), _interp_matrix(wo, wi)),
                     dtype=jnp.float32)                       # (ho*wo, hi*wi) constant
    yr = y_flat.reshape(k, n)                                 # contiguous view reshape

    if residual_flat is None:
        out = _single_block_call(
            _resize_kernel, [mk, yr],
            jax.ShapeDtypeStruct((m, n), jnp.bfloat16),
            flops=2 * m * n * k)
        return out.reshape(ho * wo * nb, c)

    r = residual_flat.reshape(m, n)
    out, out_sum = _single_block_call(
        _resize_res_kernel, [mk, yr, r],
        (jax.ShapeDtypeStruct((m, n), jnp.bfloat16),
         jax.ShapeDtypeStruct((m, n), jnp.float32)),
        flops=2 * m * n * k)
    return out.reshape(ho * wo * nb, c), out_sum.reshape(ho * wo * nb, c)


def mix_fused(x_flat, out0_flat, out1_flat, out2_flat, out3_flat, wm, bm, wmm, bmm):
    """mix (256->128 1x1) + mix_ (256->64 1x1) in ONE kernel; mix_out stays on-chip."""
    M = x_flat.shape[0]
    return _single_block_call(
        _mix_fused_kernel,
        [x_flat, out0_flat, out1_flat, out2_flat, out3_flat, wm, bm, wmm, bmm],
        jax.ShapeDtypeStruct((M, 64), jnp.float32),
        flops=2 * M * 256 * 128 + 2 * M * 256 * 64)


# --------------------------------------------------------------------------- parameters


def init_pem(key):
    """Deterministic synthetic PEM parameters in PyTorch layout (Cout, Cin, KH, KW)."""
    def conv(k, cout, cin, kh, kw):
        kw_key, kb_key = jax.random.split(k)
        fan_in = cin * kh * kw
        w = jax.random.normal(kw_key, (cout, cin, kh, kw), jnp.float32) * math.sqrt(2.0 / fan_in)
        b = 0.01 * jax.random.normal(kb_key, (cout,), jnp.float32)
        return w, b

    ks = jax.random.split(key, 6)
    return {
        "conv0": conv(ks[0], 64, 128, 1, 1),
        "conv1": conv(ks[1], 64, 64, 3, 3),
        "conv2": conv(ks[2], 64, 64, 3, 3),
        "conv3": conv(ks[3], 64, 64, 3, 3),
        "mix":   conv(ks[4], 128, 4 * 64, 1, 1),
        "mix_":  conv(ks[5], 64, 2 * 128, 1, 1),
    }


def prepare_pem(params):
    """One-time weight packing: (K, Cout) bf16 matmul weights + (1, Cout) f32 bias rows."""
    def pack_1x1(wb):
        w, b = wb
        cout, cin = int(w.shape[0]), int(w.shape[1])
        return (jnp.asarray(w.reshape(cout, cin).T, dtype=jnp.bfloat16),
                jnp.asarray(b.reshape(1, cout), dtype=jnp.float32))

    def pack_3x3(wb):
        w, b = wb
        cout, cin, kh, kw = (int(s) for s in w.shape)
        wmat = jnp.transpose(w, (2, 3, 1, 0)).reshape(kh * kw * cin, cout)
        return (wmat.astype(jnp.bfloat16),
                jnp.asarray(b.reshape(1, cout), dtype=jnp.float32))

    return {
        "conv0": pack_1x1(params["conv0"]),
        "conv1": pack_3x3(params["conv1"]),
        "conv2": pack_3x3(params["conv2"]),
        "conv3": pack_3x3(params["conv3"]),
        "mix":   pack_1x1(params["mix"]),
        "mix_":  pack_1x1(params["mix_"]),
    }


# --------------------------------------------------------------------------- forward


def pem_forward(p, x_nchw):
    nb, cin, H, W = x_nchw.shape
    x_hwnc = jnp.transpose(x_nchw, (2, 3, 0, 1)).astype(jnp.float32)     # (H, W, N, C)
    x_flat = x_hwnc.reshape(H * W * nb, cin)

    # out0 = conv0(x)                       1x1, 128 -> 64
    w0, b0 = p["conv0"]
    out0_flat = matmul_bias(x_flat, w0, b0)                              # (HWN, 64) f32
    out0_hwnc = out0_flat.reshape(H, W, nb, 64)

    # out1 = up(conv1(out0)); conv2 input = out0 + out1 (fused into the resize kernel)
    w1, b1 = p["conv1"]
    y1, h1, wd1 = conv2d_hwnc(out0_hwnc, w1, b1, (3, 3), stride=2)
    out1_flat, in2_flat = bilinear_upsample(y1, h1, wd1, H, W, nb, 64,
                                            residual_flat=out0_flat)

    # out2 = up(conv2(out0 + out1)); conv3 input = out0 + out2 (fused)
    w2, b2 = p["conv2"]
    y2, h2, wd2 = conv2d_hwnc(in2_flat.reshape(H, W, nb, 64), w2, b2, (3, 3), stride=4)
    out2_flat, in3_flat = bilinear_upsample(y2, h2, wd2, H, W, nb, 64,
                                            residual_flat=out0_flat)

    # out3 = up(conv3(out0 + out2))
    w3, b3 = p["conv3"]
    y3, h3, wd3 = conv2d_hwnc(in3_flat.reshape(H, W, nb, 64), w3, b3, (3, 3), stride=6)
    out3_flat = bilinear_upsample(y3, h3, wd3, H, W, nb, 64)

    # mix(cat(out0..out3)) then mix_(cat(x, .)) — one fused kernel, split-K, no concats.
    wm, bm = p["mix"]
    wmm, bmm = p["mix_"]
    out_flat = mix_fused(x_flat, out0_flat, out1_flat, out2_flat, out3_flat,
                         wm, bm, wmm, bmm)                               # (HWN, 64) f32

    return jnp.transpose(out_flat.reshape(H, W, nb, 64), (2, 3, 0, 1))   # NCHW


# --------------------------------------------------------------------------- pure-JAX reference


def pem_reference(params, x_nchw):
    """Pure-JAX f32 reference (identical math, HIGHEST matmul precision) for validation."""
    hp = jax.lax.Precision.HIGHEST
    nb, cin, H, W = x_nchw.shape
    x_hwnc = jnp.transpose(x_nchw, (2, 3, 0, 1)).astype(jnp.float32)
    x_flat = x_hwnc.reshape(H * W * nb, cin)

    def conv(x4, w, b, stride):
        cout, ci, kh, kw = w.shape
        hh, ww = x4.shape[0], x4.shape[1]
        ho = (hh - kh) // stride + 1
        wo = (ww - kw) // stride + 1
        taps = [x4[i:i + ho * stride:stride, j:j + wo * stride:stride]
                for i in range(kh) for j in range(kw)]
        patches = jnp.stack(taps, axis=3).reshape(ho * wo * nb, kh * kw * ci)
        wmat = jnp.transpose(w, (2, 3, 1, 0)).reshape(kh * kw * ci, cout)
        return jnp.dot(patches, wmat, precision=hp) + b, ho, wo

    def up(y_flat, hi, wi):
        mk = jnp.asarray(np.kron(_interp_matrix(H, hi), _interp_matrix(W, wi)),
                         dtype=jnp.float32)
        return jnp.dot(mk, y_flat.reshape(hi * wi, nb * 64),
                       precision=hp).reshape(H * W * nb, 64)

    w0, b0 = params["conv0"]
    out0 = jnp.dot(x_flat, w0.reshape(64, cin).T, precision=hp) + b0
    w1, b1 = params["conv1"]
    y1, h1, wd1 = conv(out0.reshape(H, W, nb, 64), w1, b1, 2)
    out1 = up(y1, h1, wd1)
    w2, b2 = params["conv2"]
    y2, h2, wd2 = conv((out0 + out1).reshape(H, W, nb, 64), w2, b2, 4)
    out2 = up(y2, h2, wd2)
    w3, b3 = params["conv3"]
    y3, h3, wd3 = conv((out0 + out2).reshape(H, W, nb, 64), w3, b3, 6)
    out3 = up(y3, h3, wd3)

    wm, bm = params["mix"]
    mix_out = jnp.dot(jnp.concatenate([out0, out1, out2, out3], axis=1),
                      wm.reshape(128, 256).T, precision=hp) + bm
    wmm, bmm = params["mix_"]
    out = jnp.dot(jnp.concatenate([x_flat, mix_out], axis=1),
                  wmm.reshape(64, 256).T, precision=hp) + bmm
    return jnp.transpose(out.reshape(H, W, nb, 64), (2, 3, 0, 1))


# --------------------------------------------------------------------------- main


if __name__ == "__main__":
    key = jax.random.PRNGKey(0)
    pkey, xkey = jax.random.split(key)
    raw_params = init_pem(pkey)
    params = prepare_pem(raw_params)       # one-time weight packing (outside jit)

    # PEM expects 128 input channels; 16x16 spatial is the smallest comfortable size for
    # the stride-2/4/6 valid convolutions.
    x = jax.random.normal(xkey, (2, 128, 16, 16), jnp.float32)

    fwd = jax.jit(pem_forward)
    out = jax.block_until_ready(fwd(params, x))

    assert out.shape == (2, 64, 16, 16), out.shape
    assert bool(jnp.all(jnp.isfinite(out)))

    # Validate against an f32 pure-JAX reference; bf16 matmul operands => loose tolerance.
    ref = jax.block_until_ready(jax.jit(pem_reference)(raw_params, x))
    err = float(jnp.max(jnp.abs(out - ref)) / (jnp.max(jnp.abs(ref)) + 1e-6))
    assert err < 0.06, f"normalized max error too large: {err}"

    print("KERNEL_OK")
</pallas_src>

<mosaic_0001>
module attributes {stable_mosaic.version = 11 : i64} {
  func.func @_mm_bias_kernel(%arg0: i32, %arg1: memref<512x128xf32, #tpu.memory_space<vmem>>, %arg2: memref<128x64xbf16, #tpu.memory_space<vmem>>, %arg3: memref<1x64xf32, #tpu.memory_space<vmem>>, %arg4: memref<512x64xf32, #tpu.memory_space<vmem>>) attributes {dimension_semantics = [#tpu.dimension_semantics<arbitrary>], iteration_bounds = array<i64: 1>, scalar_prefetch = 0 : i64, scratch_operands = 0 : i64, tpu.core_type = #tpu.core_type<tc>, window_params = [{pipeline_mode = #tpu.pipeline_mode<synchronous>, transform_indices = @transform_0, window_bounds = array<i64: 512, 128>}, {pipeline_mode = #tpu.pipeline_mode<synchronous>, transform_indices = @transform_1, window_bounds = array<i64: 128, 64>}, {pipeline_mode = #tpu.pipeline_mode<synchronous>, transform_indices = @transform_2, window_bounds = array<i64: 1, 64>}, {pipeline_mode = #tpu.pipeline_mode<synchronous>, transform_indices = @transform_3, window_bounds = array<i64: 512, 64>}]} {
    %c0 = arith.constant 0 : index
    %c0_0 = arith.constant 0 : index
    %0 = vector.load %arg1[%c0, %c0_0] : memref<512x128xf32, #tpu.memory_space<vmem>>, vector<512x128xf32>
    %1 = arith.truncf %0 : vector<512x128xf32> to vector<512x128xbf16>
    %c0_1 = arith.constant 0 : index
    %c0_2 = arith.constant 0 : index
    %2 = vector.load %arg2[%c0_1, %c0_2] : memref<128x64xbf16, #tpu.memory_space<vmem>>, vector<128x64xbf16>
    %cst = arith.constant dense<0.000000e+00> : vector<512x64xf32>
    %3 = tpu.matmul %1, %2, %cst {dimension_numbers = #tpu.dot_dimension_numbers<[1], [0], [0], [1], [0, 0, 1, 1], [], []>} : vector<512x128xbf16>, vector<128x64xbf16>, vector<512x64xf32> -> vector<512x64xf32>
    %c0_3 = arith.constant 0 : index
    %c0_4 = arith.constant 0 : index
    %4 = vector.load %arg3[%c0_3, %c0_4] : memref<1x64xf32, #tpu.memory_space<vmem>>, vector<1x64xf32>
    %5 = vector.broadcast %4 : vector<1x64xf32> to vector<512x64xf32>
    %6 = arith.addf %3, %5 : vector<512x64xf32>
    %c0_5 = arith.constant 0 : index
    %c0_6 = arith.constant 0 : index
    %7 = vector.load %arg4[%c0_5, %c0_6] : memref<512x64xf32, #tpu.memory_space<vmem>>, vector<512x64xf32>
    tpu.vector_store %arg4[%c0_5, %c0_6], %6 {strides = array<i32>} : memref<512x64xf32, #tpu.memory_space<vmem>>, vector<512x64xf32>,
    return
  }
  func.func @transform_0(%arg0: i32) -> (i32, i32) {
    %c0_i32 = arith.constant 0 : i32
    %c0_i32_0 = arith.constant 0 : i32
    %c0_i32_1 = arith.constant 0 : i32
    return %c0_i32, %c0_i32_0 : i32, i32
  }
  func.func @transform_1(%arg0: i32) -> (i32, i32) {
    %c0_i32 = arith.constant 0 : i32
    %c0_i32_0 = arith.constant 0 : i32
    %c0_i32_1 = arith.constant 0 : i32
    return %c0_i32, %c0_i32_0 : i32, i32
  }
  func.func @transform_2(%arg0: i32) -> (i32, i32) {
    %c0_i32 = arith.constant 0 : i32
    %c0_i32_0 = arith.constant 0 : i32
    %c0_i32_1 = arith.constant 0 : i32
    return %c0_i32, %c0_i32_0 : i32, i32
  }
  func.func @transform_3(%arg0: i32) -> (i32, i32) {
    %c0_i32 = arith.constant 0 : i32
    %c0_i32_0 = arith.constant 0 : i32
    %c0_i32_1 = arith.constant 0 : i32
    return %c0_i32, %c0_i32_0 : i32, i32
  }
}

module attributes {stable_mosaic.version = 11 : i64} {
  func.func @_mm_bias_kernel(%arg0: i32, %arg1: memref<98x576xf32, #tpu.memory_space<vmem>>, %arg2: memref<576x64xbf16, #tpu.memory_space<vmem>>, %arg3: memref<1x64xf32, #tpu.memory_space<vmem>>, %arg4: memref<98x64xf32, #tpu.memory_space<vmem>>) attributes {dimension_semantics = [#tpu.dimension_semantics<arbitrary>], iteration_bounds = array<i64: 1>, scalar_prefetch = 0 : i64, scratch_operands = 0 : i64, tpu.core_type = #tpu.core_type<tc>, window_params = [{pipeline_mode = #tpu.pipeline_mode<synchronous>, transform_indices = @transform_0, window_bounds = array<i64: 98, 576>}, {pipeline_mode = #tpu.pipeline_mode<synchronous>, transform_indices = @transform_1, window_bounds = array<i64: 576, 64>}, {pipeline_mode = #tpu.pipeline_mode<synchronous>, transform_indices = @transform_2, window_bounds = array<i64: 1, 64>}, {pipeline_mode = #tpu.pipeline_mode<synchronous>, transform_indices = @transform_3, window_bounds = array<i64: 98, 64>}]} {
    %c0 = arith.constant 0 : index
    %c0_0 = arith.constant 0 : index
    %0 = vector.load %arg1[%c0, %c0_0] : memref<98x576xf32, #tpu.memory_space<vmem>>, vector<98x576xf32>
    %1 = arith.truncf %0 : vector<98x576xf32> to vector<98x576xbf16>
    %c0_1 = arith.constant 0 : index
    %c0_2 = arith.constant 0 : index
    %2 = vector.load %arg2[%c0_1, %c0_2] : memref<576x64xbf16, #tpu.memory_space<vmem>>, vector<576x64xbf16>
    %cst = arith.constant dense<0.000000e+00> : vector<98x64xf32>
    %3 = tpu.matmul %1, %2, %cst {dimension_numbers = #tpu.dot_dimension_numbers<[1], [0], [0], [1], [0, 0, 1, 1], [], []>} : vector<98x576xbf16>, vector<576x64xbf16>, vector<98x64xf32> -> vector<98x64xf32>
    %c0_3 = arith.constant 0 : index
    %c0_4 = arith.constant 0 : index
    %4 = vector.load %arg3[%c0_3, %c0_4] : memref<1x64xf32, #tpu.memory_space<vmem>>, vector<1x64xf32>
    %5 = vector.broadcast %4 : vector<1x64xf32> to vector<98x64xf32>
    %6 = arith.addf %3, %5 : vector<98x64xf32>
    %c0_5 = arith.constant 0 : index
    %c0_6 = arith.constant 0 : index
    %7 = vector.load %arg4[%c0_5, %c0_6] : memref<98x64xf32, #tpu.memory_space<vmem>>, vector<98x64xf32>
    tpu.vector_store %arg4[%c0_5, %c0_6], %6 {strides = array<i32>} : memref<98x64xf32, #tpu.memory_space<vmem>>, vector<98x64xf32>,
    return
  }
  func.func @transform_0(%arg0: i32) -> (i32, i32) {
    %c0_i32 = arith.constant 0 : i32
    %c0_i32_0 = arith.constant 0 : i32
    %c0_i32_1 = arith.constant 0 : i32
    return %c0_i32, %c0_i32_0 : i32, i32
  }
  func.func @transform_1(%arg0: i32) -> (i32, i32) {
    %c0_i32 = arith.constant 0 : i32
    %c0_i32_0 = arith.constant 0 : i32
    %c0_i32_1 = arith.constant 0 : i32
    return %c0_i32, %c0_i32_0 : i32, i32
  }
  func.func @transform_2(%arg0: i32) -> (i32, i32) {
    %c0_i32 = arith.constant 0 : i32
    %c0_i32_0 = arith.constant 0 : i32
    %c0_i32_1 = arith.constant 0 : i32
    return %c0_i32, %c0_i32_0 : i32, i32
  }
  func.func @transform_3(%arg0: i32) -> (i32, i32) {
    %c0_i32 = arith.constant 0 : i32
    %c0_i32_0 = arith.constant 0 : i32
    %c0_i32_1 = arith.constant 0 : i32
    return %c0_i32, %c0_i32_0 : i32, i32
  }
}

module attributes {stable_mosaic.version = 11 : i64} {
  func.func @_resize_res_kernel(%arg0: i32, %arg1: memref<256x49xf32, #tpu.memory_space<vmem>>, %arg2: memref<49x128xf32, #tpu.memory_space<vmem>>, %arg3: memref<256x128xf32, #tpu.memory_space<vmem>>, %arg4: memref<256x128xbf16, #tpu.memory_space<vmem>>, %arg5: memref<256x128xf32, #tpu.memory_space<vmem>>) attributes {dimension_semantics = [#tpu.dimension_semantics<arbitrary>], iteration_bounds = array<i64: 1>, scalar_prefetch = 0 : i64, scratch_operands = 0 : i64, tpu.core_type = #tpu.core_type<tc>, window_params = [{pipeline_mode = #tpu.pipeline_mode<synchronous>, transform_indices = @transform_0, window_bounds = array<i64: 256, 49>}, {pipeline_mode = #tpu.pipeline_mode<synchronous>, transform_indices = @transform_1, window_bounds = array<i64: 49, 128>}, {pipeline_mode = #tpu.pipeline_mode<synchronous>, transform_indices = @transform_2, window_bounds = array<i64: 256, 128>}, {pipeline_mode = #tpu.pipeline_mode<synchronous>, transform_indices = @transform_3, window_bounds = array<i64: 256, 128>}, {pipeline_mode = #tpu.pipeline_mode<synchronous>, transform_indices = @transform_4, window_bounds = array<i64: 256, 128>}]} {
    %c0 = arith.constant 0 : index
    %c0_0 = arith.constant 0 : index
    %0 = vector.load %arg1[%c0, %c0_0] : memref<256x49xf32, #tpu.memory_space<vmem>>, vector<256x49xf32>
    %c0_1 = arith.constant 0 : index
    %c0_2 = arith.constant 0 : index
    %1 = vector.load %arg2[%c0_1, %c0_2] : memref<49x128xf32, #tpu.memory_space<vmem>>, vector<49x128xf32>
    %cst = arith.constant dense<0.000000e+00> : vector<256x128xf32>
    %2 = tpu.matmul %0, %1, %cst {dimension_numbers = #tpu.dot_dimension_numbers<[1], [0], [0], [1], [0, 0, 1, 1], [], []>} : vector<256x49xf32>, vector<49x128xf32>, vector<256x128xf32> -> vector<256x128xf32>
    %3 = arith.truncf %2 : vector<256x128xf32> to vector<256x128xbf16>
    %c0_3 = arith.constant 0 : index
    %c0_4 = arith.constant 0 : index
    %4 = vector.load %arg4[%c0_3, %c0_4] : memref<256x128xbf16, #tpu.memory_space<vmem>>, vector<256x128xbf16>
    tpu.vector_store %arg4[%c0_3, %c0_4], %3 {strides = array<i32>} : memref<256x128xbf16, #tpu.memory_space<vmem>>, vector<256x128xbf16>,
    %c0_5 = arith.constant 0 : index
    %c0_6 = arith.constant 0 : index
    %5 = vector.load %arg3[%c0_5, %c0_6] : memref<256x128xf32, #tpu.memory_space<vmem>>, vector<256x128xf32>
    %6 = arith.addf %2, %5 : vector<256x128xf32>
    %c0_7 = arith.constant 0 : index
    %c0_8 = arith.constant 0 : index
    %7 = vector.load %arg5[%c0_7, %c0_8] : memref<256x128xf32, #tpu.memory_space<vmem>>, vector<256x128xf32>
    tpu.vector_store %arg5[%c0_7, %c0_8], %6 {strides = array<i32>} : memref<256x128xf32, #tpu.memory_space<vmem>>, vector<256x128xf32>,
    return
  }
  func.func @transform_0(%arg0: i32) -> (i32, i32) {
    %c0_i32 = arith.constant 0 : i32
    %c0_i32_0 = arith.constant 0 : i32
    %c0_i32_1 = arith.constant 0 : i32
    return %c0_i32, %c0_i32_0 : i32, i32
  }
  func.func @transform_1(%arg0: i32) -> (i32, i32) {
    %c0_i32 = arith.constant 0 : i32
    %c0_i32_0 = arith.constant 0 : i32
    %c0_i32_1 = arith.constant 0 : i32
    return %c0_i32, %c0_i32_0 : i32, i32
  }
  func.func @transform_2(%arg0: i32) -> (i32, i32) {
    %c0_i32 = arith.constant 0 : i32
    %c0_i32_0 = arith.constant 0 : i32
    %c0_i32_1 = arith.constant 0 : i32
    return %c0_i32, %c0_i32_0 : i32, i32
  }
  func.func @transform_3(%arg0: i32) -> (i32, i32) {
    %c0_i32 = arith.constant 0 : i32
    %c0_i32_0 = arith.constant 0 : i32
    %c0_i32_1 = arith.constant 0 : i32
    return %c0_i32, %c0_i32_0 : i32, i32
  }
  func.func @transform_4(%arg0: i32) -> (i32, i32) {
    %c0_i32 = arith.constant 0 : i32
    %c0_i32_0 = arith.constant 0 : i32
    %c0_i32_1 = arith.constant 0 : i32
    return %c0_i32, %c0_i32_0 : i32, i32
  }
}

module attributes {stable_mosaic.version = 11 : i64} {
  func.func @_mm_bias_kernel(%arg0: i32, %arg1: memref<32x576xf32, #tpu.memory_space<vmem>>, %arg2: memref<576x64xbf16, #tpu.memory_space<vmem>>, %arg3: memref<1x64xf32, #tpu.memory_space<vmem>>, %arg4: memref<32x64xf32, #tpu.memory_space<vmem>>) attributes {dimension_semantics = [#tpu.dimension_semantics<arbitrary>], iteration_bounds = array<i64: 1>, scalar_prefetch = 0 : i64, scratch_operands = 0 : i64, tpu.core_type = #tpu.core_type<tc>, window_params = [{pipeline_mode = #tpu.pipeline_mode<synchronous>, transform_indices = @transform_0, window_bounds = array<i64: 32, 576>}, {pipeline_mode = #tpu.pipeline_mode<synchronous>, transform_indices = @transform_1, window_bounds = array<i64: 576, 64>}, {pipeline_mode = #tpu.pipeline_mode<synchronous>, transform_indices = @transform_2, window_bounds = array<i64: 1, 64>}, {pipeline_mode = #tpu.pipeline_mode<synchronous>, transform_indices = @transform_3, window_bounds = array<i64: 32, 64>}]} {
    %c0 = arith.constant 0 : index
    %c0_0 = arith.constant 0 : index
    %0 = vector.load %arg1[%c0, %c0_0] : memref<32x576xf32, #tpu.memory_space<vmem>>, vector<32x576xf32>
    %1 = arith.truncf %0 : vector<32x576xf32> to vector<32x576xbf16>
    %c0_1 = arith.constant 0 : index
    %c0_2 = arith.constant 0 : index
    %2 = vector.load %arg2[%c0_1, %c0_2] : memref<576x64xbf16, #tpu.memory_space<vmem>>, vector<576x64xbf16>
    %cst = arith.constant dense<0.000000e+00> : vector<32x64xf32>
    %3 = tpu.matmul %1, %2, %cst {dimension_numbers = #tpu.dot_dimension_numbers<[1], [0], [0], [1], [0, 0, 1, 1], [], []>} : vector<32x576xbf16>, vector<576x64xbf16>, vector<32x64xf32> -> vector<32x64xf32>
    %c0_3 = arith.constant 0 : index
    %c0_4 = arith.constant 0 : index
    %4 = vector.load %arg3[%c0_3, %c0_4] : memref<1x64xf32, #tpu.memory_space<vmem>>, vector<1x64xf32>
    %5 = vector.broadcast %4 : vector<1x64xf32> to vector<32x64xf32>
    %6 = arith.addf %3, %5 : vector<32x64xf32>
    %c0_5 = arith.constant 0 : index
    %c0_6 = arith.constant 0 : index
    %7 = vector.load %arg4[%c0_5, %c0_6] : memref<32x64xf32, #tpu.memory_space<vmem>>, vector<32x64xf32>
    tpu.vector_store %arg4[%c0_5, %c0_6], %6 {strides = array<i32>} : memref<32x64xf32, #tpu.memory_space<vmem>>, vector<32x64xf32>,
    return
  }
  func.func @transform_0(%arg0: i32) -> (i32, i32) {
    %c0_i32 = arith.constant 0 : i32
    %c0_i32_0 = arith.constant 0 : i32
    %c0_i32_1 = arith.constant 0 : i32
    return %c0_i32, %c0_i32_0 : i32, i32
  }
  func.func @transform_1(%arg0: i32) -> (i32, i32) {
    %c0_i32 = arith.constant 0 : i32
    %c0_i32_0 = arith.constant 0 : i32
    %c0_i32_1 = arith.constant 0 : i32
    return %c0_i32, %c0_i32_0 : i32, i32
  }
  func.func @transform_2(%arg0: i32) -> (i32, i32) {
    %c0_i32 = arith.constant 0 : i32
    %c0_i32_0 = arith.constant 0 : i32
    %c0_i32_1 = arith.constant 0 : i32
    return %c0_i32, %c0_i32_0 : i32, i32
  }
  func.func @transform_3(%arg0: i32) -> (i32, i32) {
    %c0_i32 = arith.constant 0 : i32
    %c0_i32_0 = arith.constant 0 : i32
    %c0_i32_1 = arith.constant 0 : i32
    return %c0_i32, %c0_i32_0 : i32, i32
  }
}

module attributes {stable_mosaic.version = 11 : i64} {
  func.func @_resize_res_kernel(%arg0: i32, %arg1: memref<256x16xf32, #tpu.memory_space<vmem>>, %arg2: memref<16x128xf32, #tpu.memory_space<vmem>>, %arg3: memref<256x128xf32, #tpu.memory_space<vmem>>, %arg4: memref<256x128xbf16, #tpu.memory_space<vmem>>, %arg5: memref<256x128xf32, #tpu.memory_space<vmem>>) attributes {dimension_semantics = [#tpu.dimension_semantics<arbitrary>], iteration_bounds = array<i64: 1>, scalar_prefetch = 0 : i64, scratch_operands = 0 : i64, tpu.core_type = #tpu.core_type<tc>, window_params = [{pipeline_mode = #tpu.pipeline_mode<synchronous>, transform_indices = @transform_0, window_bounds = array<i64: 256, 16>}, {pipeline_mode = #tpu.pipeline_mode<synchronous>, transform_indices = @transform_1, window_bounds = array<i64: 16, 128>}, {pipeline_mode = #tpu.pipeline_mode<synchronous>, transform_indices = @transform_2, window_bounds = array<i64: 256, 128>}, {pipeline_mode = #tpu.pipeline_mode<synchronous>, transform_indices = @transform_3, window_bounds = array<i64: 256, 128>}, {pipeline_mode = #tpu.pipeline_mode<synchronous>, transform_indices = @transform_4, window_bounds = array<i64: 256, 128>}]} {
    %c0 = arith.constant 0 : index
    %c0_0 = arith.constant 0 : index
    %0 = vector.load %arg1[%c0, %c0_0] : memref<256x16xf32, #tpu.memory_space<vmem>>, vector<256x16xf32>
    %c0_1 = arith.constant 0 : index
    %c0_2 = arith.constant 0 : index
    %1 = vector.load %arg2[%c0_1, %c0_2] : memref<16x128xf32, #tpu.memory_space<vmem>>, vector<16x128xf32>
    %cst = arith.constant dense<0.000000e+00> : vector<256x128xf32>
    %2 = tpu.matmul %0, %1, %cst {dimension_numbers = #tpu.dot_dimension_numbers<[1], [0], [0], [1], [0, 0, 1, 1], [], []>} : vector<256x16xf32>, vector<16x128xf32>, vector<256x128xf32> -> vector<256x128xf32>
    %3 = arith.truncf %2 : vector<256x128xf32> to vector<256x128xbf16>
    %c0_3 = arith.constant 0 : index
    %c0_4 = arith.constant 0 : index
    %4 = vector.load %arg4[%c0_3, %c0_4] : memref<256x128xbf16, #tpu.memory_space<vmem>>, vector<256x128xbf16>
    tpu.vector_store %arg4[%c0_3, %c0_4], %3 {strides = array<i32>} : memref<256x128xbf16, #tpu.memory_space<vmem>>, vector<256x128xbf16>,
    %c0_5 = arith.constant 0 : index
    %c0_6 = arith.constant 0 : index
    %5 = vector.load %arg3[%c0_5, %c0_6] : memref<256x128xf32, #tpu.memory_space<vmem>>, vector<256x128xf32>
    %6 = arith.addf %2, %5 : vector<256x128xf32>
    %c0_7 = arith.constant 0 : index
    %c0_8 = arith.constant 0 : index
    %7 = vector.load %arg5[%c0_7, %c0_8] : memref<256x128xf32, #tpu.memory_space<vmem>>, vector<256x128xf32>
    tpu.vector_store %arg5[%c0_7, %c0_8], %6 {strides = array<i32>} : memref<256x128xf32, #tpu.memory_space<vmem>>, vector<256x128xf32>,
    return
  }
  func.func @transform_0(%arg0: i32) -> (i32, i32) {
    %c0_i32 = arith.constant 0 : i32
    %c0_i32_0 = arith.constant 0 : i32
    %c0_i32_1 = arith.constant 0 : i32
    return %c0_i32, %c0_i32_0 : i32, i32
  }
  func.func @transform_1(%arg0: i32) -> (i32, i32) {
    %c0_i32 = arith.constant 0 : i32
    %c0_i32_0 = arith.constant 0 : i32
    %c0_i32_1 = arith.constant 0 : i32
    return %c0_i32, %c0_i32_0 : i32, i32
  }
  func.func @transform_2(%arg0: i32) -> (i32, i32) {
    %c0_i32 = arith.constant 0 : i32
    %c0_i32_0 = arith.constant 0 : i32
    %c0_i32_1 = arith.constant 0 : i32
    return %c0_i32, %c0_i32_0 : i32, i32
  }
  func.func @transform_3(%arg0: i32) -> (i32, i32) {
    %c0_i32 = arith.constant 0 : i32
    %c0_i32_0 = arith.constant 0 : i32
    %c0_i32_1 = arith.constant 0 : i32
    return %c0_i32, %c0_i32_0 : i32, i32
  }
  func.func @transform_4(%arg0: i32) -> (i32, i32) {
    %c0_i32 = arith.constant 0 : i32
    %c0_i32_0 = arith.constant 0 : i32
    %c0_i32_1 = arith.constant 0 : i32
    return %c0_i32, %c0_i32_0 : i32, i32
  }
}

module attributes {stable_mosaic.version = 11 : i64} {
  func.func @_mm_bias_kernel(%arg0: i32, %arg1: memref<18x576xf32, #tpu.memory_space<vmem>>, %arg2: memref<576x64xbf16, #tpu.memory_space<vmem>>, %arg3: memref<1x64xf32, #tpu.memory_space<vmem>>, %arg4: memref<18x64xf32, #tpu.memory_space<vmem>>) attributes {dimension_semantics = [#tpu.dimension_semantics<arbitrary>], iteration_bounds = array<i64: 1>, scalar_prefetch = 0 : i64, scratch_operands = 0 : i64, tpu.core_type = #tpu.core_type<tc>, window_params = [{pipeline_mode = #tpu.pipeline_mode<synchronous>, transform_indices = @transform_0, window_bounds = array<i64: 18, 576>}, {pipeline_mode = #tpu.pipeline_mode<synchronous>, transform_indices = @transform_1, window_bounds = array<i64: 576, 64>}, {pipeline_mode = #tpu.pipeline_mode<synchronous>, transform_indices = @transform_2, window_bounds = array<i64: 1, 64>}, {pipeline_mode = #tpu.pipeline_mode<synchronous>, transform_indices = @transform_3, window_bounds = array<i64: 18, 64>}]} {
    %c0 = arith.constant 0 : index
    %c0_0 = arith.constant 0 : index
    %0 = vector.load %arg1[%c0, %c0_0] : memref<18x576xf32, #tpu.memory_space<vmem>>, vector<18x576xf32>
    %1 = arith.truncf %0 : vector<18x576xf32> to vector<18x576xbf16>
    %c0_1 = arith.constant 0 : index
    %c0_2 = arith.constant 0 : index
    %2 = vector.load %arg2[%c0_1, %c0_2] : memref<576x64xbf16, #tpu.memory_space<vmem>>, vector<576x64xbf16>
    %cst = arith.constant dense<0.000000e+00> : vector<18x64xf32>
    %3 = tpu.matmul %1, %2, %cst {dimension_numbers = #tpu.dot_dimension_numbers<[1], [0], [0], [1], [0, 0, 1, 1], [], []>} : vector<18x576xbf16>, vector<576x64xbf16>, vector<18x64xf32> -> vector<18x64xf32>
    %c0_3 = arith.constant 0 : index
    %c0_4 = arith.constant 0 : index
    %4 = vector.load %arg3[%c0_3, %c0_4] : memref<1x64xf32, #tpu.memory_space<vmem>>, vector<1x64xf32>
    %5 = vector.broadcast %4 : vector<1x64xf32> to vector<18x64xf32>
    %6 = arith.addf %3, %5 : vector<18x64xf32>
    %c0_5 = arith.constant 0 : index
    %c0_6 = arith.constant 0 : index
    %7 = vector.load %arg4[%c0_5, %c0_6] : memref<18x64xf32, #tpu.memory_space<vmem>>, vector<18x64xf32>
    tpu.vector_store %arg4[%c0_5, %c0_6], %6 {strides = array<i32>} : memref<18x64xf32, #tpu.memory_space<vmem>>, vector<18x64xf32>,
    return
  }
  func.func @transform_0(%arg0: i32) -> (i32, i32) {
    %c0_i32 = arith.constant 0 : i32
    %c0_i32_0 = arith.constant 0 : i32
    %c0_i32_1 = arith.constant 0 : i32
    return %c0_i32, %c0_i32_0 : i32, i32
  }
  func.func @transform_1(%arg0: i32) -> (i32, i32) {
    %c0_i32 = arith.constant 0 : i32
    %c0_i32_0 = arith.constant 0 : i32
    %c0_i32_1 = arith.constant 0 : i32
    return %c0_i32, %c0_i32_0 : i32, i32
  }
  func.func @transform_2(%arg0: i32) -> (i32, i32) {
    %c0_i32 = arith.constant 0 : i32
    %c0_i32_0 = arith.constant 0 : i32
    %c0_i32_1 = arith.constant 0 : i32
    return %c0_i32, %c0_i32_0 : i32, i32
  }
  func.func @transform_3(%arg0: i32) -> (i32, i32) {
    %c0_i32 = arith.constant 0 : i32
    %c0_i32_0 = arith.constant 0 : i32
    %c0_i32_1 = arith.constant 0 : i32
    return %c0_i32, %c0_i32_0 : i32, i32
  }
}

module attributes {stable_mosaic.version = 11 : i64} {
  func.func @_resize_kernel(%arg0: i32, %arg1: memref<256x9xf32, #tpu.memory_space<vmem>>, %arg2: memref<9x128xf32, #tpu.memory_space<vmem>>, %arg3: memref<256x128xbf16, #tpu.memory_space<vmem>>) attributes {dimension_semantics = [#tpu.dimension_semantics<arbitrary>], iteration_bounds = array<i64: 1>, scalar_prefetch = 0 : i64, scratch_operands = 0 : i64, tpu.core_type = #tpu.core_type<tc>, window_params = [{pipeline_mode = #tpu.pipeline_mode<synchronous>, transform_indices = @transform_0, window_bounds = array<i64: 256, 9>}, {pipeline_mode = #tpu.pipeline_mode<synchronous>, transform_indices = @transform_1, window_bounds = array<i64: 9, 128>}, {pipeline_mode = #tpu.pipeline_mode<synchronous>, transform_indices = @transform_2, window_bounds = array<i64: 256, 128>}]} {
    %c0 = arith.constant 0 : index
    %c0_0 = arith.constant 0 : index
    %0 = vector.load %arg1[%c0, %c0_0] : memref<256x9xf32, #tpu.memory_space<vmem>>, vector<256x9xf32>
    %c0_1 = arith.constant 0 : index
    %c0_2 = arith.constant 0 : index
    %1 = vector.load %arg2[%c0_1, %c0_2] : memref<9x128xf32, #tpu.memory_space<vmem>>, vector<9x128xf32>
    %cst = arith.constant dense<0.000000e+00> : vector<256x128xf32>
    %2 = tpu.matmul %0, %1, %cst {dimension_numbers = #tpu.dot_dimension_numbers<[1], [0], [0], [1], [0, 0, 1, 1], [], []>} : vector<256x9xf32>, vector<9x128xf32>, vector<256x128xf32> -> vector<256x128xf32>
    %3 = arith.truncf %2 : vector<256x128xf32> to vector<256x128xbf16>
    %c0_3 = arith.constant 0 : index
    %c0_4 = arith.constant 0 : index
    %4 = vector.load %arg3[%c0_3, %c0_4] : memref<256x128xbf16, #tpu.memory_space<vmem>>, vector<256x128xbf16>
    tpu.vector_store %arg3[%c0_3, %c0_4], %3 {strides = array<i32>} : memref<256x128xbf16, #tpu.memory_space<vmem>>, vector<256x128xbf16>,
    return
  }
  func.func @transform_0(%arg0: i32) -> (i32, i32) {
    %c0_i32 = arith.constant 0 : i32
    %c0_i32_0 = arith.constant 0 : i32
    %c0_i32_1 = arith.constant 0 : i32
    return %c0_i32, %c0_i32_0 : i32, i32
  }
  func.func @transform_1(%arg0: i32) -> (i32, i32) {
    %c0_i32 = arith.constant 0 : i32
    %c0_i32_0 = arith.constant 0 : i32
    %c0_i32_1 = arith.constant 0 : i32
    return %c0_i32, %c0_i32_0 : i32, i32
  }
  func.func @transform_2(%arg0: i32) -> (i32, i32) {
    %c0_i32 = arith.constant 0 : i32
    %c0_i32_0 = arith.constant 0 : i32
    %c0_i32_1 = arith.constant 0 : i32
    return %c0_i32, %c0_i32_0 : i32, i32
  }
}

module attributes {stable_mosaic.version = 11 : i64} {
  func.func @_mix_fused_kernel(%arg0: i32, %arg1: memref<512x128xf32, #tpu.memory_space<vmem>>, %arg2: memref<512x64xf32, #tpu.memory_space<vmem>>, %arg3: memref<512x64xbf16, #tpu.memory_space<vmem>>, %arg4: memref<512x64xbf16, #tpu.memory_space<vmem>>, %arg5: memref<512x64xbf16, #tpu.memory_space<vmem>>, %arg6: memref<256x128xbf16, #tpu.memory_space<vmem>>, %arg7: memref<1x128xf32, #tpu.memory_space<vmem>>, %arg8: memref<256x64xbf16, #tpu.memory_space<vmem>>, %arg9: memref<1x64xf32, #tpu.memory_space<vmem>>, %arg10: memref<512x64xf32, #tpu.memory_space<vmem>>) attributes {dimension_semantics = [#tpu.dimension_semantics<arbitrary>], iteration_bounds = array<i64: 1>, scalar_prefetch = 0 : i64, scratch_operands = 0 : i64, tpu.core_type = #tpu.core_type<tc>, window_params = [{pipeline_mode = #tpu.pipeline_mode<synchronous>, transform_indices = @transform_0, window_bounds = array<i64: 512, 128>}, {pipeline_mode = #tpu.pipeline_mode<synchronous>, transform_indices = @transform_1, window_bounds = array<i64: 512, 64>}, {pipeline_mode = #tpu.pipeline_mode<synchronous>, transform_indices = @transform_2, window_bounds = array<i64: 512, 64>}, {pipeline_mode = #tpu.pipeline_mode<synchronous>, transform_indices = @transform_3, window_bounds = array<i64: 512, 64>}, {pipeline_mode = #tpu.pipeline_mode<synchronous>, transform_indices = @transform_4, window_bounds = array<i64: 512, 64>}, {pipeline_mode = #tpu.pipeline_mode<synchronous>, transform_indices = @transform_5, window_bounds = array<i64: 256, 128>}, {pipeline_mode = #tpu.pipeline_mode<synchronous>, transform_indices = @transform_6, window_bounds = array<i64: 1, 128>}, {pipeline_mode = #tpu.pipeline_mode<synchronous>, transform_indices = @transform_7, window_bounds = array<i64: 256, 64>}, {pipeline_mode = #tpu.pipeline_mode<synchronous>, transform_indices = @transform_8, window_bounds = array<i64: 1, 64>}, {pipeline_mode = #tpu.pipeline_mode<synchronous>, transform_indices = @transform_9, window_bounds = array<i64: 512, 64>}]} {
    %c0 = arith.constant 0 : index
    %c0_0 = arith.constant 0 : index
    %0 = vector.load %arg2[%c0, %c0_0] : memref<512x64xf32, #tpu.memory_space<vmem>>, vector<512x64xf32>
    %1 = arith.truncf %0 : vector<512x64xf32> to vector<512x64xbf16>
    %c0_1 = arith.constant 0 : index
    %c0_2 = arith.constant 0 : index
    %2 = vector.load %arg6[%c0_1, %c0_2] : memref<256x128xbf16, #tpu.memory_space<vmem>>, vector<64x128xbf16>
    %cst = arith.constant dense<0.000000e+00> : vector<512x128xf32>
    %3 = tpu.matmul %1, %2, %cst {dimension_numbers = #tpu.dot_dimension_numbers<[1], [0], [0], [1], [0, 0, 1, 1], [], []>} : vector<512x64xbf16>, vector<64x128xbf16>, vector<512x128xf32> -> vector<512x128xf32>
    %c0_3 = arith.constant 0 : index
    %c0_4 = arith.constant 0 : index
    %4 = vector.load %arg3[%c0_3, %c0_4] : memref<512x64xbf16, #tpu.memory_space<vmem>>, vector<512x64xbf16>
    %c64 = arith.constant 64 : index
    %c0_5 = arith.constant 0 : index
    %5 = vector.load %arg6[%c64, %c0_5] : memref<256x128xbf16, #tpu.memory_space<vmem>>, vector<64x128xbf16>
    %cst_6 = arith.constant dense<0.000000e+00> : vector<512x128xf32>
    %6 = tpu.matmul %4, %5, %cst_6 {dimension_numbers = #tpu.dot_dimension_numbers<[1], [0], [0], [1], [0, 0, 1, 1], [], []>} : vector<512x64xbf16>, vector<64x128xbf16>, vector<512x128xf32> -> vector<512x128xf32>
    %7 = arith.addf %3, %6 : vector<512x128xf32>
    %c0_7 = arith.constant 0 : index
    %c0_8 = arith.constant 0 : index
    %8 = vector.load %arg4[%c0_7, %c0_8] : memref<512x64xbf16, #tpu.memory_space<vmem>>, vector<512x64xbf16>
    %c128 = arith.constant 128 : index
    %c0_9 = arith.constant 0 : index
    %9 = vector.load %arg6[%c128, %c0_9] : memref<256x128xbf16, #tpu.memory_space<vmem>>, vector<64x128xbf16>
    %cst_10 = arith.constant dense<0.000000e+00> : vector<512x128xf32>
    %10 = tpu.matmul %8, %9, %cst_10 {dimension_numbers = #tpu.dot_dimension_numbers<[1], [0], [0], [1], [0, 0, 1, 1], [], []>} : vector<512x64xbf16>, vector<64x128xbf16>, vector<512x128xf32> -> vector<512x128xf32>
    %11 = arith.addf %7, %10 : vector<512x128xf32>
    %c0_11 = arith.constant 0 : index
    %c0_12 = arith.constant 0 : index
    %12 = vector.load %arg5[%c0_11, %c0_12] : memref<512x64xbf16, #tpu.memory_space<vmem>>, vector<512x64xbf16>
    %c192 = arith.constant 192 : index
    %c0_13 = arith.constant 0 : index
    %13 = vector.load %arg6[%c192, %c0_13] : memref<256x128xbf16, #tpu.memory_space<vmem>>, vector<64x128xbf16>
    %cst_14 = arith.constant dense<0.000000e+00> : vector<512x128xf32>
    %14 = tpu.matmul %12, %13, %cst_14 {dimension_numbers = #tpu.dot_dimension_numbers<[1], [0], [0], [1], [0, 0, 1, 1], [], []>} : vector<512x64xbf16>, vector<64x128xbf16>, vector<512x128xf32> -> vector<512x128xf32>
    %15 = arith.addf %11, %14 : vector<512x128xf32>
    %c0_15 = arith.constant 0 : index
    %c0_16 = arith.constant 0 : index
    %16 = vector.load %arg7[%c0_15, %c0_16] : memref<1x128xf32, #tpu.memory_space<vmem>>, vector<1x128xf32>
    %17 = vector.broadcast %16 : vector<1x128xf32> to vector<512x128xf32>
    %18 = arith.addf %15, %17 : vector<512x128xf32>
    %19 = arith.truncf %18 : vector<512x128xf32> to vector<512x128xbf16>
    %c0_17 = arith.constant 0 : index
    %c0_18 = arith.constant 0 : index
    %20 = vector.load %arg1[%c0_17, %c0_18] : memref<512x128xf32, #tpu.memory_space<vmem>>, vector<512x128xf32>
    %21 = arith.truncf %20 : vector<512x128xf32> to vector<512x128xbf16>
    %c0_19 = arith.constant 0 : index
    %c0_20 = arith.constant 0 : index
    %22 = vector.load %arg8[%c0_19, %c0_20] : memref<256x64xbf16, #tpu.memory_space<vmem>>, vector<128x64xbf16>
    %cst_21 = arith.constant dense<0.000000e+00> : vector<512x64xf32>
    %23 = tpu.matmul %21, %22, %cst_21 {dimension_numbers = #tpu.dot_dimension_numbers<[1], [0], [0], [1], [0, 0, 1, 1], [], []>} : vector<512x128xbf16>, vector<128x64xbf16>, vector<512x64xf32> -> vector<512x64xf32>
    %c128_22 = arith.constant 128 : index
    %c0_23 = arith.constant 0 : index
    %24 = vector.load %arg8[%c128_22, %c0_23] : memref<256x64xbf16, #tpu.memory_space<vmem>>, vector<128x64xbf16>
    %cst_24 = arith.constant dense<0.000000e+00> : vector<512x64xf32>
    %25 = tpu.matmul %19, %24, %cst_24 {dimension_numbers = #tpu.dot_dimension_numbers<[1], [0], [0], [1], [0, 0, 1, 1], [], []>} : vector<512x128xbf16>, vector<128x64xbf16>, vector<512x64xf32> -> vector<512x64xf32>
    %26 = arith.addf %23, %25 : vector<512x64xf32>
    %c0_25 = arith.constant 0 : index
    %c0_26 = arith.constant 0 : index
    %27 = vector.load %arg9[%c0_25, %c0_26] : memref<1x64xf32, #tpu.memory_space<vmem>>, vector<1x64xf32>
    %28 = vector.broadcast %27 : vector<1x64xf32> to vector<512x64xf32>
    %29 = arith.addf %26, %28 : vector<512x64xf32>
    %c0_27 = arith.constant 0 : index
    %c0_28 = arith.constant 0 : index
    %30 = vector.load %arg10[%c0_27, %c0_28] : memref<512x64xf32, #tpu.memory_space<vmem>>, vector<512x64xf32>
    tpu.vector_store %arg10[%c0_27, %c0_28], %29 {strides = array<i32>} : memref<512x64xf32, #tpu.memory_space<vmem>>, vector<512x64xf32>,
    return
  }
  func.func @transform_0(%arg0: i32) -> (i32, i32) {
    %c0_i32 = arith.constant 0 : i32
    %c0_i32_0 = arith.constant 0 : i32
    %c0_i32_1 = arith.constant 0 : i32
    return %c0_i32, %c0_i32_0 : i32, i32
  }
  func.func @transform_1(%arg0: i32) -> (i32, i32) {
    %c0_i32 = arith.constant 0 : i32
    %c0_i32_0 = arith.constant 0 : i32
    %c0_i32_1 = arith.constant 0 : i32
    return %c0_i32, %c0_i32_0 : i32, i32
  }
  func.func @transform_2(%arg0: i32) -> (i32, i32) {
    %c0_i32 = arith.constant 0 : i32
    %c0_i32_0 = arith.constant 0 : i32
    %c0_i32_1 = arith.constant 0 : i32
    return %c0_i32, %c0_i32_0 : i32, i32
  }
  func.func @transform_3(%arg0: i32) -> (i32, i32) {
    %c0_i32 = arith.constant 0 : i32
    %c0_i32_0 = arith.constant 0 : i32
    %c0_i32_1 = arith.constant 0 : i32
    return %c0_i32, %c0_i32_0 : i32, i32
  }
  func.func @transform_4(%arg0: i32) -> (i32, i32) {
    %c0_i32 = arith.constant 0 : i32
    %c0_i32_0 = arith.constant 0 : i32
    %c0_i32_1 = arith.constant 0 : i32
    return %c0_i32, %c0_i32_0 : i32, i32
  }
  func.func @transform_5(%arg0: i32) -> (i32, i32) {
    %c0_i32 = arith.constant 0 : i32
    %c0_i32_0 = arith.constant 0 : i32
    %c0_i32_1 = arith.constant 0 : i32
    return %c0_i32, %c0_i32_0 : i32, i32
  }
  func.func @transform_6(%arg0: i32) -> (i32, i32) {
    %c0_i32 = arith.constant 0 : i32
    %c0_i32_0 = arith.constant 0 : i32
    %c0_i32_1 = arith.constant 0 : i32
    return %c0_i32, %c0_i32_0 : i32, i32
  }
  func.func @transform_7(%arg0: i32) -> (i32, i32) {
    %c0_i32 = arith.constant 0 : i32
    %c0_i32_0 = arith.constant 0 : i32
    %c0_i32_1 = arith.constant 0 : i32
    return %c0_i32, %c0_i32_0 : i32, i32
  }
  func.func @transform_8(%arg0: i32) -> (i32, i32) {
    %c0_i32 = arith.constant 0 : i32
    %c0_i32_0 = arith.constant 0 : i32
    %c0_i32_1 = arith.constant 0 : i32
    return %c0_i32, %c0_i32_0 : i32, i32
  }
  func.func @transform_9(%arg0: i32) -> (i32, i32) {
    %c0_i32 = arith.constant 0 : i32
    %c0_i32_0 = arith.constant 0 : i32
    %c0_i32_1 = arith.constant 0 : i32
    return %c0_i32, %c0_i32_0 : i32, i32
  }
}

</mosaic_0001>

<llo_original>
// kernel: pem_forward.8
$region0: #{pem_forward.8}
  #allocation0 [shape = 'u32[]', space=smem, size = 0x4, offset = 0x4, fixed_abs, tag = 'smem constant byte address 0x4 - core index']
  #allocation1 [shape = 'u32[72,128]{1,0:T(1,128)}', space=vmem, size = 0x9000, scoped, tag = 'internal scratch']
  %s0 = inlined_call_operand.vmem [shape: f32[512,128], index: 0, kind: input, shape index: {}]
  %s1 = inlined_call_operand.vmem [shape: bf16[128,64], index: 1, kind: input, shape index: {}]
  %s2 = inlined_call_operand.vmem [shape: f32[1,64], index: 2, kind: input, shape index: {}]
  %s3 = inlined_call_operand.vmem [shape: f32[512,64], index: 3, kind: output, shape index: {}]
  %s4 = sld [smem:[#allocation0]]
  $region22: #{pem_forward.8} parent=0
    _
  %s6 = ssub.s32 1, %s4
  %s7 = scalar_select 0, %s6, %s4
  // Predicated region
  $region2: #{pem_forward.8} parent=0 // pred_check
    _
  $region3: #{pem_forward.8} parent=0 // pred_check_branch
    %9 = sbr.rel (0) target = $region5
  $region4: #{pem_forward.8} parent=0 // pred_region
    _
  $region5: #{pem_forward.8} parent=0 // pred_fallthru
    _
  // Predicated region
  $region6: #{pem_forward.8} parent=0 // pred_check
    _
  $region7: #{pem_forward.8} parent=0 // pred_check_branch
    %11 = sbr.rel (0) target = $region9
  $region8: #{pem_forward.8} parent=0 // pred_region
    _
  $region9: #{pem_forward.8} parent=0 // pred_fallthru
    _
  // Predicated region
  $region10: #{pem_forward.8} parent=0 // pred_check
    _
  $region11: #{pem_forward.8} parent=0 // pred_check_branch
    %13 = sbr.rel (0) target = $region13
  $region12: #{pem_forward.8} parent=0 // pred_region
    _
  $region13: #{pem_forward.8} parent=0 // pred_fallthru
    _
  %v14 = vld [vmem:[%s0] sm:$0xff]
  %v15 = vld [vmem:[%s0 + $0x8] sm:$0xff]
  %v16 = vld [vmem:[%s0 + $0x10] sm:$0xff]
  %v17 = vld [vmem:[%s0 + $0x18] sm:$0xff]
  %v18 = vld [vmem:[%s0 + $0x20] sm:$0xff]
  %v19 = vld [vmem:[%s0 + $0x28] sm:$0xff]
  %v20 = vld [vmem:[%s0 + $0x30] sm:$0xff]
  %v21 = vld [vmem:[%s0 + $0x38] sm:$0xff]
  %v22 = vld [vmem:[%s0 + $0x40] sm:$0xff]
  %v23 = vld [vmem:[%s0 + $0x48] sm:$0xff]
  %v24 = vld [vmem:[%s0 + $0x50] sm:$0xff]
  %v25 = vld [vmem:[%s0 + $0x58] sm:$0xff]
  %v26 = vld [vmem:[%s0 + $0x60] sm:$0xff]
  %v27 = vld [vmem:[%s0 + $0x68] sm:$0xff]
  %v28 = vld [vmem:[%s0 + $0x70] sm:$0xff]
  %v29 = vld [vmem:[%s0 + $0x78] sm:$0xff]
  %v30 = vld [vmem:[%s0 + $0x80] sm:$0xff]
  %v31 = vld [vmem:[%s0 + $0x88] sm:$0xff]
  %v32 = vld [vmem:[%s0 + $0x90] sm:$0xff]
  %v33 = vld [vmem:[%s0 + $0x98] sm:$0xff]
  %v34 = vld [vmem:[%s0 + $0xa0] sm:$0xff]
  %v35 = vld [vmem:[%s0 + $0xa8] sm:$0xff]
  %v36 = vld [vmem:[%s0 + $0xb0] sm:$0xff]
  %v37 = vld [vmem:[%s0 + $0xb8] sm:$0xff]
  %v38 = vld [vmem:[%s0 + $0xc0] sm:$0xff]
  %v39 = vld [vmem:[%s0 + $0xc8] sm:$0xff]
  %v40 = vld [vmem:[%s0 + $0xd0] sm:$0xff]
  %v41 = vld [vmem:[%s0 + $0xd8] sm:$0xff]
  %v42 = vld [vmem:[%s0 + $0xe0] sm:$0xff]
  %v43 = vld [vmem:[%s0 + $0xe8] sm:$0xff]
  %v44 = vld [vmem:[%s0 + $0xf0] sm:$0xff]
  %v45 = vld [vmem:[%s0 + $0xf8] sm:$0xff]
  %v46 = vld [vmem:[%s0 + $0x100] sm:$0xff]
  %v47 = vld [vmem:[%s0 + $0x108] sm:$0xff]
  %v48 = vld [vmem:[%s0 + $0x110] sm:$0xff]
  %v49 = vld [vmem:[%s0 + $0x118] sm:$0xff]
  %v50 = vld [vmem:[%s0 + $0x120] sm:$0xff]
  %v51 = vld [vmem:[%s0 + $0x128] sm:$0xff]
  %v52 = vld [vmem:[%s0 + $0x130] sm:$0xff]
  %v53 = vld [vmem:[%s0 + $0x138] sm:$0xff]
  %v54 = vld [vmem:[%s0 + $0x140] sm:$0xff]
  %v55 = vld [vmem:[%s0 + $0x148] sm:$0xff]
  %v56 = vld [vmem:[%s0 + $0x150] sm:$0xff]
  %v57 = vld [vmem:[%s0 + $0x158] sm:$0xff]
  %v58 = vld [vmem:[%s0 + $0x160] sm:$0xff]
  %v59 = vld [vmem:[%s0 + $0x168] sm:$0xff]
  %v60 = vld [vmem:[%s0 + $0x170] sm:$0xff]
  %v61 = vld [vmem:[%s0 + $0x178] sm:$0xff]
  %v62 = vld [vmem:[%s0 + $0x180] sm:$0xff]
  %v63 = vld [vmem:[%s0 + $0x188] sm:$0xff]
  %v64 = vld [vmem:[%s0 + $0x190] sm:$0xff]
  %v65 = vld [vmem:[%s0 + $0x198] sm:$0xff]
  %v66 = vld [vmem:[%s0 + $0x1a0] sm:$0xff]
  %v67 = vld [vmem:[%s0 + $0x1a8] sm:$0xff]
  %v68 = vld [vmem:[%s0 + $0x1b0] sm:$0xff]
  %v69 = vld [vmem:[%s0 + $0x1b8] sm:$0xff]
  %v70 = vld [vmem:[%s0 + $0x1c0] sm:$0xff]
  %v71 = vld [vmem:[%s0 + $0x1c8] sm:$0xff]
  %v72 = vld [vmem:[%s0 + $0x1d0] sm:$0xff]
  %v73 = vld [vmem:[%s0 + $0x1d8] sm:$0xff]
  %v74 = vld [vmem:[%s0 + $0x1e0] sm:$0xff]
  %v75 = vld [vmem:[%s0 + $0x1e8] sm:$0xff]
  %v76 = vld [vmem:[%s0 + $0x1f0] sm:$0xff]
  %v77 = vld [vmem:[%s0 + $0x1f8] sm:$0xff]
  %v78 = vpack.c.bf16 %v15, %v14
  %v79 = vpack.c.bf16 %v17, %v16
  %v80 = vpack.c.bf16 %v19, %v18
  %v81 = vpack.c.bf16 %v21, %v20
  %v82 = vpack.c.bf16 %v23, %v22
  %v83 = vpack.c.bf16 %v25, %v24
  %v84 = vpack.c.bf16 %v27, %v26
  %v85 = vpack.c.bf16 %v29, %v28
  %v86 = vpack.c.bf16 %v31, %v30
  %v87 = vpack.c.bf16 %v33, %v32
  %v88 = vpack.c.bf16 %v35, %v34
  %v89 = vpack.c.bf16 %v37, %v36
  %v90 = vpack.c.bf16 %v39, %v38
  %v91 = vpack.c.bf16 %v41, %v40
  %v92 = vpack.c.bf16 %v43, %v42
  %v93 = vpack.c.bf16 %v45, %v44
  %v94 = vpack.c.bf16 %v47, %v46
  %v95 = vpack.c.bf16 %v49, %v48
  %v96 = vpack.c.bf16 %v51, %v50
  %v97 = vpack.c.bf16 %v53, %v52
  %v98 = vpack.c.bf16 %v55, %v54
  %v99 = vpack.c.bf16 %v57, %v56
  %v100 = vpack.c.bf16 %v59, %v58
  %v101 = vpack.c.bf16 %v61, %v60
  %v102 = vpack.c.bf16 %v63, %v62
  %v103 = vpack.c.bf16 %v65, %v64
  %v104 = vpack.c.bf16 %v67, %v66
  %v105 = vpack.c.bf16 %v69, %v68
  %v106 = vpack.c.bf16 %v71, %v70
  %v107 = vpack.c.bf16 %v73, %v72
  %v108 = vpack.c.bf16 %v75, %v74
  %v109 = vpack.c.bf16 %v77, %v76
  %v110 = vld [vmem:[%s1] sm:$0xf]
  %v111 = vld [vmem:[%s1 + $0x4] sm:$0xf]
  %v112 = vld [vmem:[%s1 + $0x8] sm:$0xf]
  %v113 = vld [vmem:[%s1 + $0xc] sm:$0xf]
  %v114 = vld [vmem:[%s1 + $0x10] sm:$0xf]
  %v115 = vld [vmem:[%s1 + $0x14] sm:$0xf]
  %v116 = vld [vmem:[%s1 + $0x18] sm:$0xf]
  %v117 = vld [vmem:[%s1 + $0x1c] sm:$0xf]
  %v118 = vld [vmem:[%s1 + $0x20] sm:$0xf]
  %v119 = vld [vmem:[%s1 + $0x24] sm:$0xf]
  %v120 = vld [vmem:[%s1 + $0x28] sm:$0xf]
  %v121 = vld [vmem:[%s1 + $0x2c] sm:$0xf]
  %v122 = vld [vmem:[%s1 + $0x30] sm:$0xf]
  %v123 = vld [vmem:[%s1 + $0x34] sm:$0xf]
  %v124 = vld [vmem:[%s1 + $0x38] sm:$0xf]
  %v125 = vld [vmem:[%s1 + $0x3c] sm:$0xf]
  %v126 = vld [vmem:[%s2] sm:$0x1]
  %v128 = vperm.slane %v126, 0
  %v146 = vunpack.c.l.b16 %v110
  %v147 = vunpack.c.l.b16 %v111
  %v148 = vunpack.c.l.b16 %v112
  %v149 = vunpack.c.l.b16 %v113
  %v150 = vunpack.c.l.b16 %v114
  %v151 = vunpack.c.l.b16 %v115
  %v152 = vunpack.c.l.b16 %v116
  %v153 = vunpack.c.l.b16 %v117
  %v154 = vunpack.c.l.b16 %v118
  %v155 = vunpack.c.l.b16 %v119
  %v156 = vunpack.c.l.b16 %v120
  %v157 = vunpack.c.l.b16 %v121
  %v158 = vunpack.c.l.b16 %v122
  %v159 = vunpack.c.l.b16 %v123
  %v160 = vunpack.c.l.b16 %v124
  %v161 = vunpack.c.l.b16 %v125
  %v162 = vpack.c.b16 %v147, %v146
  %v163 = vpack.c.b16 %v149, %v148
  %v164 = vpack.c.b16 %v151, %v150
  %v165 = vpack.c.b16 %v153, %v152
  %v166 = vpack.c.b16 %v155, %v154
  %v167 = vpack.c.b16 %v157, %v156
  %v168 = vpack.c.b16 %v159, %v158
  %v169 = vpack.c.b16 %v161, %v160
  %178 = vmatpush.bf16.msra.mxu0 %v169
  %179 = vmatpush.bf16.msra.mxu0 %v168
  %180 = vmatpush.bf16.msra.mxu0 %v167
  %181 = vmatpush.bf16.msra.mxu0 %v166
  %182 = vmatpush.bf16.msra.mxu0 %v165
  %183 = vmatpush.bf16.msra.mxu0 %v164
  %184 = vmatpush.bf16.msra.mxu0 %v163
  %185 = vmatpush.bf16.msra.mxu0 %v162
  %186 = vmatmul.bf16.gmra.mxu0 %v78
  %v187 = vpop.f32.mrf.mxu0
  %v188 = vadd.f32 %v128, %v187
  %v189 = vpop.f32.mrf.mxu0
  %v190 = vadd.f32 %v128, %v189
  %191 = vmatmul.bf16.gmra.mxu0 %v79
  %v192 = vpop.f32.mrf.mxu0
  %v193 = vadd.f32 %v128, %v192
  %v194 = vpop.f32.mrf.mxu0
  %v195 = vadd.f32 %v128, %v194
  %196 = vmatmul.bf16.gmra.mxu0 %v80
  %v197 = vpop.f32.mrf.mxu0
  %v198 = vadd.f32 %v128, %v197
  %v199 = vpop.f32.mrf.mxu0
  %v200 = vadd.f32 %v128, %v199
  %201 = vmatmul.bf16.gmra.mxu0 %v81
  %v202 = vpop.f32.mrf.mxu0
  %v203 = vadd.f32 %v128, %v202
  %v204 = vpop.f32.mrf.mxu0
  %v205 = vadd.f32 %v128, %v204
  %206 = vmatmul.bf16.gmra.mxu0 %v82
  %v207 = vpop.f32.mrf.mxu0
  %v208 = vadd.f32 %v128, %v207
  %v209 = vpop.f32.mrf.mxu0
  %v210 = vadd.f32 %v128, %v209
  %211 = vmatmul.bf16.gmra.mxu0 %v83
  %v212 = vpop.f32.mrf.mxu0
  %v213 = vadd.f32 %v128, %v212
  %v214 = vpop.f32.mrf.mxu0
  %v215 = vadd.f32 %v128, %v214
  %216 = vmatmul.bf16.gmra.mxu0 %v84
  %v217 = vpop.f32.mrf.mxu0
  %v218 = vadd.f32 %v128, %v217
  %v219 = vpop.f32.mrf.mxu0
  %v220 = vadd.f32 %v128, %v219
  %221 = vmatmul.bf16.gmra.mxu0 %v85
  %v222 = vpop.f32.mrf.mxu0
  %v223 = vadd.f32 %v128, %v222
  %v224 = vpop.f32.mrf.mxu0
  %v225 = vadd.f32 %v128, %v224
  %226 = vmatmul.bf16.gmra.mxu0 %v86
  %v227 = vpop.f32.mrf.mxu0
  %v228 = vadd.f32 %v128, %v227
  %v229 = vpop.f32.mrf.mxu0
  %v230 = vadd.f32 %v128, %v229
  %231 = vmatmul.bf16.gmra.mxu0 %v87
  %v232 = vpop.f32.mrf.mxu0
  %v233 = vadd.f32 %v128, %v232
  %v234 = vpop.f32.mrf.mxu0
  %v235 = vadd.f32 %v128, %v234
  %236 = vmatmul.bf16.gmra.mxu0 %v88
  %v237 = vpop.f32.mrf.mxu0
  %v238 = vadd.f32 %v128, %v237
  %v239 = vpop.f32.mrf.mxu0
  %v240 = vadd.f32 %v128, %v239
  %241 = vmatmul.bf16.gmra.mxu0 %v89
  %v242 = vpop.f32.mrf.mxu0
  %v243 = vadd.f32 %v128, %v242
  %v244 = vpop.f32.mrf.mxu0
  %v245 = vadd.f32 %v128, %v244
  %246 = vmatmul.bf16.gmra.mxu0 %v90
  %v247 = vpop.f32.mrf.mxu0
  %v248 = vadd.f32 %v128, %v247
  %v249 = vpop.f32.mrf.mxu0
  %v250 = vadd.f32 %v128, %v249
  %251 = vmatmul.bf16.gmra.mxu0 %v91
  %v252 = vpop.f32.mrf.mxu0
  %v253 = vadd.f32 %v128, %v252
  %v254 = vpop.f32.mrf.mxu0
  %v255 = vadd.f32 %v128, %v254
  %256 = vmatmul.bf16.gmra.mxu0 %v92
  %v257 = vpop.f32.mrf.mxu0
  %v258 = vadd.f32 %v128, %v257
  %v259 = vpop.f32.mrf.mxu0
  %v260 = vadd.f32 %v128, %v259
  %261 = vmatmul.bf16.gmra.mxu0 %v93
  %v262 = vpop.f32.mrf.mxu0
  %v263 = vadd.f32 %v128, %v262
  %v264 = vpop.f32.mrf.mxu0
  %v265 = vadd.f32 %v128, %v264
  %266 = vmatmul.bf16.gmra.mxu0 %v94
  %v267 = vpop.f32.mrf.mxu0
  %v268 = vadd.f32 %v128, %v267
  %v269 = vpop.f32.mrf.mxu0
  %v270 = vadd.f32 %v128, %v269
  %271 = vmatmul.bf16.gmra.mxu0 %v95
  %v272 = vpop.f32.mrf.mxu0
  %v273 = vadd.f32 %v128, %v272
  %v274 = vpop.f32.mrf.mxu0
  %v275 = vadd.f32 %v128, %v274
  %276 = vmatmul.bf16.gmra.mxu0 %v96
  %v277 = vpop.f32.mrf.mxu0
  %v278 = vadd.f32 %v128, %v277
  %v279 = vpop.f32.mrf.mxu0
  %v280 = vadd.f32 %v128, %v279
  %281 = vmatmul.bf16.gmra.mxu0 %v97
  %v282 = vpop.f32.mrf.mxu0
  %v283 = vadd.f32 %v128, %v282
  %v284 = vpop.f32.mrf.mxu0
  %v285 = vadd.f32 %v128, %v284
  %286 = vmatmul.bf16.gmra.mxu0 %v98
  %v287 = vpop.f32.mrf.mxu0
  %v288 = vadd.f32 %v128, %v287
  %v289 = vpop.f32.mrf.mxu0
  %v290 = vadd.f32 %v128, %v289
  %291 = vmatmul.bf16.gmra.mxu0 %v99
  %v292 = vpop.f32.mrf.mxu0
  %v293 = vadd.f32 %v128, %v292
  %v294 = vpop.f32.mrf.mxu0
  %v295 = vadd.f32 %v128, %v294
  %296 = vmatmul.bf16.gmra.mxu0 %v100
  %v297 = vpop.f32.mrf.mxu0
  %v298 = vadd.f32 %v128, %v297
  %v299 = vpop.f32.mrf.mxu0
  %v300 = vadd.f32 %v128, %v299
  %301 = vmatmul.bf16.gmra.mxu0 %v101
  %v302 = vpop.f32.mrf.mxu0
  %v303 = vadd.f32 %v128, %v302
  %v304 = vpop.f32.mrf.mxu0
  %v305 = vadd.f32 %v128, %v304
  %306 = vmatmul.bf16.gmra.mxu0 %v102
  %v307 = vpop.f32.mrf.mxu0
  %v308 = vadd.f32 %v128, %v307
  %v309 = vpop.f32.mrf.mxu0
  %v310 = vadd.f32 %v128, %v309
  %311 = vmatmul.bf16.gmra.mxu0 %v103
  %v312 = vpop.f32.mrf.mxu0
  %v313 = vadd.f32 %v128, %v312
  %v314 = vpop.f32.mrf.mxu0
  %v315 = vadd.f32 %v128, %v314
  %316 = vmatmul.bf16.gmra.mxu0 %v104
  %v317 = vpop.f32.mrf.mxu0
  %v318 = vadd.f32 %v128, %v317
  %v319 = vpop.f32.mrf.mxu0
  %v320 = vadd.f32 %v128, %v319
  %321 = vmatmul.bf16.gmra.mxu0 %v105
  %v322 = vpop.f32.mrf.mxu0
  %v323 = vadd.f32 %v128, %v322
  %v324 = vpop.f32.mrf.mxu0
  %v325 = vadd.f32 %v128, %v324
  %326 = vmatmul.bf16.gmra.mxu0 %v106
  %v327 = vpop.f32.mrf.mxu0
  %v328 = vadd.f32 %v128, %v327
  %v329 = vpop.f32.mrf.mxu0
  %v330 = vadd.f32 %v128, %v329
  %331 = vmatmul.bf16.gmra.mxu0 %v107
  %v332 = vpop.f32.mrf.mxu0
  %v333 = vadd.f32 %v128, %v332
  %v334 = vpop.f32.mrf.mxu0
  %v335 = vadd.f32 %v128, %v334
  %336 = vmatmul.bf16.gmra.mxu0 %v108
  %v337 = vpop.f32.mrf.mxu0
  %v338 = vadd.f32 %v128, %v337
  %v339 = vpop.f32.mrf.mxu0
  %v340 = vadd.f32 %v128, %v339
  %341 = vmatmul.bf16.gmra.mxu0 %v109
  %v342 = vpop.f32.mrf.mxu0
  %v343 = vadd.f32 %v128, %v342
  %v344 = vpop.f32.mrf.mxu0
  %v345 = vadd.f32 %v128, %v344
  %346 = vdwg.mxu0
  %vm347 = vcmask 523264
  %348 = vst.msk [vmem:[%s3] sm:$0xff] %vm347, %v188
  %349 = vst.msk [vmem:[%s3 + $0x8] sm:$0xff] %vm347, %v190
  %350 = vst.msk [vmem:[%s3 + $0x10] sm:$0xff] %vm347, %v193
  %351 = vst.msk [vmem:[%s3 + $0x18] sm:$0xff] %vm347, %v195
  %352 = vst.msk [vmem:[%s3 + $0x20] sm:$0xff] %vm347, %v198
  %353 = vst.msk [vmem:[%s3 + $0x28] sm:$0xff] %vm347, %v200
  %354 = vst.msk [vmem:[%s3 + $0x30] sm:$0xff] %vm347, %v203
  %355 = vst.msk [vmem:[%s3 + $0x38] sm:$0xff] %vm347, %v205
  %356 = vst.msk [vmem:[%s3 + $0x40] sm:$0xff] %vm347, %v208
  %357 = vst.msk [vmem:[%s3 + $0x48] sm:$0xff] %vm347, %v210
  %358 = vst.msk [vmem:[%s3 + $0x50] sm:$0xff] %vm347, %v213
  %359 = vst.msk [vmem:[%s3 + $0x58] sm:$0xff] %vm347, %v215
  %360 = vst.msk [vmem:[%s3 + $0x60] sm:$0xff] %vm347, %v218
  %361 = vst.msk [vmem:[%s3 + $0x68] sm:$0xff] %vm347, %v220
  %362 = vst.msk [vmem:[%s3 + $0x70] sm:$0xff] %vm347, %v223
  %363 = vst.msk [vmem:[%s3 + $0x78] sm:$0xff] %vm347, %v225
  %364 = vst.msk [vmem:[%s3 + $0x80] sm:$0xff] %vm347, %v228
  %365 = vst.msk [vmem:[%s3 + $0x88] sm:$0xff] %vm347, %v230
  %366 = vst.msk [vmem:[%s3 + $0x90] sm:$0xff] %vm347, %v233
  %367 = vst.msk [vmem:[%s3 + $0x98] sm:$0xff] %vm347, %v235
  %368 = vst.msk [vmem:[%s3 + $0xa0] sm:$0xff] %vm347, %v238
  %369 = vst.msk [vmem:[%s3 + $0xa8] sm:$0xff] %vm347, %v240
  %370 = vst.msk [vmem:[%s3 + $0xb0] sm:$0xff] %vm347, %v243
  %371 = vst.msk [vmem:[%s3 + $0xb8] sm:$0xff] %vm347, %v245
  %372 = vst.msk [vmem:[%s3 + $0xc0] sm:$0xff] %vm347, %v248
  %373 = vst.msk [vmem:[%s3 + $0xc8] sm:$0xff] %vm347, %v250
  %374 = vst.msk [vmem:[%s3 + $0xd0] sm:$0xff] %vm347, %v253
  %375 = vst.msk [vmem:[%s3 + $0xd8] sm:$0xff] %vm347, %v255
  %376 = vst.msk [vmem:[%s3 + $0xe0] sm:$0xff] %vm347, %v258
  %377 = vst.msk [vmem:[%s3 + $0xe8] sm:$0xff] %vm347, %v260
  %378 = vst.msk [vmem:[%s3 + $0xf0] sm:$0xff] %vm347, %v263
  %379 = vst.msk [vmem:[%s3 + $0xf8] sm:$0xff] %vm347, %v265
  %380 = vst.msk [vmem:[%s3 + $0x100] sm:$0xff] %vm347, %v268
  %381 = vst.msk [vmem:[%s3 + $0x108] sm:$0xff] %vm347, %v270
  %382 = vst.msk [vmem:[%s3 + $0x110] sm:$0xff] %vm347, %v273
  %383 = vst.msk [vmem:[%s3 + $0x118] sm:$0xff] %vm347, %v275
  %384 = vst.msk [vmem:[%s3 + $0x120] sm:$0xff] %vm347, %v278
  %385 = vst.msk [vmem:[%s3 + $0x128] sm:$0xff] %vm347, %v280
  %386 = vst.msk [vmem:[%s3 + $0x130] sm:$0xff] %vm347, %v283
  %387 = vst.msk [vmem:[%s3 + $0x138] sm:$0xff] %vm347, %v285
  %388 = vst.msk [vmem:[%s3 + $0x140] sm:$0xff] %vm347, %v288
  %389 = vst.msk [vmem:[%s3 + $0x148] sm:$0xff] %vm347, %v290
  %390 = vst.msk [vmem:[%s3 + $0x150] sm:$0xff] %vm347, %v293
  %391 = vst.msk [vmem:[%s3 + $0x158] sm:$0xff] %vm347, %v295
  %392 = vst.msk [vmem:[%s3 + $0x160] sm:$0xff] %vm347, %v298
  %393 = vst.msk [vmem:[%s3 + $0x168] sm:$0xff] %vm347, %v300
  %394 = vst.msk [vmem:[%s3 + $0x170] sm:$0xff] %vm347, %v303
  %395 = vst.msk [vmem:[%s3 + $0x178] sm:$0xff] %vm347, %v305
  %396 = vst.msk [vmem:[%s3 + $0x180] sm:$0xff] %vm347, %v308
  %397 = vst.msk [vmem:[%s3 + $0x188] sm:$0xff] %vm347, %v310
  %398 = vst.msk [vmem:[%s3 + $0x190] sm:$0xff] %vm347, %v313
  %399 = vst.msk [vmem:[%s3 + $0x198] sm:$0xff] %vm347, %v315
  %400 = vst.msk [vmem:[%s3 + $0x1a0] sm:$0xff] %vm347, %v318
  %401 = vst.msk [vmem:[%s3 + $0x1a8] sm:$0xff] %vm347, %v320
  %402 = vst.msk [vmem:[%s3 + $0x1b0] sm:$0xff] %vm347, %v323
  %403 = vst.msk [vmem:[%s3 + $0x1b8] sm:$0xff] %vm347, %v325
  %404 = vst.msk [vmem:[%s3 + $0x1c0] sm:$0xff] %vm347, %v328
  %405 = vst.msk [vmem:[%s3 + $0x1c8] sm:$0xff] %vm347, %v330
  %406 = vst.msk [vmem:[%s3 + $0x1d0] sm:$0xff] %vm347, %v333
  %407 = vst.msk [vmem:[%s3 + $0x1d8] sm:$0xff] %vm347, %v335
  %408 = vst.msk [vmem:[%s3 + $0x1e0] sm:$0xff] %vm347, %v338
  %409 = vst.msk [vmem:[%s3 + $0x1e8] sm:$0xff] %vm347, %v340
  %410 = vst.msk [vmem:[%s3 + $0x1f0] sm:$0xff] %vm347, %v343
  %411 = vst.msk [vmem:[%s3 + $0x1f8] sm:$0xff] %vm347, %v345
  // Predicated region
  $region14: #{pem_forward.8} parent=0 // pred_check
    _
  $region15: #{pem_forward.8} parent=0 // pred_check_branch
    %413 = sbr.rel (0) target = $region17
  $region16: #{pem_forward.8} parent=0 // pred_region
    _
  $region17: #{pem_forward.8} parent=0 // pred_fallthru
    _
  // Predicated region
  $region18: #{pem_forward.8} parent=0 // pred_check
    _
  $region19: #{pem_forward.8} parent=0 // pred_check_branch
    %415 = sbr.rel (0) target = $region21
  $region20: #{pem_forward.8} parent=0 // pred_region
    _
  $region21: #{pem_forward.8} parent=0 // pred_fallthru
    _

// kernel: pem_forward.9
$region0: #{pem_forward.9}
  #allocation0 [shape = 'u32[]', space=smem, size = 0x4, offset = 0x4, fixed_abs, tag = 'smem constant byte address 0x4 - core index']
  #allocation1 [shape = 'u32[72,128]{1,0:T(1,128)}', space=vmem, size = 0x9000, scoped, tag = 'internal scratch']
  %s0 = inlined_call_operand.vmem [shape: f32[98,576], index: 0, kind: input, shape index: {}]
  %s1 = inlined_call_operand.vmem [shape: bf16[576,64], index: 1, kind: input, shape index: {}]
  %s2 = inlined_call_operand.vmem [shape: f32[1,64], index: 2, kind: input, shape index: {}]
  %s3 = inlined_call_operand.vmem [shape: f32[98,64], index: 3, kind: output, shape index: {}]
  %s4 = sld [smem:[#allocation0]]
  $region22: #{pem_forward.9} parent=0
    _
  %s6 = ssub.s32 1, %s4
  %s7 = scalar_select 0, %s6, %s4
  // Predicated region
  $region2: #{pem_forward.9} parent=0 // pred_check
    _
  $region3: #{pem_forward.9} parent=0 // pred_check_branch
    %9 = sbr.rel (0) target = $region5
  $region4: #{pem_forward.9} parent=0 // pred_region
    _
  $region5: #{pem_forward.9} parent=0 // pred_fallthru
    _
  // Predicated region
  $region6: #{pem_forward.9} parent=0 // pred_check
    _
  $region7: #{pem_forward.9} parent=0 // pred_check_branch
    %11 = sbr.rel (0) target = $region9
  $region8: #{pem_forward.9} parent=0 // pred_region
    _
  $region9: #{pem_forward.9} parent=0 // pred_fallthru
    _
  // Predicated region
  $region10: #{pem_forward.9} parent=0 // pred_check
    _
  $region11: #{pem_forward.9} parent=0 // pred_check_branch
    %13 = sbr.rel (0) target = $region13
  $region12: #{pem_forward.9} parent=0 // pred_region
    _
  $region13: #{pem_forward.9} parent=0 // pred_fallthru
    _
  %v15 = vld [vmem:[%s0] sm:$0xff]
  %v16 = vld [vmem:[%s0 + $0x8] sm:$0xff]
  %v17 = vld [vmem:[%s0 + $0x10] sm:$0xff]
  %v18 = vld [vmem:[%s0 + $0x18] sm:$0xff]
  %v19 = vld [vmem:[%s0 + $0x20] sm:$0xff]
  %v20 = vld [vmem:[%s0 + $0x28] sm:$0xff]
  %v21 = vld [vmem:[%s0 + $0x30] sm:$0xff]
  %v22 = vld [vmem:[%s0 + $0x38] sm:$0xff]
  %v23 = vld [vmem:[%s0 + $0x40] sm:$0xff]
  %v24 = vld [vmem:[%s0 + $0x48] sm:$0xff]
  %v25 = vld [vmem:[%s0 + $0x50] sm:$0xff]
  %v26 = vld [vmem:[%s0 + $0x58] sm:$0xff]
  %v27 = vld [vmem:[%s0 + $0x60] sm:$0xff]
  %v28 = vld [vmem:[%s0 + $0x68] sm:$0xff]
  %v29 = vld [vmem:[%s0 + $0x70] sm:$0xff]
  %v30 = vld [vmem:[%s0 + $0x78] sm:$0xff]
  %v31 = vld [vmem:[%s0 + $0x80] sm:$0xff]
  %v32 = vld [vmem:[%s0 + $0x88] sm:$0xff]
  %v33 = vld [vmem:[%s0 + $0x90] sm:$0xff]
  %v34 = vld [vmem:[%s0 + $0x98] sm:$0xff]
  %v35 = vld [vmem:[%s0 + $0xa0] sm:$0xff]
  %v36 = vld [vmem:[%s0 + $0xa8] sm:$0xff]
  %v37 = vld [vmem:[%s0 + $0xb0] sm:$0xff]
  %v38 = vld [vmem:[%s0 + $0xb8] sm:$0xff]
  %v39 = vld [vmem:[%s0 + $0xc0] sm:$0xff]
  %v40 = vld [vmem:[%s0 + $0xc8] sm:$0xff]
  %v41 = vld [vmem:[%s0 + $0xd0] sm:$0xff]
  %v42 = vld [vmem:[%s0 + $0xd8] sm:$0xff]
  %v43 = vld [vmem:[%s0 + $0xe0] sm:$0xff]
  %v44 = vld [vmem:[%s0 + $0xe8] sm:$0xff]
  %v45 = vld [vmem:[%s0 + $0xf0] sm:$0xff]
  %v46 = vld [vmem:[%s0 + $0xf8] sm:$0xff]
  %v47 = vld [vmem:[%s0 + $0x100] sm:$0xff]
  %v48 = vld [vmem:[%s0 + $0x108] sm:$0xff]
  %v49 = vld [vmem:[%s0 + $0x110] sm:$0xff]
  %v50 = vld [vmem:[%s0 + $0x118] sm:$0xff]
  %v51 = vld [vmem:[%s0 + $0x120] sm:$0xff]
  %v52 = vld [vmem:[%s0 + $0x128] sm:$0xff]
  %v53 = vld [vmem:[%s0 + $0x130] sm:$0xff]
  %v54 = vld [vmem:[%s0 + $0x138] sm:$0xff]
  %v55 = vld [vmem:[%s0 + $0x140] sm:$0xff]
  %v56 = vld [vmem:[%s0 + $0x148] sm:$0xff]
  %v57 = vld [vmem:[%s0 + $0x150] sm:$0xff]
  %v58 = vld [vmem:[%s0 + $0x158] sm:$0xff]
  %v59 = vld [vmem:[%s0 + $0x160] sm:$0xff]
  %v60 = vld [vmem:[%s0 + $0x168] sm:$0xff]
  %v61 = vld [vmem:[%s0 + $0x170] sm:$0xff]
  %v62 = vld [vmem:[%s0 + $0x178] sm:$0xff]
  %v63 = vld [vmem:[%s0 + $0x180] sm:$0xff]
  %v64 = vld [vmem:[%s0 + $0x188] sm:$0xff]
  %v65 = vld [vmem:[%s0 + $0x190] sm:$0xff]
  %v66 = vld [vmem:[%s0 + $0x198] sm:$0xff]
  %v67 = vld [vmem:[%s0 + $0x1a0] sm:$0xff]
  %v68 = vld [vmem:[%s0 + $0x1a8] sm:$0xff]
  %v69 = vld [vmem:[%s0 + $0x1b0] sm:$0xff]
  %v70 = vld [vmem:[%s0 + $0x1b8] sm:$0xff]
  %v71 = vld [vmem:[%s0 + $0x1c0] sm:$0xff]
  %v72 = vld [vmem:[%s0 + $0x1c8] sm:$0xff]
  %v73 = vld [vmem:[%s0 + $0x1d0] sm:$0xff]
  %v74 = vld [vmem:[%s0 + $0x1d8] sm:$0xff]
  %v75 = vld [vmem:[%s0 + $0x1e0] sm:$0x3]
  %v76 = vld [vmem:[%s0 + $0x1e8] sm:$0x3]
  %v77 = vld [vmem:[%s0 + $0x1f0] sm:$0x3]
  %v78 = vld [vmem:[%s0 + $0x1f8] sm:$0x3]
  %v79 = vld [vmem:[%s0 + $0x200] sm:$0x3]
  %v80 = vpack.c.bf16 %v20, %v15
  %v81 = vpack.c.bf16 %v21, %v16
  %v82 = vpack.c.bf16 %v22, %v17
  %v83 = vpack.c.bf16 %v23, %v18
  %v84 = vpack.c.bf16 %v24, %v19
  %v85 = vpack.c.bf16 %v30, %v25
  %v86 = vpack.c.bf16 %v31, %v26
  %v87 = vpack.c.bf16 %v32, %v27
  %v88 = vpack.c.bf16 %v33, %v28
  %v89 = vpack.c.bf16 %v34, %v29
  %v90 = vpack.c.bf16 %v40, %v35
  %v91 = vpack.c.bf16 %v41, %v36
  %v92 = vpack.c.bf16 %v42, %v37
  %v93 = vpack.c.bf16 %v43, %v38
  %v94 = vpack.c.bf16 %v44, %v39
  %v95 = vpack.c.bf16 %v50, %v45
  %v96 = vpack.c.bf16 %v51, %v46
  %v97 = vpack.c.bf16 %v52, %v47
  %v98 = vpack.c.bf16 %v53, %v48
  %v99 = vpack.c.bf16 %v54, %v49
  %v100 = vpack.c.bf16 %v60, %v55
  %v101 = vpack.c.bf16 %v61, %v56
  %v102 = vpack.c.bf16 %v62, %v57
  %v103 = vpack.c.bf16 %v63, %v58
  %v104 = vpack.c.bf16 %v64, %v59
  %v105 = vpack.c.bf16 %v70, %v65
  %v106 = vpack.c.bf16 %v71, %v66
  %v107 = vpack.c.bf16 %v72, %v67
  %v108 = vpack.c.bf16 %v73, %v68
  %v109 = vpack.c.bf16 %v74, %v69
  %v110 = vpack.c.bf16 %v75, %v75
  %v111 = vpack.c.bf16 %v76, %v76
  %v112 = vpack.c.bf16 %v77, %v77
  %v113 = vpack.c.bf16 %v78, %v78
  %v114 = vpack.c.bf16 %v79, %v79
  %v115 = vld [vmem:[%s1] sm:$0xf]
  %v116 = vld [vmem:[%s1 + $0x4] sm:$0xf]
  %v117 = vld [vmem:[%s1 + $0x8] sm:$0xf]
  %v118 = vld [vmem:[%s1 + $0xc] sm:$0xf]
  %v119 = vld [vmem:[%s1 + $0x10] sm:$0xf]
  %v120 = vld [vmem:[%s1 + $0x14] sm:$0xf]
  %v121 = vld [vmem:[%s1 + $0x18] sm:$0xf]
  %v122 = vld [vmem:[%s1 + $0x1c] sm:$0xf]
  %v123 = vld [vmem:[%s1 + $0x20] sm:$0xf]
  %v124 = vld [vmem:[%s1 + $0x24] sm:$0xf]
  %v125 = vld [vmem:[%s1 + $0x28] sm:$0xf]
  %v126 = vld [vmem:[%s1 + $0x2c] sm:$0xf]
  %v127 = vld [vmem:[%s1 + $0x30] sm:$0xf]
  %v128 = vld [vmem:[%s1 + $0x34] sm:$0xf]
  %v129 = vld [vmem:[%s1 + $0x38] sm:$0xf]
  %v130 = vld [vmem:[%s1 + $0x3c] sm:$0xf]
  %v131 = vld [vmem:[%s1 + $0x40] sm:$0xf]
  %v132 = vld [vmem:[%s1 + $0x44] sm:$0xf]
  %v133 = vld [vmem:[%s1 + $0x48] sm:$0xf]
  %v134 = vld [vmem:[%s1 + $0x4c] sm:$0xf]
  %v135 = vld [vmem:[%s1 + $0x50] sm:$0xf]
  %v136 = vld [vmem:[%s1 + $0x54] sm:$0xf]
  %v137 = vld [vmem:[%s1 + $0x58] sm:$0xf]
  %v138 = vld [vmem:[%s1 + $0x5c] sm:$0xf]
  %v139 = vld [vmem:[%s1 + $0x60] sm:$0xf]
  %v140 = vld [vmem:[%s1 + $0x64] sm:$0xf]
  %v141 = vld [vmem:[%s1 + $0x68] sm:$0xf]
  %v142 = vld [vmem:[%s1 + $0x6c] sm:$0xf]
  %v143 = vld [vmem:[%s1 + $0x70] sm:$0xf]
  %v144 = vld [vmem:[%s1 + $0x74] sm:$0xf]
  %v145 = vld [vmem:[%s1 + $0x78] sm:$0xf]
  %v146 = vld [vmem:[%s1 + $0x7c] sm:$0xf]
  %v147 = vld [vmem:[%s1 + $0x80] sm:$0xf]
  %v148 = vld [vmem:[%s1 + $0x84] sm:$0xf]
  %v149 = vld [vmem:[%s1 + $0x88] sm:$0xf]
  %v150 = vld [vmem:[%s1 + $0x8c] sm:$0xf]
  %v151 = vld [vmem:[%s1 + $0x90] sm:$0xf]
  %v152 = vld [vmem:[%s1 + $0x94] sm:$0xf]
  %v153 = vld [vmem:[%s1 + $0x98] sm:$0xf]
  %v154 = vld [vmem:[%s1 + $0x9c] sm:$0xf]
  %v155 = vld [vmem:[%s1 + $0xa0] sm:$0xf]
  %v156 = vld [vmem:[%s1 + $0xa4] sm:$0xf]
  %v157 = vld [vmem:[%s1 + $0xa8] sm:$0xf]
  %v158 = vld [vmem:[%s1 + $0xac] sm:$0xf]
  %v159 = vld [vmem:[%s1 + $0xb0] sm:$0xf]
  %v160 = vld [vmem:[%s1 + $0xb4] sm:$0xf]
  %v161 = vld [vmem:[%s1 + $0xb8] sm:$0xf]
  %v162 = vld [vmem:[%s1 + $0xbc] sm:$0xf]
  %v163 = vld [vmem:[%s1 + $0xc0] sm:$0xf]
  %v164 = vld [vmem:[%s1 + $0xc4] sm:$0xf]
  %v165 = vld [vmem:[%s1 + $0xc8] sm:$0xf]
  %v166 = vld [vmem:[%s1 + $0xcc] sm:$0xf]
  %v167 = vld [vmem:[%s1 + $0xd0] sm:$0xf]
  %v168 = vld [vmem:[%s1 + $0xd4] sm:$0xf]
  %v169 = vld [vmem:[%s1 + $0xd8] sm:$0xf]
  %v170 = vld [vmem:[%s1 + $0xdc] sm:$0xf]
  %v171 = vld [vmem:[%s1 + $0xe0] sm:$0xf]
  %v172 = vld [vmem:[%s1 + $0xe4] sm:$0xf]
  %v173 = vld [vmem:[%s1 + $0xe8] sm:$0xf]
  %v174 = vld [vmem:[%s1 + $0xec] sm:$0xf]
  %v175 = vld [vmem:[%s1 + $0xf0] sm:$0xf]
  %v176 = vld [vmem:[%s1 + $0xf4] sm:$0xf]
  %v177 = vld [vmem:[%s1 + $0xf8] sm:$0xf]
  %v178 = vld [vmem:[%s1 + $0xfc] sm:$0xf]
  %v179 = vld [vmem:[%s1 + $0x100] sm:$0xf]
  %v180 = vld [vmem:[%s1 + $0x104] sm:$0xf]
  %v181 = vld [vmem:[%s1 + $0x108] sm:$0xf]
  %v182 = vld [vmem:[%s1 + $0x10c] sm:$0xf]
  %v183 = vld [vmem:[%s1 + $0x110] sm:$0xf]
  %v184 = vld [vmem:[%s1 + $0x114] sm:$0xf]
  %v185 = vld [vmem:[%s1 + $0x118] sm:$0xf]
  %v186 = vld [vmem:[%s1 + $0x11c] sm:$0xf]
  %v187 = vld [vmem:[%s2] sm:$0x1]
  %v189 = vperm.slane %v187, 0
  %v263 = vunpack.c.l.b16 %v115
  %v264 = vunpack.c.l.b16 %v116
  %v265 = vunpack.c.l.b16 %v117
  %v266 = vunpack.c.l.b16 %v118
  %v267 = vunpack.c.l.b16 %v119
  %v268 = vunpack.c.l.b16 %v120
  %v269 = vunpack.c.l.b16 %v121
  %v270 = vunpack.c.l.b16 %v122
  %v271 = vunpack.c.l.b16 %v123
  %v272 = vunpack.c.l.b16 %v124
  %v273 = vunpack.c.l.b16 %v125
  %v274 = vunpack.c.l.b16 %v126
  %v275 = vunpack.c.l.b16 %v127
  %v276 = vunpack.c.l.b16 %v128
  %v277 = vunpack.c.l.b16 %v129
  %v278 = vunpack.c.l.b16 %v130
  %v279 = vunpack.c.l.b16 %v131
  %v280 = vunpack.c.l.b16 %v132
  %v281 = vunpack.c.l.b16 %v133
  %v282 = vunpack.c.l.b16 %v134
  %v283 = vunpack.c.l.b16 %v135
  %v284 = vunpack.c.l.b16 %v136
  %v285 = vunpack.c.l.b16 %v137
  %v286 = vunpack.c.l.b16 %v138
  %v287 = vunpack.c.l.b16 %v139
  %v288 = vunpack.c.l.b16 %v140
  %v289 = vunpack.c.l.b16 %v141
  %v290 = vunpack.c.l.b16 %v142
  %v291 = vunpack.c.l.b16 %v143
  %v292 = vunpack.c.l.b16 %v144
  %v293 = vunpack.c.l.b16 %v145
  %v294 = vunpack.c.l.b16 %v146
  %v295 = vunpack.c.l.b16 %v147
  %v296 = vunpack.c.l.b16 %v148
  %v297 = vunpack.c.l.b16 %v149
  %v298 = vunpack.c.l.b16 %v150
  %v299 = vunpack.c.l.b16 %v151
  %v300 = vunpack.c.l.b16 %v152
  %v301 = vunpack.c.l.b16 %v153
  %v302 = vunpack.c.l.b16 %v154
  %v303 = vunpack.c.l.b16 %v155
  %v304 = vunpack.c.l.b16 %v156
  %v305 = vunpack.c.l.b16 %v157
  %v306 = vunpack.c.l.b16 %v158
  %v307 = vunpack.c.l.b16 %v159
  %v308 = vunpack.c.l.b16 %v160
  %v309 = vunpack.c.l.b16 %v161
  %v310 = vunpack.c.l.b16 %v162
  %v311 = vunpack.c.l.b16 %v163
  %v312 = vunpack.c.l.b16 %v164
  %v313 = vunpack.c.l.b16 %v165
  %v314 = vunpack.c.l.b16 %v166
  %v315 = vunpack.c.l.b16 %v167
  %v316 = vunpack.c.l.b16 %v168
  %v317 = vunpack.c.l.b16 %v169
  %v318 = vunpack.c.l.b16 %v170
  %v319 = vunpack.c.l.b16 %v171
  %v320 = vunpack.c.l.b16 %v172
  %v321 = vunpack.c.l.b16 %v173
  %v322 = vunpack.c.l.b16 %v174
  %v323 = vunpack.c.l.b16 %v175
  %v324 = vunpack.c.l.b16 %v176
  %v325 = vunpack.c.l.b16 %v177
  %v326 = vunpack.c.l.b16 %v178
  %v327 = vunpack.c.l.b16 %v179
  %v328 = vunpack.c.l.b16 %v180
  %v329 = vunpack.c.l.b16 %v181
  %v330 = vunpack.c.l.b16 %v182
  %v331 = vunpack.c.l.b16 %v183
  %v332 = vunpack.c.l.b16 %v184
  %v333 = vunpack.c.l.b16 %v185
  %v334 = vunpack.c.l.b16 %v186
  %v335 = vpack.c.b16 %v264, %v263
  %v336 = vpack.c.b16 %v266, %v265
  %v337 = vpack.c.b16 %v268, %v267
  %v338 = vpack.c.b16 %v270, %v269
  %v339 = vpack.c.b16 %v272, %v271
  %v340 = vpack.c.b16 %v274, %v273
  %v341 = vpack.c.b16 %v276, %v275
  %v342 = vpack.c.b16 %v278, %v277
  %v343 = vpack.c.b16 %v280, %v279
  %v344 = vpack.c.b16 %v282, %v281
  %v345 = vpack.c.b16 %v284, %v283
  %v346 = vpack.c.b16 %v286, %v285
  %v347 = vpack.c.b16 %v288, %v287
  %v348 = vpack.c.b16 %v290, %v289
  %v349 = vpack.c.b16 %v292, %v291
  %v350 = vpack.c.b16 %v294, %v293
  %v351 = vpack.c.b16 %v296, %v295
  %v352 = vpack.c.b16 %v298, %v297
  %v353 = vpack.c.b16 %v300, %v299
  %v354 = vpack.c.b16 %v302, %v301
  %v355 = vpack.c.b16 %v304, %v303
  %v356 = vpack.c.b16 %v306, %v305
  %v357 = vpack.c.b16 %v308, %v307
  %v358 = vpack.c.b16 %v310, %v309
  %v359 = vpack.c.b16 %v312, %v311
  %v360 = vpack.c.b16 %v314, %v313
  %v361 = vpack.c.b16 %v316, %v315
  %v362 = vpack.c.b16 %v318, %v317
  %v363 = vpack.c.b16 %v320, %v319
  %v364 = vpack.c.b16 %v322, %v321
  %v365 = vpack.c.b16 %v324, %v323
  %v366 = vpack.c.b16 %v326, %v325
  %v367 = vpack.c.b16 %v328, %v327
  %v368 = vpack.c.b16 %v330, %v329
  %v369 = vpack.c.b16 %v332, %v331
  %v370 = vpack.c.b16 %v334, %v333
  %vm407 = vcmask 523264
  %v409 = vsel %vm407, %v84, 0
  %v412 = vsel %vm407, %v89, 0
  %v415 = vsel %vm407, %v94, 0
  %v418 = vsel %vm407, %v99, 0
  %v421 = vsel %vm407, %v104, 0
  %v424 = vsel %vm407, %v109, 0
  %v427 = vsel %vm407, %v114, 0
  %429 = vmatpush.bf16.msra.mxu0 %v342
  %430 = vmatpush.bf16.msra.mxu0 %v341
  %431 = vmatpush.bf16.msra.mxu0 %v340
  %432 = vmatpush.bf16.msra.mxu0 %v339
  %433 = vmatpush.bf16.msra.mxu0 %v338
  %434 = vmatpush.bf16.msra.mxu0 %v337
  %435 = vmatpush.bf16.msra.mxu0 %v336
  %436 = vmatpush.bf16.msra.mxu0 %v335
  %437 = vmatmul.bf16.gmra.mxu0 %v80
  %v438 = vpop.f32.mrf.mxu0
  %v439 = vadd.f32 %v189, %v438
  %v440 = vpop.f32.mrf.mxu0
  %v441 = vadd.f32 %v189, %v440
  %442 = vmatmul.bf16.gmra.mxu0 %v85
  %v443 = vpop.f32.mrf.mxu0
  %v444 = vadd.f32 %v189, %v443
  %v445 = vpop.f32.mrf.mxu0
  %v446 = vadd.f32 %v189, %v445
  %447 = vmatmul.bf16.gmra.mxu0 %v90
  %v448 = vpop.f32.mrf.mxu0
  %v449 = vadd.f32 %v189, %v448
  %v450 = vpop.f32.mrf.mxu0
  %v451 = vadd.f32 %v189, %v450
  %452 = vmatmul.bf16.gmra.mxu0 %v95
  %v453 = vpop.f32.mrf.mxu0
  %v454 = vadd.f32 %v189, %v453
  %v455 = vpop.f32.mrf.mxu0
  %v456 = vadd.f32 %v189, %v455
  %457 = vmatmul.bf16.gmra.mxu0 %v100
  %v458 = vpop.f32.mrf.mxu0
  %v459 = vadd.f32 %v189, %v458
  %v460 = vpop.f32.mrf.mxu0
  %v461 = vadd.f32 %v189, %v460
  %462 = vmatmul.bf16.gmra.mxu0 %v105
  %v463 = vpop.f32.mrf.mxu0
  %v464 = vadd.f32 %v189, %v463
  %v465 = vpop.f32.mrf.mxu0
  %v466 = vadd.f32 %v189, %v465
  %467 = vmatmul.bf16.gmra.mxu0 %v110
  %v468 = vpop.f32.mrf.mxu0
  %v469 = vadd.f32 %v189, %v468
  %v470 = vpop.f32.mrf.mxu0
  %471 = vdwg.mxu0
  %472 = vmatpush.bf16.msra.mxu0 %v350
  %473 = vmatpush.bf16.msra.mxu0 %v349
  %474 = vmatpush.bf16.msra.mxu0 %v348
  %475 = vmatpush.bf16.msra.mxu0 %v347
  %476 = vmatpush.bf16.msra.mxu0 %v346
  %477 = vmatpush.bf16.msra.mxu0 %v345
  %478 = vmatpush.bf16.msra.mxu0 %v344
  %479 = vmatpush.bf16.msra.mxu0 %v343
  %480 = vmatmul.bf16.gmra.mxu0 %v81
  %v481 = vpop.f32.mrf.mxu0
  %v482 = vadd.f32 %v439, %v481
  %v483 = vpop.f32.mrf.mxu0
  %v484 = vadd.f32 %v441, %v483
  %485 = vmatmul.bf16.gmra.mxu0 %v86
  %v486 = vpop.f32.mrf.mxu0
  %v487 = vadd.f32 %v444, %v486
  %v488 = vpop.f32.mrf.mxu0
  %v489 = vadd.f32 %v446, %v488
  %490 = vmatmul.bf16.gmra.mxu0 %v91
  %v491 = vpop.f32.mrf.mxu0
  %v492 = vadd.f32 %v449, %v491
  %v493 = vpop.f32.mrf.mxu0
  %v494 = vadd.f32 %v451, %v493
  %495 = vmatmul.bf16.gmra.mxu0 %v96
  %v496 = vpop.f32.mrf.mxu0
  %v497 = vadd.f32 %v454, %v496
  %v498 = vpop.f32.mrf.mxu0
  %v499 = vadd.f32 %v456, %v498
  %500 = vmatmul.bf16.gmra.mxu0 %v101
  %v501 = vpop.f32.mrf.mxu0
  %v502 = vadd.f32 %v459, %v501
  %v503 = vpop.f32.mrf.mxu0
  %v504 = vadd.f32 %v461, %v503
  %505 = vmatmul.bf16.gmra.mxu0 %v106
  %v506 = vpop.f32.mrf.mxu0
  %v507 = vadd.f32 %v464, %v506
  %v508 = vpop.f32.mrf.mxu0
  %v509 = vadd.f32 %v466, %v508
  %510 = vmatmul.bf16.gmra.mxu0 %v111
  %v511 = vpop.f32.mrf.mxu0
  %v512 = vadd.f32 %v469, %v511
  %v513 = vpop.f32.mrf.mxu0
  %514 = vdwg.mxu0
  %515 = vmatpush.bf16.msra.mxu0 %v358
  %516 = vmatpush.bf16.msra.mxu0 %v357
  %517 = vmatpush.bf16.msra.mxu0 %v356
  %518 = vmatpush.bf16.msra.mxu0 %v355
  %519 = vmatpush.bf16.msra.mxu0 %v354
  %520 = vmatpush.bf16.msra.mxu0 %v353
  %521 = vmatpush.bf16.msra.mxu0 %v352
  %522 = vmatpush.bf16.msra.mxu0 %v351
  %523 = vmatmul.bf16.gmra.mxu0 %v82
  %v524 = vpop.f32.mrf.mxu0
  %v525 = vadd.f32 %v482, %v524
  %v526 = vpop.f32.mrf.mxu0
  %v527 = vadd.f32 %v484, %v526
  %528 = vmatmul.bf16.gmra.mxu0 %v87
  %v529 = vpop.f32.mrf.mxu0
  %v530 = vadd.f32 %v487, %v529
  %v531 = vpop.f32.mrf.mxu0
  %v532 = vadd.f32 %v489, %v531
  %533 = vmatmul.bf16.gmra.mxu0 %v92
  %v534 = vpop.f32.mrf.mxu0
  %v535 = vadd.f32 %v492, %v534
  %v536 = vpop.f32.mrf.mxu0
  %v537 = vadd.f32 %v494, %v536
  %538 = vmatmul.bf16.gmra.mxu0 %v97
  %v539 = vpop.f32.mrf.mxu0
  %v540 = vadd.f32 %v497, %v539
  %v541 = vpop.f32.mrf.mxu0
  %v542 = vadd.f32 %v499, %v541
  %543 = vmatmul.bf16.gmra.mxu0 %v102
  %v544 = vpop.f32.mrf.mxu0
  %v545 = vadd.f32 %v502, %v544
  %v546 = vpop.f32.mrf.mxu0
  %v547 = vadd.f32 %v504, %v546
  %548 = vmatmul.bf16.gmra.mxu0 %v107
  %v549 = vpop.f32.mrf.mxu0
  %v550 = vadd.f32 %v507, %v549
  %v551 = vpop.f32.mrf.mxu0
  %v552 = vadd.f32 %v509, %v551
  %553 = vmatmul.bf16.gmra.mxu0 %v112
  %v554 = vpop.f32.mrf.mxu0
  %v555 = vadd.f32 %v512, %v554
  %v556 = vpop.f32.mrf.mxu0
  %557 = vdwg.mxu0
  %558 = vmatpush.bf16.msra.mxu0 %v366
  %559 = vmatpush.bf16.msra.mxu0 %v365
  %560 = vmatpush.bf16.msra.mxu0 %v364
  %561 = vmatpush.bf16.msra.mxu0 %v363
  %562 = vmatpush.bf16.msra.mxu0 %v362
  %563 = vmatpush.bf16.msra.mxu0 %v361
  %564 = vmatpush.bf16.msra.mxu0 %v360
  %565 = vmatpush.bf16.msra.mxu0 %v359
  %566 = vmatmul.bf16.gmra.mxu0 %v83
  %v567 = vpop.f32.mrf.mxu0
  %v568 = vadd.f32 %v525, %v567
  %v569 = vpop.f32.mrf.mxu0
  %v570 = vadd.f32 %v527, %v569
  %571 = vmatmul.bf16.gmra.mxu0 %v88
  %v572 = vpop.f32.mrf.mxu0
  %v573 = vadd.f32 %v530, %v572
  %v574 = vpop.f32.mrf.mxu0
  %v575 = vadd.f32 %v532, %v574
  %576 = vmatmul.bf16.gmra.mxu0 %v93
  %v577 = vpop.f32.mrf.mxu0
  %v578 = vadd.f32 %v535, %v577
  %v579 = vpop.f32.mrf.mxu0
  %v580 = vadd.f32 %v537, %v579
  %581 = vmatmul.bf16.gmra.mxu0 %v98
  %v582 = vpop.f32.mrf.mxu0
  %v583 = vadd.f32 %v540, %v582
  %v584 = vpop.f32.mrf.mxu0
  %v585 = vadd.f32 %v542, %v584
  %586 = vmatmul.bf16.gmra.mxu0 %v103
  %v587 = vpop.f32.mrf.mxu0
  %v588 = vadd.f32 %v545, %v587
  %v589 = vpop.f32.mrf.mxu0
  %v590 = vadd.f32 %v547, %v589
  %591 = vmatmul.bf16.gmra.mxu0 %v108
  %v592 = vpop.f32.mrf.mxu0
  %v593 = vadd.f32 %v550, %v592
  %v594 = vpop.f32.mrf.mxu0
  %v595 = vadd.f32 %v552, %v594
  %596 = vmatmul.bf16.gmra.mxu0 %v113
  %v597 = vpop.f32.mrf.mxu0
  %v598 = vadd.f32 %v555, %v597
  %v599 = vpop.f32.mrf.mxu0
  %600 = vdwg.mxu0
  %601 = vmatpush.bf16.msra.mxu0 0
  %602 = vmatpush.bf16.msra.mxu0 0
  %603 = vmatpush.bf16.msra.mxu0 0
  %604 = vmatpush.bf16.msra.mxu0 0
  %605 = vmatpush.bf16.msra.mxu0 %v370
  %606 = vmatpush.bf16.msra.mxu0 %v369
  %607 = vmatpush.bf16.msra.mxu0 %v368
  %608 = vmatpush.bf16.msra.mxu0 %v367
  %609 = vmatmul.bf16.gmra.mxu0 %v409
  %v610 = vpop.f32.mrf.mxu0
  %v611 = vadd.f32 %v568, %v610
  %v612 = vpop.f32.mrf.mxu0
  %v613 = vadd.f32 %v570, %v612
  %614 = vmatmul.bf16.gmra.mxu0 %v412
  %v615 = vpop.f32.mrf.mxu0
  %v616 = vadd.f32 %v573, %v615
  %v617 = vpop.f32.mrf.mxu0
  %v618 = vadd.f32 %v575, %v617
  %619 = vmatmul.bf16.gmra.mxu0 %v415
  %v620 = vpop.f32.mrf.mxu0
  %v621 = vadd.f32 %v578, %v620
  %v622 = vpop.f32.mrf.mxu0
  %v623 = vadd.f32 %v580, %v622
  %624 = vmatmul.bf16.gmra.mxu0 %v418
  %v625 = vpop.f32.mrf.mxu0
  %v626 = vadd.f32 %v583, %v625
  %v627 = vpop.f32.mrf.mxu0
  %v628 = vadd.f32 %v585, %v627
  %629 = vmatmul.bf16.gmra.mxu0 %v421
  %v630 = vpop.f32.mrf.mxu0
  %v631 = vadd.f32 %v588, %v630
  %v632 = vpop.f32.mrf.mxu0
  %v633 = vadd.f32 %v590, %v632
  %634 = vmatmul.bf16.gmra.mxu0 %v424
  %v635 = vpop.f32.mrf.mxu0
  %v636 = vadd.f32 %v593, %v635
  %v637 = vpop.f32.mrf.mxu0
  %v638 = vadd.f32 %v595, %v637
  %639 = vmatmul.bf16.gmra.mxu0 %v427
  %v640 = vpop.f32.mrf.mxu0
  %v641 = vadd.f32 %v598, %v640
  %v642 = vpop.f32.mrf.mxu0
  %643 = vdwg.mxu0
  %644 = vst.msk [vmem:[%s3] sm:$0xff] %vm407, %v611
  %645 = vst.msk [vmem:[%s3 + $0x8] sm:$0xff] %vm407, %v613
  %646 = vst.msk [vmem:[%s3 + $0x10] sm:$0xff] %vm407, %v616
  %647 = vst.msk [vmem:[%s3 + $0x18] sm:$0xff] %vm407, %v618
  %648 = vst.msk [vmem:[%s3 + $0x20] sm:$0xff] %vm407, %v621
  %649 = vst.msk [vmem:[%s3 + $0x28] sm:$0xff] %vm407, %v623
  %650 = vst.msk [vmem:[%s3 + $0x30] sm:$0xff] %vm407, %v626
  %651 = vst.msk [vmem:[%s3 + $0x38] sm:$0xff] %vm407, %v628
  %652 = vst.msk [vmem:[%s3 + $0x40] sm:$0xff] %vm407, %v631
  %653 = vst.msk [vmem:[%s3 + $0x48] sm:$0xff] %vm407, %v633
  %654 = vst.msk [vmem:[%s3 + $0x50] sm:$0xff] %vm407, %v636
  %655 = vst.msk [vmem:[%s3 + $0x58] sm:$0xff] %vm407, %v638
  %vm656 = vcmask 517120
  %657 = vst.msk [vmem:[%s3 + $0x60] sm:$0x3] %vm656, %v641
  // Predicated region
  $region14: #{pem_forward.9} parent=0 // pred_check
    _
  $region15: #{pem_forward.9} parent=0 // pred_check_branch
    %659 = sbr.rel (0) target = $region17
  $region16: #{pem_forward.9} parent=0 // pred_region
    _
  $region17: #{pem_forward.9} parent=0 // pred_fallthru
    _
  // Predicated region
  $region18: #{pem_forward.9} parent=0 // pred_check
    _
  $region19: #{pem_forward.9} parent=0 // pred_check_branch
    %661 = sbr.rel (0) target = $region21
  $region20: #{pem_forward.9} parent=0 // pred_region
    _
  $region21: #{pem_forward.9} parent=0 // pred_fallthru
    _

// kernel: pem_forward.10
$region0: #{pem_forward.10}
  #allocation0 [shape = 'u32[]', space=smem, size = 0x4, offset = 0x4, fixed_abs, tag = 'smem constant byte address 0x4 - core index']
  #allocation1 [shape = 'u32[72,128]{1,0:T(1,128)}', space=vmem, size = 0x9000, scoped, tag = 'internal scratch']
  %s0 = inlined_call_operand.vmem [shape: f32[256,49], index: 0, kind: input, shape index: {}]
  %s1 = inlined_call_operand.vmem [shape: f32[49,128], index: 1, kind: input, shape index: {}]
  %s2 = inlined_call_operand.vmem [shape: f32[256,128], index: 2, kind: input, shape index: {}]
  %s3 = inlined_call_operand.vmem [shape: bf16[256,128], index: 3, kind: output, shape index: {0}]
  %s4 = inlined_call_operand.vmem [shape: f32[256,128], index: 4, kind: output, shape index: {1}]
  %5 = xla_tuple %s3, %s4
  %s6 = sld [smem:[#allocation0]]
  $region30: #{pem_forward.10} parent=0
    _
  %s8 = ssub.s32 1, %s6
  %s9 = scalar_select 0, %s8, %s6
  // Predicated region
  $region2: #{pem_forward.10} parent=0 // pred_check
    _
  $region3: #{pem_forward.10} parent=0 // pred_check_branch
    %11 = sbr.rel (0) target = $region5
  $region4: #{pem_forward.10} parent=0 // pred_region
    _
  $region5: #{pem_forward.10} parent=0 // pred_fallthru
    _
  // Predicated region
  $region6: #{pem_forward.10} parent=0 // pred_check
    _
  $region7: #{pem_forward.10} parent=0 // pred_check_branch
    %13 = sbr.rel (0) target = $region9
  $region8: #{pem_forward.10} parent=0 // pred_region
    _
  $region9: #{pem_forward.10} parent=0 // pred_fallthru
    _
  // Predicated region
  $region10: #{pem_forward.10} parent=0 // pred_check
    _
  $region11: #{pem_forward.10} parent=0 // pred_check_branch
    %15 = sbr.rel (0) target = $region13
  $region12: #{pem_forward.10} parent=0 // pred_region
    _
  $region13: #{pem_forward.10} parent=0 // pred_fallthru
    _
  %v16 = vld [vmem:[%s0] sm:$0xff]
  %v17 = vld [vmem:[%s0 + $0x8] sm:$0xff]
  %v18 = vld [vmem:[%s0 + $0x10] sm:$0xff]
  %v19 = vld [vmem:[%s0 + $0x18] sm:$0xff]
  %v20 = vld [vmem:[%s0 + $0x20] sm:$0xff]
  %v21 = vld [vmem:[%s0 + $0x28] sm:$0xff]
  %v22 = vld [vmem:[%s0 + $0x30] sm:$0xff]
  %v23 = vld [vmem:[%s0 + $0x38] sm:$0xff]
  %v24 = vld [vmem:[%s0 + $0x40] sm:$0xff]
  %v25 = vld [vmem:[%s0 + $0x48] sm:$0xff]
  %v26 = vld [vmem:[%s0 + $0x50] sm:$0xff]
  %v27 = vld [vmem:[%s0 + $0x58] sm:$0xff]
  %v28 = vld [vmem:[%s0 + $0x60] sm:$0xff]
  %v29 = vld [vmem:[%s0 + $0x68] sm:$0xff]
  %v30 = vld [vmem:[%s0 + $0x70] sm:$0xff]
  %v31 = vld [vmem:[%s0 + $0x78] sm:$0xff]
  %v32 = vld [vmem:[%s0 + $0x80] sm:$0xff]
  %v33 = vld [vmem:[%s0 + $0x88] sm:$0xff]
  %v34 = vld [vmem:[%s0 + $0x90] sm:$0xff]
  %v35 = vld [vmem:[%s0 + $0x98] sm:$0xff]
  %v36 = vld [vmem:[%s0 + $0xa0] sm:$0xff]
  %v37 = vld [vmem:[%s0 + $0xa8] sm:$0xff]
  %v38 = vld [vmem:[%s0 + $0xb0] sm:$0xff]
  %v39 = vld [vmem:[%s0 + $0xb8] sm:$0xff]
  %v40 = vld [vmem:[%s0 + $0xc0] sm:$0xff]
  %v41 = vld [vmem:[%s0 + $0xc8] sm:$0xff]
  %v42 = vld [vmem:[%s0 + $0xd0] sm:$0xff]
  %v43 = vld [vmem:[%s0 + $0xd8] sm:$0xff]
  %v44 = vld [vmem:[%s0 + $0xe0] sm:$0xff]
  %v45 = vld [vmem:[%s0 + $0xe8] sm:$0xff]
  %v46 = vld [vmem:[%s0 + $0xf0] sm:$0xff]
  %v47 = vld [vmem:[%s0 + $0xf8] sm:$0xff]
  %v48 = vld [vmem:[%s1] sm:$0xff]
  %v49 = vld [vmem:[%s1 + $0x8] sm:$0xff]
  %v50 = vld [vmem:[%s1 + $0x10] sm:$0xff]
  %v51 = vld [vmem:[%s1 + $0x18] sm:$0xff]
  %v52 = vld [vmem:[%s1 + $0x20] sm:$0xff]
  %v53 = vld [vmem:[%s1 + $0x28] sm:$0xff]
  %v54 = vld [vmem:[%s1 + $0x30] sm:$0x1]
  %vm55 = vcmask 400384
  %v57 = vsel %vm55, %v16, 0
  %v60 = vsel %vm55, %v17, 0
  %v63 = vsel %vm55, %v18, 0
  %v66 = vsel %vm55, %v19, 0
  %v69 = vsel %vm55, %v20, 0
  %v72 = vsel %vm55, %v21, 0
  %v75 = vsel %vm55, %v22, 0
  %v78 = vsel %vm55, %v23, 0
  %v81 = vsel %vm55, %v24, 0
  %v84 = vsel %vm55, %v25, 0
  %v87 = vsel %vm55, %v26, 0
  %v90 = vsel %vm55, %v27, 0
  %v93 = vsel %vm55, %v28, 0
  %v96 = vsel %vm55, %v29, 0
  %v99 = vsel %vm55, %v30, 0
  %v102 = vsel %vm55, %v31, 0
  %v105 = vsel %vm55, %v32, 0
  %v108 = vsel %vm55, %v33, 0
  %v111 = vsel %vm55, %v34, 0
  %v114 = vsel %vm55, %v35, 0
  %v117 = vsel %vm55, %v36, 0
  %v120 = vsel %vm55, %v37, 0
  %v123 = vsel %vm55, %v38, 0
  %v126 = vsel %vm55, %v39, 0
  %v129 = vsel %vm55, %v40, 0
  %v132 = vsel %vm55, %v41, 0
  %v135 = vsel %vm55, %v42, 0
  %v138 = vsel %vm55, %v43, 0
  %v141 = vsel %vm55, %v44, 0
  %v144 = vsel %vm55, %v45, 0
  %v147 = vsel %vm55, %v46, 0
  %v150 = vsel %vm55, %v47, 0
  %vm152 = vcmask 1040384
  %v154 = vsel %vm152, %v54, 0
  %156 = vmatpush.msra.mxu0 0.0
  %157 = vmatpush.msra.mxu0 0.0
  %158 = vmatpush.msra.mxu0 0.0
  %159 = vmatpush.msra.mxu0 0.0
  %160 = vmatpush.msra.mxu0 0.0
  %161 = vmatpush.msra.mxu0 0.0
  %162 = vmatpush.msra.mxu0 0.0
  %163 = vmatpush.msra.mxu0 0.0
  %164 = vmatpush.msra.mxu0 0.0
  %165 = vmatpush.msra.mxu0 %v154
  %166 = vmatpush.msra.mxu0 %v53
  %167 = vmatpush.msra.mxu0 %v52
  %168 = vmatpush.msra.mxu0 %v51
  %169 = vmatpush.msra.mxu0 %v50
  %170 = vmatpush.msra.mxu0 %v49
  %171 = vmatpush.msra.mxu0 %v48
  %172 = vmatmul.f32.gmra.mxu0 %v57
  %v173 = vpop.f32.mrf.mxu0
  %v174 = vadd.f32 0.0, %v173
  %175 = vmatmul.f32.gmra.mxu0 %v60
  %v176 = vpop.f32.mrf.mxu0
  %v177 = vadd.f32 0.0, %v176
  %178 = vmatmul.f32.gmra.mxu0 %v63
  %v179 = vpop.f32.mrf.mxu0
  %v180 = vadd.f32 0.0, %v179
  %181 = vmatmul.f32.gmra.mxu0 %v66
  %v182 = vpop.f32.mrf.mxu0
  %v183 = vadd.f32 0.0, %v182
  %184 = vmatmul.f32.gmra.mxu0 %v69
  %v185 = vpop.f32.mrf.mxu0
  %v186 = vadd.f32 0.0, %v185
  %187 = vmatmul.f32.gmra.mxu0 %v72
  %v188 = vpop.f32.mrf.mxu0
  %v189 = vadd.f32 0.0, %v188
  %190 = vmatmul.f32.gmra.mxu0 %v75
  %v191 = vpop.f32.mrf.mxu0
  %v192 = vadd.f32 0.0, %v191
  %193 = vmatmul.f32.gmra.mxu0 %v78
  %v194 = vpop.f32.mrf.mxu0
  %v195 = vadd.f32 0.0, %v194
  %196 = vmatmul.f32.gmra.mxu0 %v81
  %v197 = vpop.f32.mrf.mxu0
  %v198 = vadd.f32 0.0, %v197
  %199 = vmatmul.f32.gmra.mxu0 %v84
  %v200 = vpop.f32.mrf.mxu0
  %v201 = vadd.f32 0.0, %v200
  %202 = vmatmul.f32.gmra.mxu0 %v87
  %v203 = vpop.f32.mrf.mxu0
  %v204 = vadd.f32 0.0, %v203
  %205 = vmatmul.f32.gmra.mxu0 %v90
  %v206 = vpop.f32.mrf.mxu0
  %v207 = vadd.f32 0.0, %v206
  %208 = vmatmul.f32.gmra.mxu0 %v93
  %v209 = vpop.f32.mrf.mxu0
  %v210 = vadd.f32 0.0, %v209
  %211 = vmatmul.f32.gmra.mxu0 %v96
  %v212 = vpop.f32.mrf.mxu0
  %v213 = vadd.f32 0.0, %v212
  %214 = vmatmul.f32.gmra.mxu0 %v99
  %v215 = vpop.f32.mrf.mxu0
  %v216 = vadd.f32 0.0, %v215
  %217 = vmatmul.f32.gmra.mxu0 %v102
  %v218 = vpop.f32.mrf.mxu0
  %v219 = vadd.f32 0.0, %v218
  %220 = vmatmul.f32.gmra.mxu0 %v105
  %v221 = vpop.f32.mrf.mxu0
  %v222 = vadd.f32 0.0, %v221
  %223 = vmatmul.f32.gmra.mxu0 %v108
  %v224 = vpop.f32.mrf.mxu0
  %v225 = vadd.f32 0.0, %v224
  %226 = vmatmul.f32.gmra.mxu0 %v111
  %v227 = vpop.f32.mrf.mxu0
  %v228 = vadd.f32 0.0, %v227
  %229 = vmatmul.f32.gmra.mxu0 %v114
  %v230 = vpop.f32.mrf.mxu0
  %v231 = vadd.f32 0.0, %v230
  %232 = vmatmul.f32.gmra.mxu0 %v117
  %v233 = vpop.f32.mrf.mxu0
  %v234 = vadd.f32 0.0, %v233
  %235 = vmatmul.f32.gmra.mxu0 %v120
  %v236 = vpop.f32.mrf.mxu0
  %v237 = vadd.f32 0.0, %v236
  %238 = vmatmul.f32.gmra.mxu0 %v123
  %v239 = vpop.f32.mrf.mxu0
  %v240 = vadd.f32 0.0, %v239
  %241 = vmatmul.f32.gmra.mxu0 %v126
  %v242 = vpop.f32.mrf.mxu0
  %v243 = vadd.f32 0.0, %v242
  %244 = vmatmul.f32.gmra.mxu0 %v129
  %v245 = vpop.f32.mrf.mxu0
  %v246 = vadd.f32 0.0, %v245
  %247 = vmatmul.f32.gmra.mxu0 %v132
  %v248 = vpop.f32.mrf.mxu0
  %v249 = vadd.f32 0.0, %v248
  %250 = vmatmul.f32.gmra.mxu0 %v135
  %v251 = vpop.f32.mrf.mxu0
  %v252 = vadd.f32 0.0, %v251
  %253 = vmatmul.f32.gmra.mxu0 %v138
  %v254 = vpop.f32.mrf.mxu0
  %v255 = vadd.f32 0.0, %v254
  %256 = vmatmul.f32.gmra.mxu0 %v141
  %v257 = vpop.f32.mrf.mxu0
  %v258 = vadd.f32 0.0, %v257
  %259 = vmatmul.f32.gmra.mxu0 %v144
  %v260 = vpop.f32.mrf.mxu0
  %v261 = vadd.f32 0.0, %v260
  %262 = vmatmul.f32.gmra.mxu0 %v147
  %v263 = vpop.f32.mrf.mxu0
  %v264 = vadd.f32 0.0, %v263
  %265 = vmatmul.f32.gmra.mxu0 %v150
  %v266 = vpop.f32.mrf.mxu0
  %v267 = vadd.f32 0.0, %v266
  %268 = vdwg.mxu0
  %v269 = vpack.c.bf16 %v174, %v174
  %v270 = vpack.c.bf16 %v177, %v177
  %v271 = vpack.c.bf16 %v180, %v180
  %v272 = vpack.c.bf16 %v183, %v183
  %v273 = vpack.c.bf16 %v186, %v186
  %v274 = vpack.c.bf16 %v189, %v189
  %v275 = vpack.c.bf16 %v192, %v192
  %v276 = vpack.c.bf16 %v195, %v195
  %v277 = vpack.c.bf16 %v198, %v198
  %v278 = vpack.c.bf16 %v201, %v201
  %v279 = vpack.c.bf16 %v204, %v204
  %v280 = vpack.c.bf16 %v207, %v207
  %v281 = vpack.c.bf16 %v210, %v210
  %v282 = vpack.c.bf16 %v213, %v213
  %v283 = vpack.c.bf16 %v216, %v216
  %v284 = vpack.c.bf16 %v219, %v219
  %v285 = vpack.c.bf16 %v222, %v222
  %v286 = vpack.c.bf16 %v225, %v225
  %v287 = vpack.c.bf16 %v228, %v228
  %v288 = vpack.c.bf16 %v231, %v231
  %v289 = vpack.c.bf16 %v234, %v234
  %v290 = vpack.c.bf16 %v237, %v237
  %v291 = vpack.c.bf16 %v240, %v240
  %v292 = vpack.c.bf16 %v243, %v243
  %v293 = vpack.c.bf16 %v246, %v246
  %v294 = vpack.c.bf16 %v249, %v249
  %v295 = vpack.c.bf16 %v252, %v252
  %v296 = vpack.c.bf16 %v255, %v255
  %v297 = vpack.c.bf16 %v258, %v258
  %v298 = vpack.c.bf16 %v261, %v261
  %v299 = vpack.c.bf16 %v264, %v264
  %v300 = vpack.c.bf16 %v267, %v267
  %301 = vst [vmem:[%s3] sm:$0xf] %v269
  %302 = vst [vmem:[%s3 + $0x4] sm:$0xf] %v270
  %303 = vst [vmem:[%s3 + $0x8] sm:$0xf] %v271
  %304 = vst [vmem:[%s3 + $0xc] sm:$0xf] %v272
  %305 = vst [vmem:[%s3 + $0x10] sm:$0xf] %v273
  %306 = vst [vmem:[%s3 + $0x14] sm:$0xf] %v274
  %307 = vst [vmem:[%s3 + $0x18] sm:$0xf] %v275
  %308 = vst [vmem:[%s3 + $0x1c] sm:$0xf] %v276
  %309 = vst [vmem:[%s3 + $0x20] sm:$0xf] %v277
  %310 = vst [vmem:[%s3 + $0x24] sm:$0xf] %v278
  %311 = vst [vmem:[%s3 + $0x28] sm:$0xf] %v279
  %312 = vst [vmem:[%s3 + $0x2c] sm:$0xf] %v280
  %313 = vst [vmem:[%s3 + $0x30] sm:$0xf] %v281
  %314 = vst [vmem:[%s3 + $0x34] sm:$0xf] %v282
  %315 = vst [vmem:[%s3 + $0x38] sm:$0xf] %v283
  %316 = vst [vmem:[%s3 + $0x3c] sm:$0xf] %v284
  %317 = vst [vmem:[%s3 + $0x40] sm:$0xf] %v285
  %318 = vst [vmem:[%s3 + $0x44] sm:$0xf] %v286
  %319 = vst [vmem:[%s3 + $0x48] sm:$0xf] %v287
  %320 = vst [vmem:[%s3 + $0x4c] sm:$0xf] %v288
  %321 = vst [vmem:[%s3 + $0x50] sm:$0xf] %v289
  %322 = vst [vmem:[%s3 + $0x54] sm:$0xf] %v290
  %323 = vst [vmem:[%s3 + $0x58] sm:$0xf] %v291
  %324 = vst [vmem:[%s3 + $0x5c] sm:$0xf] %v292
  %325 = vst [vmem:[%s3 + $0x60] sm:$0xf] %v293
  %326 = vst [vmem:[%s3 + $0x64] sm:$0xf] %v294
  %327 = vst [vmem:[%s3 + $0x68] sm:$0xf] %v295
  %328 = vst [vmem:[%s3 + $0x6c] sm:$0xf] %v296
  %329 = vst [vmem:[%s3 + $0x70] sm:$0xf] %v297
  %330 = vst [vmem:[%s3 + $0x74] sm:$0xf] %v298
  %331 = vst [vmem:[%s3 + $0x78] sm:$0xf] %v299
  %332 = vst [vmem:[%s3 + $0x7c] sm:$0xf] %v300
  %v333 = vld [vmem:[%s2] sm:$0xff]
  %v334 = vld [vmem:[%s2 + $0x8] sm:$0xff]
  %v335 = vld [vmem:[%s2 + $0x10] sm:$0xff]
  %v336 = vld [vmem:[%s2 + $0x18] sm:$0xff]
  %v337 = vld [vmem:[%s2 + $0x20] sm:$0xff]
  %v338 = vld [vmem:[%s2 + $0x28] sm:$0xff]
  %v339 = vld [vmem:[%s2 + $0x30] sm:$0xff]
  %v340 = vld [vmem:[%s2 + $0x38] sm:$0xff]
  %v341 = vld [vmem:[%s2 + $0x40] sm:$0xff]
  %v342 = vld [vmem:[%s2 + $0x48] sm:$0xff]
  %v343 = vld [vmem:[%s2 + $0x50] sm:$0xff]
  %v344 = vld [vmem:[%s2 + $0x58] sm:$0xff]
  %v345 = vld [vmem:[%s2 + $0x60] sm:$0xff]
  %v346 = vld [vmem:[%s2 + $0x68] sm:$0xff]
  %v347 = vld [vmem:[%s2 + $0x70] sm:$0xff]
  %v348 = vld [vmem:[%s2 + $0x78] sm:$0xff]
  %v349 = vld [vmem:[%s2 + $0x80] sm:$0xff]
  %v350 = vld [vmem:[%s2 + $0x88] sm:$0xff]
  %v351 = vld [vmem:[%s2 + $0x90] sm:$0xff]
  %v352 = vld [vmem:[%s2 + $0x98] sm:$0xff]
  %v353 = vld [vmem:[%s2 + $0xa0] sm:$0xff]
  %v354 = vld [vmem:[%s2 + $0xa8] sm:$0xff]
  %v355 = vld [vmem:[%s2 + $0xb0] sm:$0xff]
  %v356 = vld [vmem:[%s2 + $0xb8] sm:$0xff]
  %v357 = vld [vmem:[%s2 + $0xc0] sm:$0xff]
  %v358 = vld [vmem:[%s2 + $0xc8] sm:$0xff]
  %v359 = vld [vmem:[%s2 + $0xd0] sm:$0xff]
  %v360 = vld [vmem:[%s2 + $0xd8] sm:$0xff]
  %v361 = vld [vmem:[%s2 + $0xe0] sm:$0xff]
  %v362 = vld [vmem:[%s2 + $0xe8] sm:$0xff]
  %v363 = vld [vmem:[%s2 + $0xf0] sm:$0xff]
  %v364 = vld [vmem:[%s2 + $0xf8] sm:$0xff]
  %v365 = vadd.f32 %v174, %v333
  %v366 = vadd.f32 %v177, %v334
  %v367 = vadd.f32 %v180, %v335
  %v368 = vadd.f32 %v183, %v336
  %v369 = vadd.f32 %v186, %v337
  %v370 = vadd.f32 %v189, %v338
  %v371 = vadd.f32 %v192, %v339
  %v372 = vadd.f32 %v195, %v340
  %v373 = vadd.f32 %v198, %v341
  %v374 = vadd.f32 %v201, %v342
  %v375 = vadd.f32 %v204, %v343
  %v376 = vadd.f32 %v207, %v344
  %v377 = vadd.f32 %v210, %v345
  %v378 = vadd.f32 %v213, %v346
  %v379 = vadd.f32 %v216, %v347
  %v380 = vadd.f32 %v219, %v348
  %v381 = vadd.f32 %v222, %v349
  %v382 = vadd.f32 %v225, %v350
  %v383 = vadd.f32 %v228, %v351
  %v384 = vadd.f32 %v231, %v352
  %v385 = vadd.f32 %v234, %v353
  %v386 = vadd.f32 %v237, %v354
  %v387 = vadd.f32 %v240, %v355
  %v388 = vadd.f32 %v243, %v356
  %v389 = vadd.f32 %v246, %v357
  %v390 = vadd.f32 %v249, %v358
  %v391 = vadd.f32 %v252, %v359
  %v392 = vadd.f32 %v255, %v360
  %v393 = vadd.f32 %v258, %v361
  %v394 = vadd.f32 %v261, %v362
  %v395 = vadd.f32 %v264, %v363
  %v396 = vadd.f32 %v267, %v364
  %397 = vst [vmem:[%s4] sm:$0xff] %v365
  %398 = vst [vmem:[%s4 + $0x8] sm:$0xff] %v366
  %399 = vst [vmem:[%s4 + $0x10] sm:$0xff] %v367
  %400 = vst [vmem:[%s4 + $0x18] sm:$0xff] %v368
  %401 = vst [vmem:[%s4 + $0x20] sm:$0xff] %v369
  %402 = vst [vmem:[%s4 + $0x28] sm:$0xff] %v370
  %403 = vst [vmem:[%s4 + $0x30] sm:$0xff] %v371
  %404 = vst [vmem:[%s4 + $0x38] sm:$0xff] %v372
  %405 = vst [vmem:[%s4 + $0x40] sm:$0xff] %v373
  %406 = vst [vmem:[%s4 + $0x48] sm:$0xff] %v374
  %407 = vst [vmem:[%s4 + $0x50] sm:$0xff] %v375
  %408 = vst [vmem:[%s4 + $0x58] sm:$0xff] %v376
  %409 = vst [vmem:[%s4 + $0x60] sm:$0xff] %v377
  %410 = vst [vmem:[%s4 + $0x68] sm:$0xff] %v378
  %411 = vst [vmem:[%s4 + $0x70] sm:$0xff] %v379
  %412 = vst [vmem:[%s4 + $0x78] sm:$0xff] %v380
  %413 = vst [vmem:[%s4 + $0x80] sm:$0xff] %v381
  %414 = vst [vmem:[%s4 + $0x88] sm:$0xff] %v382
  %415 = vst [vmem:[%s4 + $0x90] sm:$0xff] %v383
  %416 = vst [vmem:[%s4 + $0x98] sm:$0xff] %v384
  %417 = vst [vmem:[%s4 + $0xa0] sm:$0xff] %v385
  %418 = vst [vmem:[%s4 + $0xa8] sm:$0xff] %v386
  %419 = vst [vmem:[%s4 + $0xb0] sm:$0xff] %v387
  %420 = vst [vmem:[%s4 + $0xb8] sm:$0xff] %v388
  %421 = vst [vmem:[%s4 + $0xc0] sm:$0xff] %v389
  %422 = vst [vmem:[%s4 + $0xc8] sm:$0xff] %v390
  %423 = vst [vmem:[%s4 + $0xd0] sm:$0xff] %v391
  %424 = vst [vmem:[%s4 + $0xd8] sm:$0xff] %v392
  %425 = vst [vmem:[%s4 + $0xe0] sm:$0xff] %v393
  %426 = vst [vmem:[%s4 + $0xe8] sm:$0xff] %v394
  %427 = vst [vmem:[%s4 + $0xf0] sm:$0xff] %v395
  %428 = vst [vmem:[%s4 + $0xf8] sm:$0xff] %v396
  // Predicated region
  $region14: #{pem_forward.10} parent=0 // pred_check
    _
  $region15: #{pem_forward.10} parent=0 // pred_check_branch
    %430 = sbr.rel (0) target = $region17
  $region16: #{pem_forward.10} parent=0 // pred_region
    _
  $region17: #{pem_forward.10} parent=0 // pred_fallthru
    _
  // Predicated region
  $region18: #{pem_forward.10} parent=0 // pred_check
    _
  $region19: #{pem_forward.10} parent=0 // pred_check_branch
    %432 = sbr.rel (0) target = $region21
  $region20: #{pem_forward.10} parent=0 // pred_region
    _
  $region21: #{pem_forward.10} parent=0 // pred_fallthru
    _
  // Predicated region
  $region22: #{pem_forward.10} parent=0 // pred_check
    _
  $region23: #{pem_forward.10} parent=0 // pred_check_branch
    %434 = sbr.rel (0) target = $region25
  $region24: #{pem_forward.10} parent=0 // pred_region
    _
  $region25: #{pem_forward.10} parent=0 // pred_fallthru
    _
  // Predicated region
  $region26: #{pem_forward.10} parent=0 // pred_check
    _
  $region27: #{pem_forward.10} parent=0 // pred_check_branch
    %436 = sbr.rel (0) target = $region29
  $region28: #{pem_forward.10} parent=0 // pred_region
    _
  $region29: #{pem_forward.10} parent=0 // pred_fallthru
    _

// kernel: pem_forward.11
$region0: #{pem_forward.11}
  #allocation0 [shape = 'u32[]', space=smem, size = 0x4, offset = 0x4, fixed_abs, tag = 'smem constant byte address 0x4 - core index']
  #allocation1 [shape = 'u32[72,128]{1,0:T(1,128)}', space=vmem, size = 0x9000, scoped, tag = 'internal scratch']
  %s0 = inlined_call_operand.vmem [shape: f32[32,576], index: 0, kind: input, shape index: {}]
  %s1 = inlined_call_operand.vmem [shape: bf16[576,64], index: 1, kind: input, shape index: {}]
  %s2 = inlined_call_operand.vmem [shape: f32[1,64], index: 2, kind: input, shape index: {}]
  %s3 = inlined_call_operand.vmem [shape: f32[32,64], index: 3, kind: output, shape index: {}]
  %s4 = sld [smem:[#allocation0]]
  $region22: #{pem_forward.11} parent=0
    _
  %s6 = ssub.s32 1, %s4
  %s7 = scalar_select 0, %s6, %s4
  // Predicated region
  $region2: #{pem_forward.11} parent=0 // pred_check
    _
  $region3: #{pem_forward.11} parent=0 // pred_check_branch
    %9 = sbr.rel (0) target = $region5
  $region4: #{pem_forward.11} parent=0 // pred_region
    _
  $region5: #{pem_forward.11} parent=0 // pred_fallthru
    _
  // Predicated region
  $region6: #{pem_forward.11} parent=0 // pred_check
    _
  $region7: #{pem_forward.11} parent=0 // pred_check_branch
    %11 = sbr.rel (0) target = $region9
  $region8: #{pem_forward.11} parent=0 // pred_region
    _
  $region9: #{pem_forward.11} parent=0 // pred_fallthru
    _
  // Predicated region
  $region10: #{pem_forward.11} parent=0 // pred_check
    _
  $region11: #{pem_forward.11} parent=0 // pred_check_branch
    %13 = sbr.rel (0) target = $region13
  $region12: #{pem_forward.11} parent=0 // pred_region
    _
  $region13: #{pem_forward.11} parent=0 // pred_fallthru
    _
  %v15 = vld [vmem:[%s0] sm:$0xff]
  %v16 = vld [vmem:[%s0 + $0x8] sm:$0xff]
  %v17 = vld [vmem:[%s0 + $0x10] sm:$0xff]
  %v18 = vld [vmem:[%s0 + $0x18] sm:$0xff]
  %v19 = vld [vmem:[%s0 + $0x20] sm:$0xff]
  %v20 = vld [vmem:[%s0 + $0x28] sm:$0xff]
  %v21 = vld [vmem:[%s0 + $0x30] sm:$0xff]
  %v22 = vld [vmem:[%s0 + $0x38] sm:$0xff]
  %v23 = vld [vmem:[%s0 + $0x40] sm:$0xff]
  %v24 = vld [vmem:[%s0 + $0x48] sm:$0xff]
  %v25 = vld [vmem:[%s0 + $0x50] sm:$0xff]
  %v26 = vld [vmem:[%s0 + $0x58] sm:$0xff]
  %v27 = vld [vmem:[%s0 + $0x60] sm:$0xff]
  %v28 = vld [vmem:[%s0 + $0x68] sm:$0xff]
  %v29 = vld [vmem:[%s0 + $0x70] sm:$0xff]
  %v30 = vld [vmem:[%s0 + $0x78] sm:$0xff]
  %v31 = vld [vmem:[%s0 + $0x80] sm:$0xff]
  %v32 = vld [vmem:[%s0 + $0x88] sm:$0xff]
  %v33 = vld [vmem:[%s0 + $0x90] sm:$0xff]
  %v34 = vld [vmem:[%s0 + $0x98] sm:$0xff]
  %v35 = vpack.c.bf16 %v20, %v15
  %v36 = vpack.c.bf16 %v21, %v16
  %v37 = vpack.c.bf16 %v22, %v17
  %v38 = vpack.c.bf16 %v23, %v18
  %v39 = vpack.c.bf16 %v24, %v19
  %v40 = vpack.c.bf16 %v30, %v25
  %v41 = vpack.c.bf16 %v31, %v26
  %v42 = vpack.c.bf16 %v32, %v27
  %v43 = vpack.c.bf16 %v33, %v28
  %v44 = vpack.c.bf16 %v34, %v29
  %v45 = vld [vmem:[%s1] sm:$0xf]
  %v46 = vld [vmem:[%s1 + $0x4] sm:$0xf]
  %v47 = vld [vmem:[%s1 + $0x8] sm:$0xf]
  %v48 = vld [vmem:[%s1 + $0xc] sm:$0xf]
  %v49 = vld [vmem:[%s1 + $0x10] sm:$0xf]
  %v50 = vld [vmem:[%s1 + $0x14] sm:$0xf]
  %v51 = vld [vmem:[%s1 + $0x18] sm:$0xf]
  %v52 = vld [vmem:[%s1 + $0x1c] sm:$0xf]
  %v53 = vld [vmem:[%s1 + $0x20] sm:$0xf]
  %v54 = vld [vmem:[%s1 + $0x24] sm:$0xf]
  %v55 = vld [vmem:[%s1 + $0x28] sm:$0xf]
  %v56 = vld [vmem:[%s1 + $0x2c] sm:$0xf]
  %v57 = vld [vmem:[%s1 + $0x30] sm:$0xf]
  %v58 = vld [vmem:[%s1 + $0x34] sm:$0xf]
  %v59 = vld [vmem:[%s1 + $0x38] sm:$0xf]
  %v60 = vld [vmem:[%s1 + $0x3c] sm:$0xf]
  %v61 = vld [vmem:[%s1 + $0x40] sm:$0xf]
  %v62 = vld [vmem:[%s1 + $0x44] sm:$0xf]
  %v63 = vld [vmem:[%s1 + $0x48] sm:$0xf]
  %v64 = vld [vmem:[%s1 + $0x4c] sm:$0xf]
  %v65 = vld [vmem:[%s1 + $0x50] sm:$0xf]
  %v66 = vld [vmem:[%s1 + $0x54] sm:$0xf]
  %v67 = vld [vmem:[%s1 + $0x58] sm:$0xf]
  %v68 = vld [vmem:[%s1 + $0x5c] sm:$0xf]
  %v69 = vld [vmem:[%s1 + $0x60] sm:$0xf]
  %v70 = vld [vmem:[%s1 + $0x64] sm:$0xf]
  %v71 = vld [vmem:[%s1 + $0x68] sm:$0xf]
  %v72 = vld [vmem:[%s1 + $0x6c] sm:$0xf]
  %v73 = vld [vmem:[%s1 + $0x70] sm:$0xf]
  %v74 = vld [vmem:[%s1 + $0x74] sm:$0xf]
  %v75 = vld [vmem:[%s1 + $0x78] sm:$0xf]
  %v76 = vld [vmem:[%s1 + $0x7c] sm:$0xf]
  %v77 = vld [vmem:[%s1 + $0x80] sm:$0xf]
  %v78 = vld [vmem:[%s1 + $0x84] sm:$0xf]
  %v79 = vld [vmem:[%s1 + $0x88] sm:$0xf]
  %v80 = vld [vmem:[%s1 + $0x8c] sm:$0xf]
  %v81 = vld [vmem:[%s1 + $0x90] sm:$0xf]
  %v82 = vld [vmem:[%s1 + $0x94] sm:$0xf]
  %v83 = vld [vmem:[%s1 + $0x98] sm:$0xf]
  %v84 = vld [vmem:[%s1 + $0x9c] sm:$0xf]
  %v85 = vld [vmem:[%s1 + $0xa0] sm:$0xf]
  %v86 = vld [vmem:[%s1 + $0xa4] sm:$0xf]
  %v87 = vld [vmem:[%s1 + $0xa8] sm:$0xf]
  %v88 = vld [vmem:[%s1 + $0xac] sm:$0xf]
  %v89 = vld [vmem:[%s1 + $0xb0] sm:$0xf]
  %v90 = vld [vmem:[%s1 + $0xb4] sm:$0xf]
  %v91 = vld [vmem:[%s1 + $0xb8] sm:$0xf]
  %v92 = vld [vmem:[%s1 + $0xbc] sm:$0xf]
  %v93 = vld [vmem:[%s1 + $0xc0] sm:$0xf]
  %v94 = vld [vmem:[%s1 + $0xc4] sm:$0xf]
  %v95 = vld [vmem:[%s1 + $0xc8] sm:$0xf]
  %v96 = vld [vmem:[%s1 + $0xcc] sm:$0xf]
  %v97 = vld [vmem:[%s1 + $0xd0] sm:$0xf]
  %v98 = vld [vmem:[%s1 + $0xd4] sm:$0xf]
  %v99 = vld [vmem:[%s1 + $0xd8] sm:$0xf]
  %v100 = vld [vmem:[%s1 + $0xdc] sm:$0xf]
  %v101 = vld [vmem:[%s1 + $0xe0] sm:$0xf]
  %v102 = vld [vmem:[%s1 + $0xe4] sm:$0xf]
  %v103 = vld [vmem:[%s1 + $0xe8] sm:$0xf]
  %v104 = vld [vmem:[%s1 + $0xec] sm:$0xf]
  %v105 = vld [vmem:[%s1 + $0xf0] sm:$0xf]
  %v106 = vld [vmem:[%s1 + $0xf4] sm:$0xf]
  %v107 = vld [vmem:[%s1 + $0xf8] sm:$0xf]
  %v108 = vld [vmem:[%s1 + $0xfc] sm:$0xf]
  %v109 = vld [vmem:[%s1 + $0x100] sm:$0xf]
  %v110 = vld [vmem:[%s1 + $0x104] sm:$0xf]
  %v111 = vld [vmem:[%s1 + $0x108] sm:$0xf]
  %v112 = vld [vmem:[%s1 + $0x10c] sm:$0xf]
  %v113 = vld [vmem:[%s1 + $0x110] sm:$0xf]
  %v114 = vld [vmem:[%s1 + $0x114] sm:$0xf]
  %v115 = vld [vmem:[%s1 + $0x118] sm:$0xf]
  %v116 = vld [vmem:[%s1 + $0x11c] sm:$0xf]
  %v117 = vld [vmem:[%s2] sm:$0x1]
  %v119 = vperm.slane %v117, 0
  %v193 = vunpack.c.l.b16 %v45
  %v194 = vunpack.c.l.b16 %v46
  %v195 = vunpack.c.l.b16 %v47
  %v196 = vunpack.c.l.b16 %v48
  %v197 = vunpack.c.l.b16 %v49
  %v198 = vunpack.c.l.b16 %v50
  %v199 = vunpack.c.l.b16 %v51
  %v200 = vunpack.c.l.b16 %v52
  %v201 = vunpack.c.l.b16 %v53
  %v202 = vunpack.c.l.b16 %v54
  %v203 = vunpack.c.l.b16 %v55
  %v204 = vunpack.c.l.b16 %v56
  %v205 = vunpack.c.l.b16 %v57
  %v206 = vunpack.c.l.b16 %v58
  %v207 = vunpack.c.l.b16 %v59
  %v208 = vunpack.c.l.b16 %v60
  %v209 = vunpack.c.l.b16 %v61
  %v210 = vunpack.c.l.b16 %v62
  %v211 = vunpack.c.l.b16 %v63
  %v212 = vunpack.c.l.b16 %v64
  %v213 = vunpack.c.l.b16 %v65
  %v214 = vunpack.c.l.b16 %v66
  %v215 = vunpack.c.l.b16 %v67
  %v216 = vunpack.c.l.b16 %v68
  %v217 = vunpack.c.l.b16 %v69
  %v218 = vunpack.c.l.b16 %v70
  %v219 = vunpack.c.l.b16 %v71
  %v220 = vunpack.c.l.b16 %v72
  %v221 = vunpack.c.l.b16 %v73
  %v222 = vunpack.c.l.b16 %v74
  %v223 = vunpack.c.l.b16 %v75
  %v224 = vunpack.c.l.b16 %v76
  %v225 = vunpack.c.l.b16 %v77
  %v226 = vunpack.c.l.b16 %v78
  %v227 = vunpack.c.l.b16 %v79
  %v228 = vunpack.c.l.b16 %v80
  %v229 = vunpack.c.l.b16 %v81
  %v230 = vunpack.c.l.b16 %v82
  %v231 = vunpack.c.l.b16 %v83
  %v232 = vunpack.c.l.b16 %v84
  %v233 = vunpack.c.l.b16 %v85
  %v234 = vunpack.c.l.b16 %v86
  %v235 = vunpack.c.l.b16 %v87
  %v236 = vunpack.c.l.b16 %v88
  %v237 = vunpack.c.l.b16 %v89
  %v238 = vunpack.c.l.b16 %v90
  %v239 = vunpack.c.l.b16 %v91
  %v240 = vunpack.c.l.b16 %v92
  %v241 = vunpack.c.l.b16 %v93
  %v242 = vunpack.c.l.b16 %v94
  %v243 = vunpack.c.l.b16 %v95
  %v244 = vunpack.c.l.b16 %v96
  %v245 = vunpack.c.l.b16 %v97
  %v246 = vunpack.c.l.b16 %v98
  %v247 = vunpack.c.l.b16 %v99
  %v248 = vunpack.c.l.b16 %v100
  %v249 = vunpack.c.l.b16 %v101
  %v250 = vunpack.c.l.b16 %v102
  %v251 = vunpack.c.l.b16 %v103
  %v252 = vunpack.c.l.b16 %v104
  %v253 = vunpack.c.l.b16 %v105
  %v254 = vunpack.c.l.b16 %v106
  %v255 = vunpack.c.l.b16 %v107
  %v256 = vunpack.c.l.b16 %v108
  %v257 = vunpack.c.l.b16 %v109
  %v258 = vunpack.c.l.b16 %v110
  %v259 = vunpack.c.l.b16 %v111
  %v260 = vunpack.c.l.b16 %v112
  %v261 = vunpack.c.l.b16 %v113
  %v262 = vunpack.c.l.b16 %v114
  %v263 = vunpack.c.l.b16 %v115
  %v264 = vunpack.c.l.b16 %v116
  %v265 = vpack.c.b16 %v194, %v193
  %v266 = vpack.c.b16 %v196, %v195
  %v267 = vpack.c.b16 %v198, %v197
  %v268 = vpack.c.b16 %v200, %v199
  %v269 = vpack.c.b16 %v202, %v201
  %v270 = vpack.c.b16 %v204, %v203
  %v271 = vpack.c.b16 %v206, %v205
  %v272 = vpack.c.b16 %v208, %v207
  %v273 = vpack.c.b16 %v210, %v209
  %v274 = vpack.c.b16 %v212, %v211
  %v275 = vpack.c.b16 %v214, %v213
  %v276 = vpack.c.b16 %v216, %v215
  %v277 = vpack.c.b16 %v218, %v217
  %v278 = vpack.c.b16 %v220, %v219
  %v279 = vpack.c.b16 %v222, %v221
  %v280 = vpack.c.b16 %v224, %v223
  %v281 = vpack.c.b16 %v226, %v225
  %v282 = vpack.c.b16 %v228, %v227
  %v283 = vpack.c.b16 %v230, %v229
  %v284 = vpack.c.b16 %v232, %v231
  %v285 = vpack.c.b16 %v234, %v233
  %v286 = vpack.c.b16 %v236, %v235
  %v287 = vpack.c.b16 %v238, %v237
  %v288 = vpack.c.b16 %v240, %v239
  %v289 = vpack.c.b16 %v242, %v241
  %v290 = vpack.c.b16 %v244, %v243
  %v291 = vpack.c.b16 %v246, %v245
  %v292 = vpack.c.b16 %v248, %v247
  %v293 = vpack.c.b16 %v250, %v249
  %v294 = vpack.c.b16 %v252, %v251
  %v295 = vpack.c.b16 %v254, %v253
  %v296 = vpack.c.b16 %v256, %v255
  %v297 = vpack.c.b16 %v258, %v257
  %v298 = vpack.c.b16 %v260, %v259
  %v299 = vpack.c.b16 %v262, %v261
  %v300 = vpack.c.b16 %v264, %v263
  %vm337 = vcmask 523264
  %v339 = vsel %vm337, %v39, 0
  %v342 = vsel %vm337, %v44, 0
  %344 = vmatpush.bf16.msra.mxu0 %v272
  %345 = vmatpush.bf16.msra.mxu0 %v271
  %346 = vmatpush.bf16.msra.mxu0 %v270
  %347 = vmatpush.bf16.msra.mxu0 %v269
  %348 = vmatpush.bf16.msra.mxu0 %v268
  %349 = vmatpush.bf16.msra.mxu0 %v267
  %350 = vmatpush.bf16.msra.mxu0 %v266
  %351 = vmatpush.bf16.msra.mxu0 %v265
  %352 = vmatmul.bf16.gmra.mxu0 %v35
  %v353 = vpop.f32.mrf.mxu0
  %v354 = vadd.f32 %v119, %v353
  %v355 = vpop.f32.mrf.mxu0
  %v356 = vadd.f32 %v119, %v355
  %357 = vmatmul.bf16.gmra.mxu0 %v40
  %v358 = vpop.f32.mrf.mxu0
  %v359 = vadd.f32 %v119, %v358
  %v360 = vpop.f32.mrf.mxu0
  %v361 = vadd.f32 %v119, %v360
  %362 = vdwg.mxu0
  %363 = vmatpush.bf16.msra.mxu0 %v280
  %364 = vmatpush.bf16.msra.mxu0 %v279
  %365 = vmatpush.bf16.msra.mxu0 %v278
  %366 = vmatpush.bf16.msra.mxu0 %v277
  %367 = vmatpush.bf16.msra.mxu0 %v276
  %368 = vmatpush.bf16.msra.mxu0 %v275
  %369 = vmatpush.bf16.msra.mxu0 %v274
  %370 = vmatpush.bf16.msra.mxu0 %v273
  %371 = vmatmul.bf16.gmra.mxu0 %v36
  %v372 = vpop.f32.mrf.mxu0
  %v373 = vadd.f32 %v354, %v372
  %v374 = vpop.f32.mrf.mxu0
  %v375 = vadd.f32 %v356, %v374
  %376 = vmatmul.bf16.gmra.mxu0 %v41
  %v377 = vpop.f32.mrf.mxu0
  %v378 = vadd.f32 %v359, %v377
  %v379 = vpop.f32.mrf.mxu0
  %v380 = vadd.f32 %v361, %v379
  %381 = vdwg.mxu0
  %382 = vmatpush.bf16.msra.mxu0 %v288
  %383 = vmatpush.bf16.msra.mxu0 %v287
  %384 = vmatpush.bf16.msra.mxu0 %v286
  %385 = vmatpush.bf16.msra.mxu0 %v285
  %386 = vmatpush.bf16.msra.mxu0 %v284
  %387 = vmatpush.bf16.msra.mxu0 %v283
  %388 = vmatpush.bf16.msra.mxu0 %v282
  %389 = vmatpush.bf16.msra.mxu0 %v281
  %390 = vmatmul.bf16.gmra.mxu0 %v37
  %v391 = vpop.f32.mrf.mxu0
  %v392 = vadd.f32 %v373, %v391
  %v393 = vpop.f32.mrf.mxu0
  %v394 = vadd.f32 %v375, %v393
  %395 = vmatmul.bf16.gmra.mxu0 %v42
  %v396 = vpop.f32.mrf.mxu0
  %v397 = vadd.f32 %v378, %v396
  %v398 = vpop.f32.mrf.mxu0
  %v399 = vadd.f32 %v380, %v398
  %400 = vdwg.mxu0
  %401 = vmatpush.bf16.msra.mxu0 %v296
  %402 = vmatpush.bf16.msra.mxu0 %v295
  %403 = vmatpush.bf16.msra.mxu0 %v294
  %404 = vmatpush.bf16.msra.mxu0 %v293
  %405 = vmatpush.bf16.msra.mxu0 %v292
  %406 = vmatpush.bf16.msra.mxu0 %v291
  %407 = vmatpush.bf16.msra.mxu0 %v290
  %408 = vmatpush.bf16.msra.mxu0 %v289
  %409 = vmatmul.bf16.gmra.mxu0 %v38
  %v410 = vpop.f32.mrf.mxu0
  %v411 = vadd.f32 %v392, %v410
  %v412 = vpop.f32.mrf.mxu0
  %v413 = vadd.f32 %v394, %v412
  %414 = vmatmul.bf16.gmra.mxu0 %v43
  %v415 = vpop.f32.mrf.mxu0
  %v416 = vadd.f32 %v397, %v415
  %v417 = vpop.f32.mrf.mxu0
  %v418 = vadd.f32 %v399, %v417
  %419 = vdwg.mxu0
  %420 = vmatpush.bf16.msra.mxu0 0
  %421 = vmatpush.bf16.msra.mxu0 0
  %422 = vmatpush.bf16.msra.mxu0 0
  %423 = vmatpush.bf16.msra.mxu0 0
  %424 = vmatpush.bf16.msra.mxu0 %v300
  %425 = vmatpush.bf16.msra.mxu0 %v299
  %426 = vmatpush.bf16.msra.mxu0 %v298
  %427 = vmatpush.bf16.msra.mxu0 %v297
  %428 = vmatmul.bf16.gmra.mxu0 %v339
  %v429 = vpop.f32.mrf.mxu0
  %v430 = vadd.f32 %v411, %v429
  %v431 = vpop.f32.mrf.mxu0
  %v432 = vadd.f32 %v413, %v431
  %433 = vmatmul.bf16.gmra.mxu0 %v342
  %v434 = vpop.f32.mrf.mxu0
  %v435 = vadd.f32 %v416, %v434
  %v436 = vpop.f32.mrf.mxu0
  %v437 = vadd.f32 %v418, %v436
  %438 = vdwg.mxu0
  %439 = vst.msk [vmem:[%s3] sm:$0xff] %vm337, %v430
  %440 = vst.msk [vmem:[%s3 + $0x8] sm:$0xff] %vm337, %v432
  %441 = vst.msk [vmem:[%s3 + $0x10] sm:$0xff] %vm337, %v435
  %442 = vst.msk [vmem:[%s3 + $0x18] sm:$0xff] %vm337, %v437
  // Predicated region
  $region14: #{pem_forward.11} parent=0 // pred_check
    _
  $region15: #{pem_forward.11} parent=0 // pred_check_branch
    %444 = sbr.rel (0) target = $region17
  $region16: #{pem_forward.11} parent=0 // pred_region
    _
  $region17: #{pem_forward.11} parent=0 // pred_fallthru
    _
  // Predicated region
  $region18: #{pem_forward.11} parent=0 // pred_check
    _
  $region19: #{pem_forward.11} parent=0 // pred_check_branch
    %446 = sbr.rel (0) target = $region21
  $region20: #{pem_forward.11} parent=0 // pred_region
    _
  $region21: #{pem_forward.11} parent=0 // pred_fallthru
    _

// kernel: pem_forward.12
$region0: #{pem_forward.12}
  #allocation0 [shape = 'u32[]', space=smem, size = 0x4, offset = 0x4, fixed_abs, tag = 'smem constant byte address 0x4 - core index']
  #allocation1 [shape = 'u32[72,128]{1,0:T(1,128)}', space=vmem, size = 0x9000, scoped, tag = 'internal scratch']
  %s0 = inlined_call_operand.vmem [shape: f32[256,16], index: 0, kind: input, shape index: {}]
  %s1 = inlined_call_operand.vmem [shape: f32[16,128], index: 1, kind: input, shape index: {}]
  %s2 = inlined_call_operand.vmem [shape: f32[256,128], index: 2, kind: input, shape index: {}]
  %s3 = inlined_call_operand.vmem [shape: bf16[256,128], index: 3, kind: output, shape index: {0}]
  %s4 = inlined_call_operand.vmem [shape: f32[256,128], index: 4, kind: output, shape index: {1}]
  %5 = xla_tuple %s3, %s4
  %s6 = sld [smem:[#allocation0]]
  $region30: #{pem_forward.12} parent=0
    _
  %s8 = ssub.s32 1, %s6
  %s9 = scalar_select 0, %s8, %s6
  // Predicated region
  $region2: #{pem_forward.12} parent=0 // pred_check
    _
  $region3: #{pem_forward.12} parent=0 // pred_check_branch
    %11 = sbr.rel (0) target = $region5
  $region4: #{pem_forward.12} parent=0 // pred_region
    _
  $region5: #{pem_forward.12} parent=0 // pred_fallthru
    _
  // Predicated region
  $region6: #{pem_forward.12} parent=0 // pred_check
    _
  $region7: #{pem_forward.12} parent=0 // pred_check_branch
    %13 = sbr.rel (0) target = $region9
  $region8: #{pem_forward.12} parent=0 // pred_region
    _
  $region9: #{pem_forward.12} parent=0 // pred_fallthru
    _
  // Predicated region
  $region10: #{pem_forward.12} parent=0 // pred_check
    _
  $region11: #{pem_forward.12} parent=0 // pred_check_branch
    %15 = sbr.rel (0) target = $region13
  $region12: #{pem_forward.12} parent=0 // pred_region
    _
  $region13: #{pem_forward.12} parent=0 // pred_fallthru
    _
  %v16 = vld [vmem:[%s0] sm:$0xff]
  %v17 = vld [vmem:[%s0 + $0x8] sm:$0xff]
  %v18 = vld [vmem:[%s0 + $0x10] sm:$0xff]
  %v19 = vld [vmem:[%s0 + $0x18] sm:$0xff]
  %v20 = vld [vmem:[%s0 + $0x20] sm:$0xff]
  %v21 = vld [vmem:[%s0 + $0x28] sm:$0xff]
  %v22 = vld [vmem:[%s0 + $0x30] sm:$0xff]
  %v23 = vld [vmem:[%s0 + $0x38] sm:$0xff]
  %v24 = vld [vmem:[%s0 + $0x40] sm:$0xff]
  %v25 = vld [vmem:[%s0 + $0x48] sm:$0xff]
  %v26 = vld [vmem:[%s0 + $0x50] sm:$0xff]
  %v27 = vld [vmem:[%s0 + $0x58] sm:$0xff]
  %v28 = vld [vmem:[%s0 + $0x60] sm:$0xff]
  %v29 = vld [vmem:[%s0 + $0x68] sm:$0xff]
  %v30 = vld [vmem:[%s0 + $0x70] sm:$0xff]
  %v31 = vld [vmem:[%s0 + $0x78] sm:$0xff]
  %v32 = vld [vmem:[%s0 + $0x80] sm:$0xff]
  %v33 = vld [vmem:[%s0 + $0x88] sm:$0xff]
  %v34 = vld [vmem:[%s0 + $0x90] sm:$0xff]
  %v35 = vld [vmem:[%s0 + $0x98] sm:$0xff]
  %v36 = vld [vmem:[%s0 + $0xa0] sm:$0xff]
  %v37 = vld [vmem:[%s0 + $0xa8] sm:$0xff]
  %v38 = vld [vmem:[%s0 + $0xb0] sm:$0xff]
  %v39 = vld [vmem:[%s0 + $0xb8] sm:$0xff]
  %v40 = vld [vmem:[%s0 + $0xc0] sm:$0xff]
  %v41 = vld [vmem:[%s0 + $0xc8] sm:$0xff]
  %v42 = vld [vmem:[%s0 + $0xd0] sm:$0xff]
  %v43 = vld [vmem:[%s0 + $0xd8] sm:$0xff]
  %v44 = vld [vmem:[%s0 + $0xe0] sm:$0xff]
  %v45 = vld [vmem:[%s0 + $0xe8] sm:$0xff]
  %v46 = vld [vmem:[%s0 + $0xf0] sm:$0xff]
  %v47 = vld [vmem:[%s0 + $0xf8] sm:$0xff]
  %v48 = vld [vmem:[%s1] sm:$0xff]
  %v49 = vld [vmem:[%s1 + $0x8] sm:$0xff]
  %vm50 = vcmask 130048
  %v52 = vsel %vm50, %v16, 0
  %v55 = vsel %vm50, %v17, 0
  %v58 = vsel %vm50, %v18, 0
  %v61 = vsel %vm50, %v19, 0
  %v64 = vsel %vm50, %v20, 0
  %v67 = vsel %vm50, %v21, 0
  %v70 = vsel %vm50, %v22, 0
  %v73 = vsel %vm50, %v23, 0
  %v76 = vsel %vm50, %v24, 0
  %v79 = vsel %vm50, %v25, 0
  %v82 = vsel %vm50, %v26, 0
  %v85 = vsel %vm50, %v27, 0
  %v88 = vsel %vm50, %v28, 0
  %v91 = vsel %vm50, %v29, 0
  %v94 = vsel %vm50, %v30, 0
  %v97 = vsel %vm50, %v31, 0
  %v100 = vsel %vm50, %v32, 0
  %v103 = vsel %vm50, %v33, 0
  %v106 = vsel %vm50, %v34, 0
  %v109 = vsel %vm50, %v35, 0
  %v112 = vsel %vm50, %v36, 0
  %v115 = vsel %vm50, %v37, 0
  %v118 = vsel %vm50, %v38, 0
  %v121 = vsel %vm50, %v39, 0
  %v124 = vsel %vm50, %v40, 0
  %v127 = vsel %vm50, %v41, 0
  %v130 = vsel %vm50, %v42, 0
  %v133 = vsel %vm50, %v43, 0
  %v136 = vsel %vm50, %v44, 0
  %v139 = vsel %vm50, %v45, 0
  %v142 = vsel %vm50, %v46, 0
  %v145 = vsel %vm50, %v47, 0
  %147 = vmatpush.msra.mxu0 0.0
  %148 = vmatpush.msra.mxu0 0.0
  %149 = vmatpush.msra.mxu0 0.0
  %150 = vmatpush.msra.mxu0 0.0
  %151 = vmatpush.msra.mxu0 0.0
  %152 = vmatpush.msra.mxu0 0.0
  %153 = vmatpush.msra.mxu0 0.0
  %154 = vmatpush.msra.mxu0 0.0
  %155 = vmatpush.msra.mxu0 0.0
  %156 = vmatpush.msra.mxu0 0.0
  %157 = vmatpush.msra.mxu0 0.0
  %158 = vmatpush.msra.mxu0 0.0
  %159 = vmatpush.msra.mxu0 0.0
  %160 = vmatpush.msra.mxu0 0.0
  %161 = vmatpush.msra.mxu0 %v49
  %162 = vmatpush.msra.mxu0 %v48
  %163 = vmatmul.f32.gmra.mxu0 %v52
  %v164 = vpop.f32.mrf.mxu0
  %v165 = vadd.f32 0.0, %v164
  %166 = vmatmul.f32.gmra.mxu0 %v55
  %v167 = vpop.f32.mrf.mxu0
  %v168 = vadd.f32 0.0, %v167
  %169 = vmatmul.f32.gmra.mxu0 %v58
  %v170 = vpop.f32.mrf.mxu0
  %v171 = vadd.f32 0.0, %v170
  %172 = vmatmul.f32.gmra.mxu0 %v61
  %v173 = vpop.f32.mrf.mxu0
  %v174 = vadd.f32 0.0, %v173
  %175 = vmatmul.f32.gmra.mxu0 %v64
  %v176 = vpop.f32.mrf.mxu0
  %v177 = vadd.f32 0.0, %v176
  %178 = vmatmul.f32.gmra.mxu0 %v67
  %v179 = vpop.f32.mrf.mxu0
  %v180 = vadd.f32 0.0, %v179
  %181 = vmatmul.f32.gmra.mxu0 %v70
  %v182 = vpop.f32.mrf.mxu0
  %v183 = vadd.f32 0.0, %v182
  %184 = vmatmul.f32.gmra.mxu0 %v73
  %v185 = vpop.f32.mrf.mxu0
  %v186 = vadd.f32 0.0, %v185
  %187 = vmatmul.f32.gmra.mxu0 %v76
  %v188 = vpop.f32.mrf.mxu0
  %v189 = vadd.f32 0.0, %v188
  %190 = vmatmul.f32.gmra.mxu0 %v79
  %v191 = vpop.f32.mrf.mxu0
  %v192 = vadd.f32 0.0, %v191
  %193 = vmatmul.f32.gmra.mxu0 %v82
  %v194 = vpop.f32.mrf.mxu0
  %v195 = vadd.f32 0.0, %v194
  %196 = vmatmul.f32.gmra.mxu0 %v85
  %v197 = vpop.f32.mrf.mxu0
  %v198 = vadd.f32 0.0, %v197
  %199 = vmatmul.f32.gmra.mxu0 %v88
  %v200 = vpop.f32.mrf.mxu0
  %v201 = vadd.f32 0.0, %v200
  %202 = vmatmul.f32.gmra.mxu0 %v91
  %v203 = vpop.f32.mrf.mxu0
  %v204 = vadd.f32 0.0, %v203
  %205 = vmatmul.f32.gmra.mxu0 %v94
  %v206 = vpop.f32.mrf.mxu0
  %v207 = vadd.f32 0.0, %v206
  %208 = vmatmul.f32.gmra.mxu0 %v97
  %v209 = vpop.f32.mrf.mxu0
  %v210 = vadd.f32 0.0, %v209
  %211 = vmatmul.f32.gmra.mxu0 %v100
  %v212 = vpop.f32.mrf.mxu0
  %v213 = vadd.f32 0.0, %v212
  %214 = vmatmul.f32.gmra.mxu0 %v103
  %v215 = vpop.f32.mrf.mxu0
  %v216 = vadd.f32 0.0, %v215
  %217 = vmatmul.f32.gmra.mxu0 %v106
  %v218 = vpop.f32.mrf.mxu0
  %v219 = vadd.f32 0.0, %v218
  %220 = vmatmul.f32.gmra.mxu0 %v109
  %v221 = vpop.f32.mrf.mxu0
  %v222 = vadd.f32 0.0, %v221
  %223 = vmatmul.f32.gmra.mxu0 %v112
  %v224 = vpop.f32.mrf.mxu0
  %v225 = vadd.f32 0.0, %v224
  %226 = vmatmul.f32.gmra.mxu0 %v115
  %v227 = vpop.f32.mrf.mxu0
  %v228 = vadd.f32 0.0, %v227
  %229 = vmatmul.f32.gmra.mxu0 %v118
  %v230 = vpop.f32.mrf.mxu0
  %v231 = vadd.f32 0.0, %v230
  %232 = vmatmul.f32.gmra.mxu0 %v121
  %v233 = vpop.f32.mrf.mxu0
  %v234 = vadd.f32 0.0, %v233
  %235 = vmatmul.f32.gmra.mxu0 %v124
  %v236 = vpop.f32.mrf.mxu0
  %v237 = vadd.f32 0.0, %v236
  %238 = vmatmul.f32.gmra.mxu0 %v127
  %v239 = vpop.f32.mrf.mxu0
  %v240 = vadd.f32 0.0, %v239
  %241 = vmatmul.f32.gmra.mxu0 %v130
  %v242 = vpop.f32.mrf.mxu0
  %v243 = vadd.f32 0.0, %v242
  %244 = vmatmul.f32.gmra.mxu0 %v133
  %v245 = vpop.f32.mrf.mxu0
  %v246 = vadd.f32 0.0, %v245
  %247 = vmatmul.f32.gmra.mxu0 %v136
  %v248 = vpop.f32.mrf.mxu0
  %v249 = vadd.f32 0.0, %v248
  %250 = vmatmul.f32.gmra.mxu0 %v139
  %v251 = vpop.f32.mrf.mxu0
  %v252 = vadd.f32 0.0, %v251
  %253 = vmatmul.f32.gmra.mxu0 %v142
  %v254 = vpop.f32.mrf.mxu0
  %v255 = vadd.f32 0.0, %v254
  %256 = vmatmul.f32.gmra.mxu0 %v145
  %v257 = vpop.f32.mrf.mxu0
  %v258 = vadd.f32 0.0, %v257
  %259 = vdwg.mxu0
  %v260 = vpack.c.bf16 %v165, %v165
  %v261 = vpack.c.bf16 %v168, %v168
  %v262 = vpack.c.bf16 %v171, %v171
  %v263 = vpack.c.bf16 %v174, %v174
  %v264 = vpack.c.bf16 %v177, %v177
  %v265 = vpack.c.bf16 %v180, %v180
  %v266 = vpack.c.bf16 %v183, %v183
  %v267 = vpack.c.bf16 %v186, %v186
  %v268 = vpack.c.bf16 %v189, %v189
  %v269 = vpack.c.bf16 %v192, %v192
  %v270 = vpack.c.bf16 %v195, %v195
  %v271 = vpack.c.bf16 %v198, %v198
  %v272 = vpack.c.bf16 %v201, %v201
  %v273 = vpack.c.bf16 %v204, %v204
  %v274 = vpack.c.bf16 %v207, %v207
  %v275 = vpack.c.bf16 %v210, %v210
  %v276 = vpack.c.bf16 %v213, %v213
  %v277 = vpack.c.bf16 %v216, %v216
  %v278 = vpack.c.bf16 %v219, %v219
  %v279 = vpack.c.bf16 %v222, %v222
  %v280 = vpack.c.bf16 %v225, %v225
  %v281 = vpack.c.bf16 %v228, %v228
  %v282 = vpack.c.bf16 %v231, %v231
  %v283 = vpack.c.bf16 %v234, %v234
  %v284 = vpack.c.bf16 %v237, %v237
  %v285 = vpack.c.bf16 %v240, %v240
  %v286 = vpack.c.bf16 %v243, %v243
  %v287 = vpack.c.bf16 %v246, %v246
  %v288 = vpack.c.bf16 %v249, %v249
  %v289 = vpack.c.bf16 %v252, %v252
  %v290 = vpack.c.bf16 %v255, %v255
  %v291 = vpack.c.bf16 %v258, %v258
  %292 = vst [vmem:[%s3] sm:$0xf] %v260
  %293 = vst [vmem:[%s3 + $0x4] sm:$0xf] %v261
  %294 = vst [vmem:[%s3 + $0x8] sm:$0xf] %v262
  %295 = vst [vmem:[%s3 + $0xc] sm:$0xf] %v263
  %296 = vst [vmem:[%s3 + $0x10] sm:$0xf] %v264
  %297 = vst [vmem:[%s3 + $0x14] sm:$0xf] %v265
  %298 = vst [vmem:[%s3 + $0x18] sm:$0xf] %v266
  %299 = vst [vmem:[%s3 + $0x1c] sm:$0xf] %v267
  %300 = vst [vmem:[%s3 + $0x20] sm:$0xf] %v268
  %301 = vst [vmem:[%s3 + $0x24] sm:$0xf] %v269
  %302 = vst [vmem:[%s3 + $0x28] sm:$0xf] %v270
  %303 = vst [vmem:[%s3 + $0x2c] sm:$0xf] %v271
  %304 = vst [vmem:[%s3 + $0x30] sm:$0xf] %v272
  %305 = vst [vmem:[%s3 + $0x34] sm:$0xf] %v273
  %306 = vst [vmem:[%s3 + $0x38] sm:$0xf] %v274
  %307 = vst [vmem:[%s3 + $0x3c] sm:$0xf] %v275
  %308 = vst [vmem:[%s3 + $0x40] sm:$0xf] %v276
  %309 = vst [vmem:[%s3 + $0x44] sm:$0xf] %v277
  %310 = vst [vmem:[%s3 + $0x48] sm:$0xf] %v278
  %311 = vst [vmem:[%s3 + $0x4c] sm:$0xf] %v279
  %312 = vst [vmem:[%s3 + $0x50] sm:$0xf] %v280
  %313 = vst [vmem:[%s3 + $0x54] sm:$0xf] %v281
  %314 = vst [vmem:[%s3 + $0x58] sm:$0xf] %v282
  %315 = vst [vmem:[%s3 + $0x5c] sm:$0xf] %v283
  %316 = vst [vmem:[%s3 + $0x60] sm:$0xf] %v284
  %317 = vst [vmem:[%s3 + $0x64] sm:$0xf] %v285
  %318 = vst [vmem:[%s3 + $0x68] sm:$0xf] %v286
  %319 = vst [vmem:[%s3 + $0x6c] sm:$0xf] %v287
  %320 = vst [vmem:[%s3 + $0x70] sm:$0xf] %v288
  %321 = vst [vmem:[%s3 + $0x74] sm:$0xf] %v289
  %322 = vst [vmem:[%s3 + $0x78] sm:$0xf] %v290
  %323 = vst [vmem:[%s3 + $0x7c] sm:$0xf] %v291
  %v324 = vld [vmem:[%s2] sm:$0xff]
  %v325 = vld [vmem:[%s2 + $0x8] sm:$0xff]
  %v326 = vld [vmem:[%s2 + $0x10] sm:$0xff]
  %v327 = vld [vmem:[%s2 + $0x18] sm:$0xff]
  %v328 = vld [vmem:[%s2 + $0x20] sm:$0xff]
  %v329 = vld [vmem:[%s2 + $0x28] sm:$0xff]
  %v330 = vld [vmem:[%s2 + $0x30] sm:$0xff]
  %v331 = vld [vmem:[%s2 + $0x38] sm:$0xff]
  %v332 = vld [vmem:[%s2 + $0x40] sm:$0xff]
  %v333 = vld [vmem:[%s2 + $0x48] sm:$0xff]
  %v334 = vld [vmem:[%s2 + $0x50] sm:$0xff]
  %v335 = vld [vmem:[%s2 + $0x58] sm:$0xff]
  %v336 = vld [vmem:[%s2 + $0x60] sm:$0xff]
  %v337 = vld [vmem:[%s2 + $0x68] sm:$0xff]
  %v338 = vld [vmem:[%s2 + $0x70] sm:$0xff]
  %v339 = vld [vmem:[%s2 + $0x78] sm:$0xff]
  %v340 = vld [vmem:[%s2 + $0x80] sm:$0xff]
  %v341 = vld [vmem:[%s2 + $0x88] sm:$0xff]
  %v342 = vld [vmem:[%s2 + $0x90] sm:$0xff]
  %v343 = vld [vmem:[%s2 + $0x98] sm:$0xff]
  %v344 = vld [vmem:[%s2 + $0xa0] sm:$0xff]
  %v345 = vld [vmem:[%s2 + $0xa8] sm:$0xff]
  %v346 = vld [vmem:[%s2 + $0xb0] sm:$0xff]
  %v347 = vld [vmem:[%s2 + $0xb8] sm:$0xff]
  %v348 = vld [vmem:[%s2 + $0xc0] sm:$0xff]
  %v349 = vld [vmem:[%s2 + $0xc8] sm:$0xff]
  %v350 = vld [vmem:[%s2 + $0xd0] sm:$0xff]
  %v351 = vld [vmem:[%s2 + $0xd8] sm:$0xff]
  %v352 = vld [vmem:[%s2 + $0xe0] sm:$0xff]
  %v353 = vld [vmem:[%s2 + $0xe8] sm:$0xff]
  %v354 = vld [vmem:[%s2 + $0xf0] sm:$0xff]
  %v355 = vld [vmem:[%s2 + $0xf8] sm:$0xff]
  %v356 = vadd.f32 %v165, %v324
  %v357 = vadd.f32 %v168, %v325
  %v358 = vadd.f32 %v171, %v326
  %v359 = vadd.f32 %v174, %v327
  %v360 = vadd.f32 %v177, %v328
  %v361 = vadd.f32 %v180, %v329
  %v362 = vadd.f32 %v183, %v330
  %v363 = vadd.f32 %v186, %v331
  %v364 = vadd.f32 %v189, %v332
  %v365 = vadd.f32 %v192, %v333
  %v366 = vadd.f32 %v195, %v334
  %v367 = vadd.f32 %v198, %v335
  %v368 = vadd.f32 %v201, %v336
  %v369 = vadd.f32 %v204, %v337
  %v370 = vadd.f32 %v207, %v338
  %v371 = vadd.f32 %v210, %v339
  %v372 = vadd.f32 %v213, %v340
  %v373 = vadd.f32 %v216, %v341
  %v374 = vadd.f32 %v219, %v342
  %v375 = vadd.f32 %v222, %v343
  %v376 = vadd.f32 %v225, %v344
  %v377 = vadd.f32 %v228, %v345
  %v378 = vadd.f32 %v231, %v346
  %v379 = vadd.f32 %v234, %v347
  %v380 = vadd.f32 %v237, %v348
  %v381 = vadd.f32 %v240, %v349
  %v382 = vadd.f32 %v243, %v350
  %v383 = vadd.f32 %v246, %v351
  %v384 = vadd.f32 %v249, %v352
  %v385 = vadd.f32 %v252, %v353
  %v386 = vadd.f32 %v255, %v354
  %v387 = vadd.f32 %v258, %v355
  %388 = vst [vmem:[%s4] sm:$0xff] %v356
  %389 = vst [vmem:[%s4 + $0x8] sm:$0xff] %v357
  %390 = vst [vmem:[%s4 + $0x10] sm:$0xff] %v358
  %391 = vst [vmem:[%s4 + $0x18] sm:$0xff] %v359
  %392 = vst [vmem:[%s4 + $0x20] sm:$0xff] %v360
  %393 = vst [vmem:[%s4 + $0x28] sm:$0xff] %v361
  %394 = vst [vmem:[%s4 + $0x30] sm:$0xff] %v362
  %395 = vst [vmem:[%s4 + $0x38] sm:$0xff] %v363
  %396 = vst [vmem:[%s4 + $0x40] sm:$0xff] %v364
  %397 = vst [vmem:[%s4 + $0x48] sm:$0xff] %v365
  %398 = vst [vmem:[%s4 + $0x50] sm:$0xff] %v366
  %399 = vst [vmem:[%s4 + $0x58] sm:$0xff] %v367
  %400 = vst [vmem:[%s4 + $0x60] sm:$0xff] %v368
  %401 = vst [vmem:[%s4 + $0x68] sm:$0xff] %v369
  %402 = vst [vmem:[%s4 + $0x70] sm:$0xff] %v370
  %403 = vst [vmem:[%s4 + $0x78] sm:$0xff] %v371
  %404 = vst [vmem:[%s4 + $0x80] sm:$0xff] %v372
  %405 = vst [vmem:[%s4 + $0x88] sm:$0xff] %v373
  %406 = vst [vmem:[%s4 + $0x90] sm:$0xff] %v374
  %407 = vst [vmem:[%s4 + $0x98] sm:$0xff] %v375
  %408 = vst [vmem:[%s4 + $0xa0] sm:$0xff] %v376
  %409 = vst [vmem:[%s4 + $0xa8] sm:$0xff] %v377
  %410 = vst [vmem:[%s4 + $0xb0] sm:$0xff] %v378
  %411 = vst [vmem:[%s4 + $0xb8] sm:$0xff] %v379
  %412 = vst [vmem:[%s4 + $0xc0] sm:$0xff] %v380
  %413 = vst [vmem:[%s4 + $0xc8] sm:$0xff] %v381
  %414 = vst [vmem:[%s4 + $0xd0] sm:$0xff] %v382
  %415 = vst [vmem:[%s4 + $0xd8] sm:$0xff] %v383
  %416 = vst [vmem:[%s4 + $0xe0] sm:$0xff] %v384
  %417 = vst [vmem:[%s4 + $0xe8] sm:$0xff] %v385
  %418 = vst [vmem:[%s4 + $0xf0] sm:$0xff] %v386
  %419 = vst [vmem:[%s4 + $0xf8] sm:$0xff] %v387
  // Predicated region
  $region14: #{pem_forward.12} parent=0 // pred_check
    _
  $region15: #{pem_forward.12} parent=0 // pred_check_branch
    %421 = sbr.rel (0) target = $region17
  $region16: #{pem_forward.12} parent=0 // pred_region
    _
  $region17: #{pem_forward.12} parent=0 // pred_fallthru
    _
  // Predicated region
  $region18: #{pem_forward.12} parent=0 // pred_check
    _
  $region19: #{pem_forward.12} parent=0 // pred_check_branch
    %423 = sbr.rel (0) target = $region21
  $region20: #{pem_forward.12} parent=0 // pred_region
    _
  $region21: #{pem_forward.12} parent=0 // pred_fallthru
    _
  // Predicated region
  $region22: #{pem_forward.12} parent=0 // pred_check
    _
  $region23: #{pem_forward.12} parent=0 // pred_check_branch
    %425 = sbr.rel (0) target = $region25
  $region24: #{pem_forward.12} parent=0 // pred_region
    _
  $region25: #{pem_forward.12} parent=0 // pred_fallthru
    _
  // Predicated region
  $region26: #{pem_forward.12} parent=0 // pred_check
    _
  $region27: #{pem_forward.12} parent=0 // pred_check_branch
    %427 = sbr.rel (0) target = $region29
  $region28: #{pem_forward.12} parent=0 // pred_region
    _
  $region29: #{pem_forward.12} parent=0 // pred_fallthru
    _

// kernel: pem_forward.13
$region0: #{pem_forward.13}
  #allocation0 [shape = 'u32[]', space=smem, size = 0x4, offset = 0x4, fixed_abs, tag = 'smem constant byte address 0x4 - core index']
  #allocation1 [shape = 'u32[72,128]{1,0:T(1,128)}', space=vmem, size = 0x9000, scoped, tag = 'internal scratch']
  %s0 = inlined_call_operand.vmem [shape: f32[18,576], index: 0, kind: input, shape index: {}]
  %s1 = inlined_call_operand.vmem [shape: bf16[576,64], index: 1, kind: input, shape index: {}]
  %s2 = inlined_call_operand.vmem [shape: f32[1,64], index: 2, kind: input, shape index: {}]
  %s3 = inlined_call_operand.vmem [shape: f32[18,64], index: 3, kind: output, shape index: {}]
  %s4 = sld [smem:[#allocation0]]
  $region22: #{pem_forward.13} parent=0
    _
  %s6 = ssub.s32 1, %s4
  %s7 = scalar_select 0, %s6, %s4
  // Predicated region
  $region2: #{pem_forward.13} parent=0 // pred_check
    _
  $region3: #{pem_forward.13} parent=0 // pred_check_branch
    %9 = sbr.rel (0) target = $region5
  $region4: #{pem_forward.13} parent=0 // pred_region
    _
  $region5: #{pem_forward.13} parent=0 // pred_fallthru
    _
  // Predicated region
  $region6: #{pem_forward.13} parent=0 // pred_check
    _
  $region7: #{pem_forward.13} parent=0 // pred_check_branch
    %11 = sbr.rel (0) target = $region9
  $region8: #{pem_forward.13} parent=0 // pred_region
    _
  $region9: #{pem_forward.13} parent=0 // pred_fallthru
    _
  // Predicated region
  $region10: #{pem_forward.13} parent=0 // pred_check
    _
  $region11: #{pem_forward.13} parent=0 // pred_check_branch
    %13 = sbr.rel (0) target = $region13
  $region12: #{pem_forward.13} parent=0 // pred_region
    _
  $region13: #{pem_forward.13} parent=0 // pred_fallthru
    _
  %v15 = vld [vmem:[%s0] sm:$0xff]
  %v16 = vld [vmem:[%s0 + $0x8] sm:$0xff]
  %v17 = vld [vmem:[%s0 + $0x10] sm:$0xff]
  %v18 = vld [vmem:[%s0 + $0x18] sm:$0xff]
  %v19 = vld [vmem:[%s0 + $0x20] sm:$0xff]
  %v20 = vld [vmem:[%s0 + $0x28] sm:$0xff]
  %v21 = vld [vmem:[%s0 + $0x30] sm:$0xff]
  %v22 = vld [vmem:[%s0 + $0x38] sm:$0xff]
  %v23 = vld [vmem:[%s0 + $0x40] sm:$0xff]
  %v24 = vld [vmem:[%s0 + $0x48] sm:$0xff]
  %v25 = vld [vmem:[%s0 + $0x50] sm:$0x3]
  %v26 = vld [vmem:[%s0 + $0x58] sm:$0x3]
  %v27 = vld [vmem:[%s0 + $0x60] sm:$0x3]
  %v28 = vld [vmem:[%s0 + $0x68] sm:$0x3]
  %v29 = vld [vmem:[%s0 + $0x70] sm:$0x3]
  %v30 = vpack.c.bf16 %v20, %v15
  %v31 = vpack.c.bf16 %v21, %v16
  %v32 = vpack.c.bf16 %v22, %v17
  %v33 = vpack.c.bf16 %v23, %v18
  %v34 = vpack.c.bf16 %v24, %v19
  %v35 = vpack.c.bf16 %v25, %v25
  %v36 = vpack.c.bf16 %v26, %v26
  %v37 = vpack.c.bf16 %v27, %v27
  %v38 = vpack.c.bf16 %v28, %v28
  %v39 = vpack.c.bf16 %v29, %v29
  %v40 = vld [vmem:[%s1] sm:$0xf]
  %v41 = vld [vmem:[%s1 + $0x4] sm:$0xf]
  %v42 = vld [vmem:[%s1 + $0x8] sm:$0xf]
  %v43 = vld [vmem:[%s1 + $0xc] sm:$0xf]
  %v44 = vld [vmem:[%s1 + $0x10] sm:$0xf]
  %v45 = vld [vmem:[%s1 + $0x14] sm:$0xf]
  %v46 = vld [vmem:[%s1 + $0x18] sm:$0xf]
  %v47 = vld [vmem:[%s1 + $0x1c] sm:$0xf]
  %v48 = vld [vmem:[%s1 + $0x20] sm:$0xf]
  %v49 = vld [vmem:[%s1 + $0x24] sm:$0xf]
  %v50 = vld [vmem:[%s1 + $0x28] sm:$0xf]
  %v51 = vld [vmem:[%s1 + $0x2c] sm:$0xf]
  %v52 = vld [vmem:[%s1 + $0x30] sm:$0xf]
  %v53 = vld [vmem:[%s1 + $0x34] sm:$0xf]
  %v54 = vld [vmem:[%s1 + $0x38] sm:$0xf]
  %v55 = vld [vmem:[%s1 + $0x3c] sm:$0xf]
  %v56 = vld [vmem:[%s1 + $0x40] sm:$0xf]
  %v57 = vld [vmem:[%s1 + $0x44] sm:$0xf]
  %v58 = vld [vmem:[%s1 + $0x48] sm:$0xf]
  %v59 = vld [vmem:[%s1 + $0x4c] sm:$0xf]
  %v60 = vld [vmem:[%s1 + $0x50] sm:$0xf]
  %v61 = vld [vmem:[%s1 + $0x54] sm:$0xf]
  %v62 = vld [vmem:[%s1 + $0x58] sm:$0xf]
  %v63 = vld [vmem:[%s1 + $0x5c] sm:$0xf]
  %v64 = vld [vmem:[%s1 + $0x60] sm:$0xf]
  %v65 = vld [vmem:[%s1 + $0x64] sm:$0xf]
  %v66 = vld [vmem:[%s1 + $0x68] sm:$0xf]
  %v67 = vld [vmem:[%s1 + $0x6c] sm:$0xf]
  %v68 = vld [vmem:[%s1 + $0x70] sm:$0xf]
  %v69 = vld [vmem:[%s1 + $0x74] sm:$0xf]
  %v70 = vld [vmem:[%s1 + $0x78] sm:$0xf]
  %v71 = vld [vmem:[%s1 + $0x7c] sm:$0xf]
  %v72 = vld [vmem:[%s1 + $0x80] sm:$0xf]
  %v73 = vld [vmem:[%s1 + $0x84] sm:$0xf]
  %v74 = vld [vmem:[%s1 + $0x88] sm:$0xf]
  %v75 = vld [vmem:[%s1 + $0x8c] sm:$0xf]
  %v76 = vld [vmem:[%s1 + $0x90] sm:$0xf]
  %v77 = vld [vmem:[%s1 + $0x94] sm:$0xf]
  %v78 = vld [vmem:[%s1 + $0x98] sm:$0xf]
  %v79 = vld [vmem:[%s1 + $0x9c] sm:$0xf]
  %v80 = vld [vmem:[%s1 + $0xa0] sm:$0xf]
  %v81 = vld [vmem:[%s1 + $0xa4] sm:$0xf]
  %v82 = vld [vmem:[%s1 + $0xa8] sm:$0xf]
  %v83 = vld [vmem:[%s1 + $0xac] sm:$0xf]
  %v84 = vld [vmem:[%s1 + $0xb0] sm:$0xf]
  %v85 = vld [vmem:[%s1 + $0xb4] sm:$0xf]
  %v86 = vld [vmem:[%s1 + $0xb8] sm:$0xf]
  %v87 = vld [vmem:[%s1 + $0xbc] sm:$0xf]
  %v88 = vld [vmem:[%s1 + $0xc0] sm:$0xf]
  %v89 = vld [vmem:[%s1 + $0xc4] sm:$0xf]
  %v90 = vld [vmem:[%s1 + $0xc8] sm:$0xf]
  %v91 = vld [vmem:[%s1 + $0xcc] sm:$0xf]
  %v92 = vld [vmem:[%s1 + $0xd0] sm:$0xf]
  %v93 = vld [vmem:[%s1 + $0xd4] sm:$0xf]
  %v94 = vld [vmem:[%s1 + $0xd8] sm:$0xf]
  %v95 = vld [vmem:[%s1 + $0xdc] sm:$0xf]
  %v96 = vld [vmem:[%s1 + $0xe0] sm:$0xf]
  %v97 = vld [vmem:[%s1 + $0xe4] sm:$0xf]
  %v98 = vld [vmem:[%s1 + $0xe8] sm:$0xf]
  %v99 = vld [vmem:[%s1 + $0xec] sm:$0xf]
  %v100 = vld [vmem:[%s1 + $0xf0] sm:$0xf]
  %v101 = vld [vmem:[%s1 + $0xf4] sm:$0xf]
  %v102 = vld [vmem:[%s1 + $0xf8] sm:$0xf]
  %v103 = vld [vmem:[%s1 + $0xfc] sm:$0xf]
  %v104 = vld [vmem:[%s1 + $0x100] sm:$0xf]
  %v105 = vld [vmem:[%s1 + $0x104] sm:$0xf]
  %v106 = vld [vmem:[%s1 + $0x108] sm:$0xf]
  %v107 = vld [vmem:[%s1 + $0x10c] sm:$0xf]
  %v108 = vld [vmem:[%s1 + $0x110] sm:$0xf]
  %v109 = vld [vmem:[%s1 + $0x114] sm:$0xf]
  %v110 = vld [vmem:[%s1 + $0x118] sm:$0xf]
  %v111 = vld [vmem:[%s1 + $0x11c] sm:$0xf]
  %v112 = vld [vmem:[%s2] sm:$0x1]
  %v114 = vperm.slane %v112, 0
  %v188 = vunpack.c.l.b16 %v40
  %v189 = vunpack.c.l.b16 %v41
  %v190 = vunpack.c.l.b16 %v42
  %v191 = vunpack.c.l.b16 %v43
  %v192 = vunpack.c.l.b16 %v44
  %v193 = vunpack.c.l.b16 %v45
  %v194 = vunpack.c.l.b16 %v46
  %v195 = vunpack.c.l.b16 %v47
  %v196 = vunpack.c.l.b16 %v48
  %v197 = vunpack.c.l.b16 %v49
  %v198 = vunpack.c.l.b16 %v50
  %v199 = vunpack.c.l.b16 %v51
  %v200 = vunpack.c.l.b16 %v52
  %v201 = vunpack.c.l.b16 %v53
  %v202 = vunpack.c.l.b16 %v54
  %v203 = vunpack.c.l.b16 %v55
  %v204 = vunpack.c.l.b16 %v56
  %v205 = vunpack.c.l.b16 %v57
  %v206 = vunpack.c.l.b16 %v58
  %v207 = vunpack.c.l.b16 %v59
  %v208 = vunpack.c.l.b16 %v60
  %v209 = vunpack.c.l.b16 %v61
  %v210 = vunpack.c.l.b16 %v62
  %v211 = vunpack.c.l.b16 %v63
  %v212 = vunpack.c.l.b16 %v64
  %v213 = vunpack.c.l.b16 %v65
  %v214 = vunpack.c.l.b16 %v66
  %v215 = vunpack.c.l.b16 %v67
  %v216 = vunpack.c.l.b16 %v68
  %v217 = vunpack.c.l.b16 %v69
  %v218 = vunpack.c.l.b16 %v70
  %v219 = vunpack.c.l.b16 %v71
  %v220 = vunpack.c.l.b16 %v72
  %v221 = vunpack.c.l.b16 %v73
  %v222 = vunpack.c.l.b16 %v74
  %v223 = vunpack.c.l.b16 %v75
  %v224 = vunpack.c.l.b16 %v76
  %v225 = vunpack.c.l.b16 %v77
  %v226 = vunpack.c.l.b16 %v78
  %v227 = vunpack.c.l.b16 %v79
  %v228 = vunpack.c.l.b16 %v80
  %v229 = vunpack.c.l.b16 %v81
  %v230 = vunpack.c.l.b16 %v82
  %v231 = vunpack.c.l.b16 %v83
  %v232 = vunpack.c.l.b16 %v84
  %v233 = vunpack.c.l.b16 %v85
  %v234 = vunpack.c.l.b16 %v86
  %v235 = vunpack.c.l.b16 %v87
  %v236 = vunpack.c.l.b16 %v88
  %v237 = vunpack.c.l.b16 %v89
  %v238 = vunpack.c.l.b16 %v90
  %v239 = vunpack.c.l.b16 %v91
  %v240 = vunpack.c.l.b16 %v92
  %v241 = vunpack.c.l.b16 %v93
  %v242 = vunpack.c.l.b16 %v94
  %v243 = vunpack.c.l.b16 %v95
  %v244 = vunpack.c.l.b16 %v96
  %v245 = vunpack.c.l.b16 %v97
  %v246 = vunpack.c.l.b16 %v98
  %v247 = vunpack.c.l.b16 %v99
  %v248 = vunpack.c.l.b16 %v100
  %v249 = vunpack.c.l.b16 %v101
  %v250 = vunpack.c.l.b16 %v102
  %v251 = vunpack.c.l.b16 %v103
  %v252 = vunpack.c.l.b16 %v104
  %v253 = vunpack.c.l.b16 %v105
  %v254 = vunpack.c.l.b16 %v106
  %v255 = vunpack.c.l.b16 %v107
  %v256 = vunpack.c.l.b16 %v108
  %v257 = vunpack.c.l.b16 %v109
  %v258 = vunpack.c.l.b16 %v110
  %v259 = vunpack.c.l.b16 %v111
  %v260 = vpack.c.b16 %v189, %v188
  %v261 = vpack.c.b16 %v191, %v190
  %v262 = vpack.c.b16 %v193, %v192
  %v263 = vpack.c.b16 %v195, %v194
  %v264 = vpack.c.b16 %v197, %v196
  %v265 = vpack.c.b16 %v199, %v198
  %v266 = vpack.c.b16 %v201, %v200
  %v267 = vpack.c.b16 %v203, %v202
  %v268 = vpack.c.b16 %v205, %v204
  %v269 = vpack.c.b16 %v207, %v206
  %v270 = vpack.c.b16 %v209, %v208
  %v271 = vpack.c.b16 %v211, %v210
  %v272 = vpack.c.b16 %v213, %v212
  %v273 = vpack.c.b16 %v215, %v214
  %v274 = vpack.c.b16 %v217, %v216
  %v275 = vpack.c.b16 %v219, %v218
  %v276 = vpack.c.b16 %v221, %v220
  %v277 = vpack.c.b16 %v223, %v222
  %v278 = vpack.c.b16 %v225, %v224
  %v279 = vpack.c.b16 %v227, %v226
  %v280 = vpack.c.b16 %v229, %v228
  %v281 = vpack.c.b16 %v231, %v230
  %v282 = vpack.c.b16 %v233, %v232
  %v283 = vpack.c.b16 %v235, %v234
  %v284 = vpack.c.b16 %v237, %v236
  %v285 = vpack.c.b16 %v239, %v238
  %v286 = vpack.c.b16 %v241, %v240
  %v287 = vpack.c.b16 %v243, %v242
  %v288 = vpack.c.b16 %v245, %v244
  %v289 = vpack.c.b16 %v247, %v246
  %v290 = vpack.c.b16 %v249, %v248
  %v291 = vpack.c.b16 %v251, %v250
  %v292 = vpack.c.b16 %v253, %v252
  %v293 = vpack.c.b16 %v255, %v254
  %v294 = vpack.c.b16 %v257, %v256
  %v295 = vpack.c.b16 %v259, %v258
  %vm332 = vcmask 523264
  %v334 = vsel %vm332, %v34, 0
  %v337 = vsel %vm332, %v39, 0
  %339 = vmatpush.bf16.msra.mxu0 %v267
  %340 = vmatpush.bf16.msra.mxu0 %v266
  %341 = vmatpush.bf16.msra.mxu0 %v265
  %342 = vmatpush.bf16.msra.mxu0 %v264
  %343 = vmatpush.bf16.msra.mxu0 %v263
  %344 = vmatpush.bf16.msra.mxu0 %v262
  %345 = vmatpush.bf16.msra.mxu0 %v261
  %346 = vmatpush.bf16.msra.mxu0 %v260
  %347 = vmatmul.bf16.gmra.mxu0 %v30
  %v348 = vpop.f32.mrf.mxu0
  %v349 = vadd.f32 %v114, %v348
  %v350 = vpop.f32.mrf.mxu0
  %v351 = vadd.f32 %v114, %v350
  %352 = vmatmul.bf16.gmra.mxu0 %v35
  %v353 = vpop.f32.mrf.mxu0
  %v354 = vadd.f32 %v114, %v353
  %v355 = vpop.f32.mrf.mxu0
  %356 = vdwg.mxu0
  %357 = vmatpush.bf16.msra.mxu0 %v275
  %358 = vmatpush.bf16.msra.mxu0 %v274
  %359 = vmatpush.bf16.msra.mxu0 %v273
  %360 = vmatpush.bf16.msra.mxu0 %v272
  %361 = vmatpush.bf16.msra.mxu0 %v271
  %362 = vmatpush.bf16.msra.mxu0 %v270
  %363 = vmatpush.bf16.msra.mxu0 %v269
  %364 = vmatpush.bf16.msra.mxu0 %v268
  %365 = vmatmul.bf16.gmra.mxu0 %v31
  %v366 = vpop.f32.mrf.mxu0
  %v367 = vadd.f32 %v349, %v366
  %v368 = vpop.f32.mrf.mxu0
  %v369 = vadd.f32 %v351, %v368
  %370 = vmatmul.bf16.gmra.mxu0 %v36
  %v371 = vpop.f32.mrf.mxu0
  %v372 = vadd.f32 %v354, %v371
  %v373 = vpop.f32.mrf.mxu0
  %374 = vdwg.mxu0
  %375 = vmatpush.bf16.msra.mxu0 %v283
  %376 = vmatpush.bf16.msra.mxu0 %v282
  %377 = vmatpush.bf16.msra.mxu0 %v281
  %378 = vmatpush.bf16.msra.mxu0 %v280
  %379 = vmatpush.bf16.msra.mxu0 %v279
  %380 = vmatpush.bf16.msra.mxu0 %v278
  %381 = vmatpush.bf16.msra.mxu0 %v277
  %382 = vmatpush.bf16.msra.mxu0 %v276
  %383 = vmatmul.bf16.gmra.mxu0 %v32
  %v384 = vpop.f32.mrf.mxu0
  %v385 = vadd.f32 %v367, %v384
  %v386 = vpop.f32.mrf.mxu0
  %v387 = vadd.f32 %v369, %v386
  %388 = vmatmul.bf16.gmra.mxu0 %v37
  %v389 = vpop.f32.mrf.mxu0
  %v390 = vadd.f32 %v372, %v389
  %v391 = vpop.f32.mrf.mxu0
  %392 = vdwg.mxu0
  %393 = vmatpush.bf16.msra.mxu0 %v291
  %394 = vmatpush.bf16.msra.mxu0 %v290
  %395 = vmatpush.bf16.msra.mxu0 %v289
  %396 = vmatpush.bf16.msra.mxu0 %v288
  %397 = vmatpush.bf16.msra.mxu0 %v287
  %398 = vmatpush.bf16.msra.mxu0 %v286
  %399 = vmatpush.bf16.msra.mxu0 %v285
  %400 = vmatpush.bf16.msra.mxu0 %v284
  %401 = vmatmul.bf16.gmra.mxu0 %v33
  %v402 = vpop.f32.mrf.mxu0
  %v403 = vadd.f32 %v385, %v402
  %v404 = vpop.f32.mrf.mxu0
  %v405 = vadd.f32 %v387, %v404
  %406 = vmatmul.bf16.gmra.mxu0 %v38
  %v407 = vpop.f32.mrf.mxu0
  %v408 = vadd.f32 %v390, %v407
  %v409 = vpop.f32.mrf.mxu0
  %410 = vdwg.mxu0
  %411 = vmatpush.bf16.msra.mxu0 0
  %412 = vmatpush.bf16.msra.mxu0 0
  %413 = vmatpush.bf16.msra.mxu0 0
  %414 = vmatpush.bf16.msra.mxu0 0
  %415 = vmatpush.bf16.msra.mxu0 %v295
  %416 = vmatpush.bf16.msra.mxu0 %v294
  %417 = vmatpush.bf16.msra.mxu0 %v293
  %418 = vmatpush.bf16.msra.mxu0 %v292
  %419 = vmatmul.bf16.gmra.mxu0 %v334
  %v420 = vpop.f32.mrf.mxu0
  %v421 = vadd.f32 %v403, %v420
  %v422 = vpop.f32.mrf.mxu0
  %v423 = vadd.f32 %v405, %v422
  %424 = vmatmul.bf16.gmra.mxu0 %v337
  %v425 = vpop.f32.mrf.mxu0
  %v426 = vadd.f32 %v408, %v425
  %v427 = vpop.f32.mrf.mxu0
  %428 = vdwg.mxu0
  %429 = vst.msk [vmem:[%s3] sm:$0xff] %vm332, %v421
  %430 = vst.msk [vmem:[%s3 + $0x8] sm:$0xff] %vm332, %v423
  %vm431 = vcmask 517120
  %432 = vst.msk [vmem:[%s3 + $0x10] sm:$0x3] %vm431, %v426
  // Predicated region
  $region14: #{pem_forward.13} parent=0 // pred_check
    _
  $region15: #{pem_forward.13} parent=0 // pred_check_branch
    %434 = sbr.rel (0) target = $region17
  $region16: #{pem_forward.13} parent=0 // pred_region
    _
  $region17: #{pem_forward.13} parent=0 // pred_fallthru
    _
  // Predicated region
  $region18: #{pem_forward.13} parent=0 // pred_check
    _
  $region19: #{pem_forward.13} parent=0 // pred_check_branch
    %436 = sbr.rel (0) target = $region21
  $region20: #{pem_forward.13} parent=0 // pred_region
    _
  $region21: #{pem_forward.13} parent=0 // pred_fallthru
    _

// kernel: pem_forward.14
$region0: #{pem_forward.14}
  #allocation0 [shape = 'u32[]', space=smem, size = 0x4, offset = 0x4, fixed_abs, tag = 'smem constant byte address 0x4 - core index']
  #allocation1 [shape = 'u32[72,128]{1,0:T(1,128)}', space=vmem, size = 0x9000, scoped, tag = 'internal scratch']
  %s0 = inlined_call_operand.vmem [shape: f32[256,9], index: 0, kind: input, shape index: {}]
  %s1 = inlined_call_operand.vmem [shape: f32[9,128], index: 1, kind: input, shape index: {}]
  %s2 = inlined_call_operand.vmem [shape: bf16[256,128], index: 2, kind: output, shape index: {}]
  %s3 = sld [smem:[#allocation0]]
  $region18: #{pem_forward.14} parent=0
    _
  %s5 = ssub.s32 1, %s3
  %s6 = scalar_select 0, %s5, %s3
  // Predicated region
  $region2: #{pem_forward.14} parent=0 // pred_check
    _
  $region3: #{pem_forward.14} parent=0 // pred_check_branch
    %8 = sbr.rel (0) target = $region5
  $region4: #{pem_forward.14} parent=0 // pred_region
    _
  $region5: #{pem_forward.14} parent=0 // pred_fallthru
    _
  // Predicated region
  $region6: #{pem_forward.14} parent=0 // pred_check
    _
  $region7: #{pem_forward.14} parent=0 // pred_check_branch
    %10 = sbr.rel (0) target = $region9
  $region8: #{pem_forward.14} parent=0 // pred_region
    _
  $region9: #{pem_forward.14} parent=0 // pred_fallthru
    _
  %v11 = vld [vmem:[%s0] sm:$0xff]
  %v12 = vld [vmem:[%s0 + $0x8] sm:$0xff]
  %v13 = vld [vmem:[%s0 + $0x10] sm:$0xff]
  %v14 = vld [vmem:[%s0 + $0x18] sm:$0xff]
  %v15 = vld [vmem:[%s0 + $0x20] sm:$0xff]
  %v16 = vld [vmem:[%s0 + $0x28] sm:$0xff]
  %v17 = vld [vmem:[%s0 + $0x30] sm:$0xff]
  %v18 = vld [vmem:[%s0 + $0x38] sm:$0xff]
  %v19 = vld [vmem:[%s0 + $0x40] sm:$0xff]
  %v20 = vld [vmem:[%s0 + $0x48] sm:$0xff]
  %v21 = vld [vmem:[%s0 + $0x50] sm:$0xff]
  %v22 = vld [vmem:[%s0 + $0x58] sm:$0xff]
  %v23 = vld [vmem:[%s0 + $0x60] sm:$0xff]
  %v24 = vld [vmem:[%s0 + $0x68] sm:$0xff]
  %v25 = vld [vmem:[%s0 + $0x70] sm:$0xff]
  %v26 = vld [vmem:[%s0 + $0x78] sm:$0xff]
  %v27 = vld [vmem:[%s0 + $0x80] sm:$0xff]
  %v28 = vld [vmem:[%s0 + $0x88] sm:$0xff]
  %v29 = vld [vmem:[%s0 + $0x90] sm:$0xff]
  %v30 = vld [vmem:[%s0 + $0x98] sm:$0xff]
  %v31 = vld [vmem:[%s0 + $0xa0] sm:$0xff]
  %v32 = vld [vmem:[%s0 + $0xa8] sm:$0xff]
  %v33 = vld [vmem:[%s0 + $0xb0] sm:$0xff]
  %v34 = vld [vmem:[%s0 + $0xb8] sm:$0xff]
  %v35 = vld [vmem:[%s0 + $0xc0] sm:$0xff]
  %v36 = vld [vmem:[%s0 + $0xc8] sm:$0xff]
  %v37 = vld [vmem:[%s0 + $0xd0] sm:$0xff]
  %v38 = vld [vmem:[%s0 + $0xd8] sm:$0xff]
  %v39 = vld [vmem:[%s0 + $0xe0] sm:$0xff]
  %v40 = vld [vmem:[%s0 + $0xe8] sm:$0xff]
  %v41 = vld [vmem:[%s0 + $0xf0] sm:$0xff]
  %v42 = vld [vmem:[%s0 + $0xf8] sm:$0xff]
  %v43 = vld [vmem:[%s1] sm:$0xff]
  %v44 = vld [vmem:[%s1 + $0x8] sm:$0x1]
  %vm45 = vcmask 72704
  %v47 = vsel %vm45, %v11, 0
  %v50 = vsel %vm45, %v12, 0
  %v53 = vsel %vm45, %v13, 0
  %v56 = vsel %vm45, %v14, 0
  %v59 = vsel %vm45, %v15, 0
  %v62 = vsel %vm45, %v16, 0
  %v65 = vsel %vm45, %v17, 0
  %v68 = vsel %vm45, %v18, 0
  %v71 = vsel %vm45, %v19, 0
  %v74 = vsel %vm45, %v20, 0
  %v77 = vsel %vm45, %v21, 0
  %v80 = vsel %vm45, %v22, 0
  %v83 = vsel %vm45, %v23, 0
  %v86 = vsel %vm45, %v24, 0
  %v89 = vsel %vm45, %v25, 0
  %v92 = vsel %vm45, %v26, 0
  %v95 = vsel %vm45, %v27, 0
  %v98 = vsel %vm45, %v28, 0
  %v101 = vsel %vm45, %v29, 0
  %v104 = vsel %vm45, %v30, 0
  %v107 = vsel %vm45, %v31, 0
  %v110 = vsel %vm45, %v32, 0
  %v113 = vsel %vm45, %v33, 0
  %v116 = vsel %vm45, %v34, 0
  %v119 = vsel %vm45, %v35, 0
  %v122 = vsel %vm45, %v36, 0
  %v125 = vsel %vm45, %v37, 0
  %v128 = vsel %vm45, %v38, 0
  %v131 = vsel %vm45, %v39, 0
  %v134 = vsel %vm45, %v40, 0
  %v137 = vsel %vm45, %v41, 0
  %v140 = vsel %vm45, %v42, 0
  %vm142 = vcmask 1040384
  %v144 = vsel %vm142, %v44, 0
  %146 = vmatpush.msra.mxu0 0.0
  %147 = vmatpush.msra.mxu0 0.0
  %148 = vmatpush.msra.mxu0 0.0
  %149 = vmatpush.msra.mxu0 0.0
  %150 = vmatpush.msra.mxu0 0.0
  %151 = vmatpush.msra.mxu0 0.0
  %152 = vmatpush.msra.mxu0 0.0
  %153 = vmatpush.msra.mxu0 0.0
  %154 = vmatpush.msra.mxu0 0.0
  %155 = vmatpush.msra.mxu0 0.0
  %156 = vmatpush.msra.mxu0 0.0
  %157 = vmatpush.msra.mxu0 0.0
  %158 = vmatpush.msra.mxu0 0.0
  %159 = vmatpush.msra.mxu0 0.0
  %160 = vmatpush.msra.mxu0 %v144
  %161 = vmatpush.msra.mxu0 %v43
  %162 = vmatmul.f32.gmra.mxu0 %v47
  %v163 = vpop.f32.mrf.mxu0
  %v164 = vadd.f32 0.0, %v163
  %165 = vmatmul.f32.gmra.mxu0 %v50
  %v166 = vpop.f32.mrf.mxu0
  %v167 = vadd.f32 0.0, %v166
  %168 = vmatmul.f32.gmra.mxu0 %v53
  %v169 = vpop.f32.mrf.mxu0
  %v170 = vadd.f32 0.0, %v169
  %171 = vmatmul.f32.gmra.mxu0 %v56
  %v172 = vpop.f32.mrf.mxu0
  %v173 = vadd.f32 0.0, %v172
  %174 = vmatmul.f32.gmra.mxu0 %v59
  %v175 = vpop.f32.mrf.mxu0
  %v176 = vadd.f32 0.0, %v175
  %177 = vmatmul.f32.gmra.mxu0 %v62
  %v178 = vpop.f32.mrf.mxu0
  %v179 = vadd.f32 0.0, %v178
  %180 = vmatmul.f32.gmra.mxu0 %v65
  %v181 = vpop.f32.mrf.mxu0
  %v182 = vadd.f32 0.0, %v181
  %183 = vmatmul.f32.gmra.mxu0 %v68
  %v184 = vpop.f32.mrf.mxu0
  %v185 = vadd.f32 0.0, %v184
  %186 = vmatmul.f32.gmra.mxu0 %v71
  %v187 = vpop.f32.mrf.mxu0
  %v188 = vadd.f32 0.0, %v187
  %189 = vmatmul.f32.gmra.mxu0 %v74
  %v190 = vpop.f32.mrf.mxu0
  %v191 = vadd.f32 0.0, %v190
  %192 = vmatmul.f32.gmra.mxu0 %v77
  %v193 = vpop.f32.mrf.mxu0
  %v194 = vadd.f32 0.0, %v193
  %195 = vmatmul.f32.gmra.mxu0 %v80
  %v196 = vpop.f32.mrf.mxu0
  %v197 = vadd.f32 0.0, %v196
  %198 = vmatmul.f32.gmra.mxu0 %v83
  %v199 = vpop.f32.mrf.mxu0
  %v200 = vadd.f32 0.0, %v199
  %201 = vmatmul.f32.gmra.mxu0 %v86
  %v202 = vpop.f32.mrf.mxu0
  %v203 = vadd.f32 0.0, %v202
  %204 = vmatmul.f32.gmra.mxu0 %v89
  %v205 = vpop.f32.mrf.mxu0
  %v206 = vadd.f32 0.0, %v205
  %207 = vmatmul.f32.gmra.mxu0 %v92
  %v208 = vpop.f32.mrf.mxu0
  %v209 = vadd.f32 0.0, %v208
  %210 = vmatmul.f32.gmra.mxu0 %v95
  %v211 = vpop.f32.mrf.mxu0
  %v212 = vadd.f32 0.0, %v211
  %213 = vmatmul.f32.gmra.mxu0 %v98
  %v214 = vpop.f32.mrf.mxu0
  %v215 = vadd.f32 0.0, %v214
  %216 = vmatmul.f32.gmra.mxu0 %v101
  %v217 = vpop.f32.mrf.mxu0
  %v218 = vadd.f32 0.0, %v217
  %219 = vmatmul.f32.gmra.mxu0 %v104
  %v220 = vpop.f32.mrf.mxu0
  %v221 = vadd.f32 0.0, %v220
  %222 = vmatmul.f32.gmra.mxu0 %v107
  %v223 = vpop.f32.mrf.mxu0
  %v224 = vadd.f32 0.0, %v223
  %225 = vmatmul.f32.gmra.mxu0 %v110
  %v226 = vpop.f32.mrf.mxu0
  %v227 = vadd.f32 0.0, %v226
  %228 = vmatmul.f32.gmra.mxu0 %v113
  %v229 = vpop.f32.mrf.mxu0
  %v230 = vadd.f32 0.0, %v229
  %231 = vmatmul.f32.gmra.mxu0 %v116
  %v232 = vpop.f32.mrf.mxu0
  %v233 = vadd.f32 0.0, %v232
  %234 = vmatmul.f32.gmra.mxu0 %v119
  %v235 = vpop.f32.mrf.mxu0
  %v236 = vadd.f32 0.0, %v235
  %237 = vmatmul.f32.gmra.mxu0 %v122
  %v238 = vpop.f32.mrf.mxu0
  %v239 = vadd.f32 0.0, %v238
  %240 = vmatmul.f32.gmra.mxu0 %v125
  %v241 = vpop.f32.mrf.mxu0
  %v242 = vadd.f32 0.0, %v241
  %243 = vmatmul.f32.gmra.mxu0 %v128
  %v244 = vpop.f32.mrf.mxu0
  %v245 = vadd.f32 0.0, %v244
  %246 = vmatmul.f32.gmra.mxu0 %v131
  %v247 = vpop.f32.mrf.mxu0
  %v248 = vadd.f32 0.0, %v247
  %249 = vmatmul.f32.gmra.mxu0 %v134
  %v250 = vpop.f32.mrf.mxu0
  %v251 = vadd.f32 0.0, %v250
  %252 = vmatmul.f32.gmra.mxu0 %v137
  %v253 = vpop.f32.mrf.mxu0
  %v254 = vadd.f32 0.0, %v253
  %255 = vmatmul.f32.gmra.mxu0 %v140
  %v256 = vpop.f32.mrf.mxu0
  %v257 = vadd.f32 0.0, %v256
  %258 = vdwg.mxu0
  %v259 = vpack.c.bf16 %v164, %v164
  %v260 = vpack.c.bf16 %v167, %v167
  %v261 = vpack.c.bf16 %v170, %v170
  %v262 = vpack.c.bf16 %v173, %v173
  %v263 = vpack.c.bf16 %v176, %v176
  %v264 = vpack.c.bf16 %v179, %v179
  %v265 = vpack.c.bf16 %v182, %v182
  %v266 = vpack.c.bf16 %v185, %v185
  %v267 = vpack.c.bf16 %v188, %v188
  %v268 = vpack.c.bf16 %v191, %v191
  %v269 = vpack.c.bf16 %v194, %v194
  %v270 = vpack.c.bf16 %v197, %v197
  %v271 = vpack.c.bf16 %v200, %v200
  %v272 = vpack.c.bf16 %v203, %v203
  %v273 = vpack.c.bf16 %v206, %v206
  %v274 = vpack.c.bf16 %v209, %v209
  %v275 = vpack.c.bf16 %v212, %v212
  %v276 = vpack.c.bf16 %v215, %v215
  %v277 = vpack.c.bf16 %v218, %v218
  %v278 = vpack.c.bf16 %v221, %v221
  %v279 = vpack.c.bf16 %v224, %v224
  %v280 = vpack.c.bf16 %v227, %v227
  %v281 = vpack.c.bf16 %v230, %v230
  %v282 = vpack.c.bf16 %v233, %v233
  %v283 = vpack.c.bf16 %v236, %v236
  %v284 = vpack.c.bf16 %v239, %v239
  %v285 = vpack.c.bf16 %v242, %v242
  %v286 = vpack.c.bf16 %v245, %v245
  %v287 = vpack.c.bf16 %v248, %v248
  %v288 = vpack.c.bf16 %v251, %v251
  %v289 = vpack.c.bf16 %v254, %v254
  %v290 = vpack.c.bf16 %v257, %v257
  %291 = vst [vmem:[%s2] sm:$0xf] %v259
  %292 = vst [vmem:[%s2 + $0x4] sm:$0xf] %v260
  %293 = vst [vmem:[%s2 + $0x8] sm:$0xf] %v261
  %294 = vst [vmem:[%s2 + $0xc] sm:$0xf] %v262
  %295 = vst [vmem:[%s2 + $0x10] sm:$0xf] %v263
  %296 = vst [vmem:[%s2 + $0x14] sm:$0xf] %v264
  %297 = vst [vmem:[%s2 + $0x18] sm:$0xf] %v265
  %298 = vst [vmem:[%s2 + $0x1c] sm:$0xf] %v266
  %299 = vst [vmem:[%s2 + $0x20] sm:$0xf] %v267
  %300 = vst [vmem:[%s2 + $0x24] sm:$0xf] %v268
  %301 = vst [vmem:[%s2 + $0x28] sm:$0xf] %v269
  %302 = vst [vmem:[%s2 + $0x2c] sm:$0xf] %v270
  %303 = vst [vmem:[%s2 + $0x30] sm:$0xf] %v271
  %304 = vst [vmem:[%s2 + $0x34] sm:$0xf] %v272
  %305 = vst [vmem:[%s2 + $0x38] sm:$0xf] %v273
  %306 = vst [vmem:[%s2 + $0x3c] sm:$0xf] %v274
  %307 = vst [vmem:[%s2 + $0x40] sm:$0xf] %v275
  %308 = vst [vmem:[%s2 + $0x44] sm:$0xf] %v276
  %309 = vst [vmem:[%s2 + $0x48] sm:$0xf] %v277
  %310 = vst [vmem:[%s2 + $0x4c] sm:$0xf] %v278
  %311 = vst [vmem:[%s2 + $0x50] sm:$0xf] %v279
  %312 = vst [vmem:[%s2 + $0x54] sm:$0xf] %v280
  %313 = vst [vmem:[%s2 + $0x58] sm:$0xf] %v281
  %314 = vst [vmem:[%s2 + $0x5c] sm:$0xf] %v282
  %315 = vst [vmem:[%s2 + $0x60] sm:$0xf] %v283
  %316 = vst [vmem:[%s2 + $0x64] sm:$0xf] %v284
  %317 = vst [vmem:[%s2 + $0x68] sm:$0xf] %v285
  %318 = vst [vmem:[%s2 + $0x6c] sm:$0xf] %v286
  %319 = vst [vmem:[%s2 + $0x70] sm:$0xf] %v287
  %320 = vst [vmem:[%s2 + $0x74] sm:$0xf] %v288
  %321 = vst [vmem:[%s2 + $0x78] sm:$0xf] %v289
  %322 = vst [vmem:[%s2 + $0x7c] sm:$0xf] %v290
  // Predicated region
  $region10: #{pem_forward.14} parent=0 // pred_check
    _
  $region11: #{pem_forward.14} parent=0 // pred_check_branch
    %324 = sbr.rel (0) target = $region13
  $region12: #{pem_forward.14} parent=0 // pred_region
    _
  $region13: #{pem_forward.14} parent=0 // pred_fallthru
    _
  // Predicated region
  $region14: #{pem_forward.14} parent=0 // pred_check
    _
  $region15: #{pem_forward.14} parent=0 // pred_check_branch
    %326 = sbr.rel (0) target = $region17
  $region16: #{pem_forward.14} parent=0 // pred_region
    _
  $region17: #{pem_forward.14} parent=0 // pred_fallthru
    _

// kernel: pem_forward.15
$region0: #{pem_forward.15}
  #allocation0 [shape = 'u32[]', space=smem, size = 0x4, offset = 0x4, fixed_abs, tag = 'smem constant byte address 0x4 - core index']
  #allocation1 [shape = 'u32[72,128]{1,0:T(1,128)}', space=vmem, size = 0x9000, scoped, tag = 'internal scratch']
  %s0 = inlined_call_operand.vmem [shape: f32[512,128], index: 0, kind: input, shape index: {}]
  %s1 = inlined_call_operand.vmem [shape: f32[512,64], index: 1, kind: input, shape index: {}]
  %s2 = inlined_call_operand.vmem [shape: bf16[512,64], index: 2, kind: input, shape index: {}]
  %s3 = inlined_call_operand.vmem [shape: bf16[512,64], index: 3, kind: input, shape index: {}]
  %s4 = inlined_call_operand.vmem [shape: bf16[512,64], index: 4, kind: input, shape index: {}]
  %s5 = inlined_call_operand.vmem [shape: bf16[256,128], index: 5, kind: input, shape index: {}]
  %s6 = inlined_call_operand.vmem [shape: f32[1,128], index: 6, kind: input, shape index: {}]
  %s7 = inlined_call_operand.vmem [shape: bf16[256,64], index: 7, kind: input, shape index: {}]
  %s8 = inlined_call_operand.vmem [shape: f32[1,64], index: 8, kind: input, shape index: {}]
  %s9 = inlined_call_operand.vmem [shape: f32[512,64], index: 9, kind: output, shape index: {}]
  %s10 = sld [smem:[#allocation0]]
  $region46: #{pem_forward.15} parent=0
    _
  %s12 = ssub.s32 1, %s10
  %s13 = scalar_select 0, %s12, %s10
  // Predicated region
  $region2: #{pem_forward.15} parent=0 // pred_check
    _
  $region3: #{pem_forward.15} parent=0 // pred_check_branch
    %15 = sbr.rel (0) target = $region5
  $region4: #{pem_forward.15} parent=0 // pred_region
    _
  $region5: #{pem_forward.15} parent=0 // pred_fallthru
    _
  // Predicated region
  $region6: #{pem_forward.15} parent=0 // pred_check
    _
  $region7: #{pem_forward.15} parent=0 // pred_check_branch
    %17 = sbr.rel (0) target = $region9
  $region8: #{pem_forward.15} parent=0 // pred_region
    _
  $region9: #{pem_forward.15} parent=0 // pred_fallthru
    _
  // Predicated region
  $region10: #{pem_forward.15} parent=0 // pred_check
    _
  $region11: #{pem_forward.15} parent=0 // pred_check_branch
    %19 = sbr.rel (0) target = $region13
  $region12: #{pem_forward.15} parent=0 // pred_region
    _
  $region13: #{pem_forward.15} parent=0 // pred_fallthru
    _
  // Predicated region
  $region14: #{pem_forward.15} parent=0 // pred_check
    _
  $region15: #{pem_forward.15} parent=0 // pred_check_branch
    %21 = sbr.rel (0) target = $region17
  $region16: #{pem_forward.15} parent=0 // pred_region
    _
  $region17: #{pem_forward.15} parent=0 // pred_fallthru
    _
  // Predicated region
  $region18: #{pem_forward.15} parent=0 // pred_check
    _
  $region19: #{pem_forward.15} parent=0 // pred_check_branch
    %23 = sbr.rel (0) target = $region21
  $region20: #{pem_forward.15} parent=0 // pred_region
    _
  $region21: #{pem_forward.15} parent=0 // pred_fallthru
    _
  // Predicated region
  $region22: #{pem_forward.15} parent=0 // pred_check
    _
  $region23: #{pem_forward.15} parent=0 // pred_check_branch
    %25 = sbr.rel (0) target = $region25
  $region24: #{pem_forward.15} parent=0 // pred_region
    _
  $region25: #{pem_forward.15} parent=0 // pred_fallthru
    _
  // Predicated region
  $region26: #{pem_forward.15} parent=0 // pred_check
    _
  $region27: #{pem_forward.15} parent=0 // pred_check_branch
    %27 = sbr.rel (0) target = $region29
  $region28: #{pem_forward.15} parent=0 // pred_region
    _
  $region29: #{pem_forward.15} parent=0 // pred_fallthru
    _
  // Predicated region
  $region30: #{pem_forward.15} parent=0 // pred_check
    _
  $region31: #{pem_forward.15} parent=0 // pred_check_branch
    %29 = sbr.rel (0) target = $region33
  $region32: #{pem_forward.15} parent=0 // pred_region
    _
  $region33: #{pem_forward.15} parent=0 // pred_fallthru
    _
  // Predicated region
  $region34: #{pem_forward.15} parent=0 // pred_check
    _
  $region35: #{pem_forward.15} parent=0 // pred_check_branch
    %31 = sbr.rel (0) target = $region37
  $region36: #{pem_forward.15} parent=0 // pred_region
    _
  $region37: #{pem_forward.15} parent=0 // pred_fallthru
    _
  %v33 = vld [vmem:[%s1] sm:$0xff]
  %v34 = vld [vmem:[%s1 + $0x8] sm:$0xff]
  %v35 = vld [vmem:[%s1 + $0x10] sm:$0xff]
  %v36 = vld [vmem:[%s1 + $0x18] sm:$0xff]
  %v37 = vld [vmem:[%s1 + $0x20] sm:$0xff]
  %v38 = vld [vmem:[%s1 + $0x28] sm:$0xff]
  %v39 = vld [vmem:[%s1 + $0x30] sm:$0xff]
  %v40 = vld [vmem:[%s1 + $0x38] sm:$0xff]
  %v41 = vld [vmem:[%s1 + $0x40] sm:$0xff]
  %v42 = vld [vmem:[%s1 + $0x48] sm:$0xff]
  %v43 = vld [vmem:[%s1 + $0x50] sm:$0xff]
  %v44 = vld [vmem:[%s1 + $0x58] sm:$0xff]
  %v45 = vld [vmem:[%s1 + $0x60] sm:$0xff]
  %v46 = vld [vmem:[%s1 + $0x68] sm:$0xff]
  %v47 = vld [vmem:[%s1 + $0x70] sm:$0xff]
  %v48 = vld [vmem:[%s1 + $0x78] sm:$0xff]
  %v49 = vld [vmem:[%s1 + $0x80] sm:$0xff]
  %v50 = vld [vmem:[%s1 + $0x88] sm:$0xff]
  %v51 = vld [vmem:[%s1 + $0x90] sm:$0xff]
  %v52 = vld [vmem:[%s1 + $0x98] sm:$0xff]
  %v53 = vld [vmem:[%s1 + $0xa0] sm:$0xff]
  %v54 = vld [vmem:[%s1 + $0xa8] sm:$0xff]
  %v55 = vld [vmem:[%s1 + $0xb0] sm:$0xff]
  %v56 = vld [vmem:[%s1 + $0xb8] sm:$0xff]
  %v57 = vld [vmem:[%s1 + $0xc0] sm:$0xff]
  %v58 = vld [vmem:[%s1 + $0xc8] sm:$0xff]
  %v59 = vld [vmem:[%s1 + $0xd0] sm:$0xff]
  %v60 = vld [vmem:[%s1 + $0xd8] sm:$0xff]
  %v61 = vld [vmem:[%s1 + $0xe0] sm:$0xff]
  %v62 = vld [vmem:[%s1 + $0xe8] sm:$0xff]
  %v63 = vld [vmem:[%s1 + $0xf0] sm:$0xff]
  %v64 = vld [vmem:[%s1 + $0xf8] sm:$0xff]
  %v65 = vld [vmem:[%s1 + $0x100] sm:$0xff]
  %v66 = vld [vmem:[%s1 + $0x108] sm:$0xff]
  %v67 = vld [vmem:[%s1 + $0x110] sm:$0xff]
  %v68 = vld [vmem:[%s1 + $0x118] sm:$0xff]
  %v69 = vld [vmem:[%s1 + $0x120] sm:$0xff]
  %v70 = vld [vmem:[%s1 + $0x128] sm:$0xff]
  %v71 = vld [vmem:[%s1 + $0x130] sm:$0xff]
  %v72 = vld [vmem:[%s1 + $0x138] sm:$0xff]
  %v73 = vld [vmem:[%s1 + $0x140] sm:$0xff]
  %v74 = vld [vmem:[%s1 + $0x148] sm:$0xff]
  %v75 = vld [vmem:[%s1 + $0x150] sm:$0xff]
  %v76 = vld [vmem:[%s1 + $0x158] sm:$0xff]
  %v77 = vld [vmem:[%s1 + $0x160] sm:$0xff]
  %v78 = vld [vmem:[%s1 + $0x168] sm:$0xff]
  %v79 = vld [vmem:[%s1 + $0x170] sm:$0xff]
  %v80 = vld [vmem:[%s1 + $0x178] sm:$0xff]
  %v81 = vld [vmem:[%s1 + $0x180] sm:$0xff]
  %v82 = vld [vmem:[%s1 + $0x188] sm:$0xff]
  %v83 = vld [vmem:[%s1 + $0x190] sm:$0xff]
  %v84 = vld [vmem:[%s1 + $0x198] sm:$0xff]
  %v85 = vld [vmem:[%s1 + $0x1a0] sm:$0xff]
  %v86 = vld [vmem:[%s1 + $0x1a8] sm:$0xff]
  %v87 = vld [vmem:[%s1 + $0x1b0] sm:$0xff]
  %v88 = vld [vmem:[%s1 + $0x1b8] sm:$0xff]
  %v89 = vld [vmem:[%s1 + $0x1c0] sm:$0xff]
  %v90 = vld [vmem:[%s1 + $0x1c8] sm:$0xff]
  %v91 = vld [vmem:[%s1 + $0x1d0] sm:$0xff]
  %v92 = vld [vmem:[%s1 + $0x1d8] sm:$0xff]
  %v93 = vld [vmem:[%s1 + $0x1e0] sm:$0xff]
  %v94 = vld [vmem:[%s1 + $0x1e8] sm:$0xff]
  %v95 = vld [vmem:[%s1 + $0x1f0] sm:$0xff]
  %v96 = vld [vmem:[%s1 + $0x1f8] sm:$0xff]
  %v97 = vpack.c.bf16 %v34, %v33
  %v98 = vpack.c.bf16 %v36, %v35
  %v99 = vpack.c.bf16 %v38, %v37
  %v100 = vpack.c.bf16 %v40, %v39
  %v101 = vpack.c.bf16 %v42, %v41
  %v102 = vpack.c.bf16 %v44, %v43
  %v103 = vpack.c.bf16 %v46, %v45
  %v104 = vpack.c.bf16 %v48, %v47
  %v105 = vpack.c.bf16 %v50, %v49
  %v106 = vpack.c.bf16 %v52, %v51
  %v107 = vpack.c.bf16 %v54, %v53
  %v108 = vpack.c.bf16 %v56, %v55
  %v109 = vpack.c.bf16 %v58, %v57
  %v110 = vpack.c.bf16 %v60, %v59
  %v111 = vpack.c.bf16 %v62, %v61
  %v112 = vpack.c.bf16 %v64, %v63
  %v113 = vpack.c.bf16 %v66, %v65
  %v114 = vpack.c.bf16 %v68, %v67
  %v115 = vpack.c.bf16 %v70, %v69
  %v116 = vpack.c.bf16 %v72, %v71
  %v117 = vpack.c.bf16 %v74, %v73
  %v118 = vpack.c.bf16 %v76, %v75
  %v119 = vpack.c.bf16 %v78, %v77
  %v120 = vpack.c.bf16 %v80, %v79
  %v121 = vpack.c.bf16 %v82, %v81
  %v122 = vpack.c.bf16 %v84, %v83
  %v123 = vpack.c.bf16 %v86, %v85
  %v124 = vpack.c.bf16 %v88, %v87
  %v125 = vpack.c.bf16 %v90, %v89
  %v126 = vpack.c.bf16 %v92, %v91
  %v127 = vpack.c.bf16 %v94, %v93
  %v128 = vpack.c.bf16 %v96, %v95
  %v129 = vld [vmem:[%s5] sm:$0xf]
  %v130 = vld [vmem:[%s5 + $0x4] sm:$0xf]
  %v131 = vld [vmem:[%s5 + $0x8] sm:$0xf]
  %v132 = vld [vmem:[%s5 + $0xc] sm:$0xf]
  %v133 = vld [vmem:[%s5 + $0x10] sm:$0xf]
  %v134 = vld [vmem:[%s5 + $0x14] sm:$0xf]
  %v135 = vld [vmem:[%s5 + $0x18] sm:$0xf]
  %v136 = vld [vmem:[%s5 + $0x1c] sm:$0xf]
  %v137 = vld [vmem:[%s2] sm:$0xf]
  %v138 = vld [vmem:[%s2 + $0x4] sm:$0xf]
  %v139 = vld [vmem:[%s2 + $0x8] sm:$0xf]
  %v140 = vld [vmem:[%s2 + $0xc] sm:$0xf]
  %v141 = vld [vmem:[%s2 + $0x10] sm:$0xf]
  %v142 = vld [vmem:[%s2 + $0x14] sm:$0xf]
  %v143 = vld [vmem:[%s2 + $0x18] sm:$0xf]
  %v144 = vld [vmem:[%s2 + $0x1c] sm:$0xf]
  %v145 = vld [vmem:[%s2 + $0x20] sm:$0xf]
  %v146 = vld [vmem:[%s2 + $0x24] sm:$0xf]
  %v147 = vld [vmem:[%s2 + $0x28] sm:$0xf]
  %v148 = vld [vmem:[%s2 + $0x2c] sm:$0xf]
  %v149 = vld [vmem:[%s2 + $0x30] sm:$0xf]
  %v150 = vld [vmem:[%s2 + $0x34] sm:$0xf]
  %v151 = vld [vmem:[%s2 + $0x38] sm:$0xf]
  %v152 = vld [vmem:[%s2 + $0x3c] sm:$0xf]
  %v153 = vld [vmem:[%s2 + $0x40] sm:$0xf]
  %v154 = vld [vmem:[%s2 + $0x44] sm:$0xf]
  %v155 = vld [vmem:[%s2 + $0x48] sm:$0xf]
  %v156 = vld [vmem:[%s2 + $0x4c] sm:$0xf]
  %v157 = vld [vmem:[%s2 + $0x50] sm:$0xf]
  %v158 = vld [vmem:[%s2 + $0x54] sm:$0xf]
  %v159 = vld [vmem:[%s2 + $0x58] sm:$0xf]
  %v160 = vld [vmem:[%s2 + $0x5c] sm:$0xf]
  %v161 = vld [vmem:[%s2 + $0x60] sm:$0xf]
  %v162 = vld [vmem:[%s2 + $0x64] sm:$0xf]
  %v163 = vld [vmem:[%s2 + $0x68] sm:$0xf]
  %v164 = vld [vmem:[%s2 + $0x6c] sm:$0xf]
  %v165 = vld [vmem:[%s2 + $0x70] sm:$0xf]
  %v166 = vld [vmem:[%s2 + $0x74] sm:$0xf]
  %v167 = vld [vmem:[%s2 + $0x78] sm:$0xf]
  %v168 = vld [vmem:[%s2 + $0x7c] sm:$0xf]
  %v169 = vld [vmem:[%s2 + $0x80] sm:$0xf]
  %v170 = vld [vmem:[%s2 + $0x84] sm:$0xf]
  %v171 = vld [vmem:[%s2 + $0x88] sm:$0xf]
  %v172 = vld [vmem:[%s2 + $0x8c] sm:$0xf]
  %v173 = vld [vmem:[%s2 + $0x90] sm:$0xf]
  %v174 = vld [vmem:[%s2 + $0x94] sm:$0xf]
  %v175 = vld [vmem:[%s2 + $0x98] sm:$0xf]
  %v176 = vld [vmem:[%s2 + $0x9c] sm:$0xf]
  %v177 = vld [vmem:[%s2 + $0xa0] sm:$0xf]
  %v178 = vld [vmem:[%s2 + $0xa4] sm:$0xf]
  %v179 = vld [vmem:[%s2 + $0xa8] sm:$0xf]
  %v180 = vld [vmem:[%s2 + $0xac] sm:$0xf]
  %v181 = vld [vmem:[%s2 + $0xb0] sm:$0xf]
  %v182 = vld [vmem:[%s2 + $0xb4] sm:$0xf]
  %v183 = vld [vmem:[%s2 + $0xb8] sm:$0xf]
  %v184 = vld [vmem:[%s2 + $0xbc] sm:$0xf]
  %v185 = vld [vmem:[%s2 + $0xc0] sm:$0xf]
  %v186 = vld [vmem:[%s2 + $0xc4] sm:$0xf]
  %v187 = vld [vmem:[%s2 + $0xc8] sm:$0xf]
  %v188 = vld [vmem:[%s2 + $0xcc] sm:$0xf]
  %v189 = vld [vmem:[%s2 + $0xd0] sm:$0xf]
  %v190 = vld [vmem:[%s2 + $0xd4] sm:$0xf]
  %v191 = vld [vmem:[%s2 + $0xd8] sm:$0xf]
  %v192 = vld [vmem:[%s2 + $0xdc] sm:$0xf]
  %v193 = vld [vmem:[%s2 + $0xe0] sm:$0xf]
  %v194 = vld [vmem:[%s2 + $0xe4] sm:$0xf]
  %v195 = vld [vmem:[%s2 + $0xe8] sm:$0xf]
  %v196 = vld [vmem:[%s2 + $0xec] sm:$0xf]
  %v197 = vld [vmem:[%s2 + $0xf0] sm:$0xf]
  %v198 = vld [vmem:[%s2 + $0xf4] sm:$0xf]
  %v199 = vld [vmem:[%s2 + $0xf8] sm:$0xf]
  %v200 = vld [vmem:[%s2 + $0xfc] sm:$0xf]
  %v201 = vld [vmem:[%s5 + $0x20] sm:$0xf]
  %v202 = vld [vmem:[%s5 + $0x24] sm:$0xf]
  %v203 = vld [vmem:[%s5 + $0x28] sm:$0xf]
  %v204 = vld [vmem:[%s5 + $0x2c] sm:$0xf]
  %v205 = vld [vmem:[%s5 + $0x30] sm:$0xf]
  %v206 = vld [vmem:[%s5 + $0x34] sm:$0xf]
  %v207 = vld [vmem:[%s5 + $0x38] sm:$0xf]
  %v208 = vld [vmem:[%s5 + $0x3c] sm:$0xf]
  %v273 = vunpack.c.l.b16 %v137
  %v274 = vunpack.c.l.b16 %v138
  %v275 = vunpack.c.l.b16 %v139
  %v276 = vunpack.c.l.b16 %v140
  %v277 = vunpack.c.l.b16 %v141
  %v278 = vunpack.c.l.b16 %v142
  %v279 = vunpack.c.l.b16 %v143
  %v280 = vunpack.c.l.b16 %v144
  %v281 = vunpack.c.l.b16 %v145
  %v282 = vunpack.c.l.b16 %v146
  %v283 = vunpack.c.l.b16 %v147
  %v284 = vunpack.c.l.b16 %v148
  %v285 = vunpack.c.l.b16 %v149
  %v286 = vunpack.c.l.b16 %v150
  %v287 = vunpack.c.l.b16 %v151
  %v288 = vunpack.c.l.b16 %v152
  %v289 = vunpack.c.l.b16 %v153
  %v290 = vunpack.c.l.b16 %v154
  %v291 = vunpack.c.l.b16 %v155
  %v292 = vunpack.c.l.b16 %v156
  %v293 = vunpack.c.l.b16 %v157
  %v294 = vunpack.c.l.b16 %v158
  %v295 = vunpack.c.l.b16 %v159
  %v296 = vunpack.c.l.b16 %v160
  %v297 = vunpack.c.l.b16 %v161
  %v298 = vunpack.c.l.b16 %v162
  %v299 = vunpack.c.l.b16 %v163
  %v300 = vunpack.c.l.b16 %v164
  %v301 = vunpack.c.l.b16 %v165
  %v302 = vunpack.c.l.b16 %v166
  %v303 = vunpack.c.l.b16 %v167
  %v304 = vunpack.c.l.b16 %v168
  %v305 = vunpack.c.l.b16 %v169
  %v306 = vunpack.c.l.b16 %v170
  %v307 = vunpack.c.l.b16 %v171
  %v308 = vunpack.c.l.b16 %v172
  %v309 = vunpack.c.l.b16 %v173
  %v310 = vunpack.c.l.b16 %v174
  %v311 = vunpack.c.l.b16 %v175
  %v312 = vunpack.c.l.b16 %v176
  %v313 = vunpack.c.l.b16 %v177
  %v314 = vunpack.c.l.b16 %v178
  %v315 = vunpack.c.l.b16 %v179
  %v316 = vunpack.c.l.b16 %v180
  %v317 = vunpack.c.l.b16 %v181
  %v318 = vunpack.c.l.b16 %v182
  %v319 = vunpack.c.l.b16 %v183
  %v320 = vunpack.c.l.b16 %v184
  %v321 = vunpack.c.l.b16 %v185
  %v322 = vunpack.c.l.b16 %v186
  %v323 = vunpack.c.l.b16 %v187
  %v324 = vunpack.c.l.b16 %v188
  %v325 = vunpack.c.l.b16 %v189
  %v326 = vunpack.c.l.b16 %v190
  %v327 = vunpack.c.l.b16 %v191
  %v328 = vunpack.c.l.b16 %v192
  %v329 = vunpack.c.l.b16 %v193
  %v330 = vunpack.c.l.b16 %v194
  %v331 = vunpack.c.l.b16 %v195
  %v332 = vunpack.c.l.b16 %v196
  %v333 = vunpack.c.l.b16 %v197
  %v334 = vunpack.c.l.b16 %v198
  %v335 = vunpack.c.l.b16 %v199
  %v336 = vunpack.c.l.b16 %v200
  %v337 = vpack.c.b16 %v274, %v273
  %v338 = vpack.c.b16 %v276, %v275
  %v339 = vpack.c.b16 %v278, %v277
  %v340 = vpack.c.b16 %v280, %v279
  %v341 = vpack.c.b16 %v282, %v281
  %v342 = vpack.c.b16 %v284, %v283
  %v343 = vpack.c.b16 %v286, %v285
  %v344 = vpack.c.b16 %v288, %v287
  %v345 = vpack.c.b16 %v290, %v289
  %v346 = vpack.c.b16 %v292, %v291
  %v347 = vpack.c.b16 %v294, %v293
  %v348 = vpack.c.b16 %v296, %v295
  %v349 = vpack.c.b16 %v298, %v297
  %v350 = vpack.c.b16 %v300, %v299
  %v351 = vpack.c.b16 %v302, %v301
  %v352 = vpack.c.b16 %v304, %v303
  %v353 = vpack.c.b16 %v306, %v305
  %v354 = vpack.c.b16 %v308, %v307
  %v355 = vpack.c.b16 %v310, %v309
  %v356 = vpack.c.b16 %v312, %v311
  %v357 = vpack.c.b16 %v314, %v313
  %v358 = vpack.c.b16 %v316, %v315
  %v359 = vpack.c.b16 %v318, %v317
  %v360 = vpack.c.b16 %v320, %v319
  %v361 = vpack.c.b16 %v322, %v321
  %v362 = vpack.c.b16 %v324, %v323
  %v363 = vpack.c.b16 %v326, %v325
  %v364 = vpack.c.b16 %v328, %v327
  %v365 = vpack.c.b16 %v330, %v329
  %v366 = vpack.c.b16 %v332, %v331
  %v367 = vpack.c.b16 %v334, %v333
  %v368 = vpack.c.b16 %v336, %v335
  %v377 = vunpack.c.l.b16 %v201
  %v378 = vunpack.c.l.b16 %v202
  %v379 = vunpack.c.l.b16 %v203
  %v380 = vunpack.c.l.b16 %v204
  %v381 = vunpack.c.l.b16 %v205
  %v382 = vunpack.c.l.b16 %v206
  %v383 = vunpack.c.l.b16 %v207
  %v384 = vunpack.c.l.b16 %v208
  %v385 = vpack.c.b16 %v378, %v377
  %v386 = vpack.c.b16 %v380, %v379
  %v387 = vpack.c.b16 %v382, %v381
  %v388 = vpack.c.b16 %v384, %v383
  %vm393 = vcmask 523264
  %v395 = vsel %vm393, %v337, 0
  %v398 = vsel %vm393, %v338, 0
  %v401 = vsel %vm393, %v339, 0
  %v404 = vsel %vm393, %v340, 0
  %v407 = vsel %vm393, %v341, 0
  %v410 = vsel %vm393, %v342, 0
  %v413 = vsel %vm393, %v343, 0
  %v416 = vsel %vm393, %v344, 0
  %v419 = vsel %vm393, %v345, 0
  %v422 = vsel %vm393, %v346, 0
  %v425 = vsel %vm393, %v347, 0
  %v428 = vsel %vm393, %v348, 0
  %v431 = vsel %vm393, %v349, 0
  %v434 = vsel %vm393, %v350, 0
  %v437 = vsel %vm393, %v351, 0
  %v440 = vsel %vm393, %v352, 0
  %v443 = vsel %vm393, %v353, 0
  %v446 = vsel %vm393, %v354, 0
  %v449 = vsel %vm393, %v355, 0
  %v452 = vsel %vm393, %v356, 0
  %v455 = vsel %vm393, %v357, 0
  %v458 = vsel %vm393, %v358, 0
  %v461 = vsel %vm393, %v359, 0
  %v464 = vsel %vm393, %v360, 0
  %v467 = vsel %vm393, %v361, 0
  %v470 = vsel %vm393, %v362, 0
  %v473 = vsel %vm393, %v363, 0
  %v476 = vsel %vm393, %v364, 0
  %v479 = vsel %vm393, %v365, 0
  %v482 = vsel %vm393, %v366, 0
  %v485 = vsel %vm393, %v367, 0
  %v488 = vsel %vm393, %v368, 0
  %490 = vmatpush.bf16.msra.mxu0 0
  %491 = vmatpush.bf16.msra.mxu0 0
  %492 = vmatpush.bf16.msra.mxu0 0
  %493 = vmatpush.bf16.msra.mxu0 0
  %494 = vmatpush.bf16.msra.mxu0 %v388
  %495 = vmatpush.bf16.msra.mxu0 %v387
  %496 = vmatpush.bf16.msra.mxu0 %v386
  %497 = vmatpush.bf16.msra.mxu0 %v385
  %498 = vmatmul.bf16.gmra.mxu0 %v395
  %v499 = vpop.f32.mrf.mxu0
  %v500 = vadd.f32 0.0, %v499
  %v501 = vpop.f32.mrf.mxu0
  %v502 = vadd.f32 0.0, %v501
  %503 = vmatmul.bf16.gmra.mxu0 %v398
  %v504 = vpop.f32.mrf.mxu0
  %v505 = vadd.f32 0.0, %v504
  %v506 = vpop.f32.mrf.mxu0
  %v507 = vadd.f32 0.0, %v506
  %508 = vmatmul.bf16.gmra.mxu0 %v401
  %v509 = vpop.f32.mrf.mxu0
  %v510 = vadd.f32 0.0, %v509
  %v511 = vpop.f32.mrf.mxu0
  %v512 = vadd.f32 0.0, %v511
  %513 = vmatmul.bf16.gmra.mxu0 %v404
  %v514 = vpop.f32.mrf.mxu0
  %v515 = vadd.f32 0.0, %v514
  %v516 = vpop.f32.mrf.mxu0
  %v517 = vadd.f32 0.0, %v516
  %518 = vmatmul.bf16.gmra.mxu0 %v407
  %v519 = vpop.f32.mrf.mxu0
  %v520 = vadd.f32 0.0, %v519
  %v521 = vpop.f32.mrf.mxu0
  %v522 = vadd.f32 0.0, %v521
  %523 = vmatmul.bf16.gmra.mxu0 %v410
  %v524 = vpop.f32.mrf.mxu0
  %v525 = vadd.f32 0.0, %v524
  %v526 = vpop.f32.mrf.mxu0
  %v527 = vadd.f32 0.0, %v526
  %528 = vmatmul.bf16.gmra.mxu0 %v413
  %v529 = vpop.f32.mrf.mxu0
  %v530 = vadd.f32 0.0, %v529
  %v531 = vpop.f32.mrf.mxu0
  %v532 = vadd.f32 0.0, %v531
  %533 = vmatmul.bf16.gmra.mxu0 %v416
  %v534 = vpop.f32.mrf.mxu0
  %v535 = vadd.f32 0.0, %v534
  %v536 = vpop.f32.mrf.mxu0
  %v537 = vadd.f32 0.0, %v536
  %538 = vmatmul.bf16.gmra.mxu0 %v419
  %v539 = vpop.f32.mrf.mxu0
  %v540 = vadd.f32 0.0, %v539
  %v541 = vpop.f32.mrf.mxu0
  %v542 = vadd.f32 0.0, %v541
  %543 = vmatmul.bf16.gmra.mxu0 %v422
  %v544 = vpop.f32.mrf.mxu0
  %v545 = vadd.f32 0.0, %v544
  %v546 = vpop.f32.mrf.mxu0
  %v547 = vadd.f32 0.0, %v546
  %548 = vmatmul.bf16.gmra.mxu0 %v425
  %v549 = vpop.f32.mrf.mxu0
  %v550 = vadd.f32 0.0, %v549
  %v551 = vpop.f32.mrf.mxu0
  %v552 = vadd.f32 0.0, %v551
  %553 = vmatmul.bf16.gmra.mxu0 %v428
  %v554 = vpop.f32.mrf.mxu0
  %v555 = vadd.f32 0.0, %v554
  %v556 = vpop.f32.mrf.mxu0
  %v557 = vadd.f32 0.0, %v556
  %558 = vmatmul.bf16.gmra.mxu0 %v431
  %v559 = vpop.f32.mrf.mxu0
  %v560 = vadd.f32 0.0, %v559
  %v561 = vpop.f32.mrf.mxu0
  %v562 = vadd.f32 0.0, %v561
  %563 = vmatmul.bf16.gmra.mxu0 %v434
  %v564 = vpop.f32.mrf.mxu0
  %v565 = vadd.f32 0.0, %v564
  %v566 = vpop.f32.mrf.mxu0
  %v567 = vadd.f32 0.0, %v566
  %568 = vmatmul.bf16.gmra.mxu0 %v437
  %v569 = vpop.f32.mrf.mxu0
  %v570 = vadd.f32 0.0, %v569
  %v571 = vpop.f32.mrf.mxu0
  %v572 = vadd.f32 0.0, %v571
  %573 = vmatmul.bf16.gmra.mxu0 %v440
  %v574 = vpop.f32.mrf.mxu0
  %v575 = vadd.f32 0.0, %v574
  %v576 = vpop.f32.mrf.mxu0
  %v577 = vadd.f32 0.0, %v576
  %578 = vmatmul.bf16.gmra.mxu0 %v443
  %v579 = vpop.f32.mrf.mxu0
  %v580 = vadd.f32 0.0, %v579
  %v581 = vpop.f32.mrf.mxu0
  %v582 = vadd.f32 0.0, %v581
  %583 = vmatmul.bf16.gmra.mxu0 %v446
  %v584 = vpop.f32.mrf.mxu0
  %v585 = vadd.f32 0.0, %v584
  %v586 = vpop.f32.mrf.mxu0
  %v587 = vadd.f32 0.0, %v586
  %588 = vmatmul.bf16.gmra.mxu0 %v449
  %v589 = vpop.f32.mrf.mxu0
  %v590 = vadd.f32 0.0, %v589
  %v591 = vpop.f32.mrf.mxu0
  %v592 = vadd.f32 0.0, %v591
  %593 = vmatmul.bf16.gmra.mxu0 %v452
  %v594 = vpop.f32.mrf.mxu0
  %v595 = vadd.f32 0.0, %v594
  %v596 = vpop.f32.mrf.mxu0
  %v597 = vadd.f32 0.0, %v596
  %598 = vmatmul.bf16.gmra.mxu0 %v455
  %v599 = vpop.f32.mrf.mxu0
  %v600 = vadd.f32 0.0, %v599
  %v601 = vpop.f32.mrf.mxu0
  %v602 = vadd.f32 0.0, %v601
  %603 = vmatmul.bf16.gmra.mxu0 %v458
  %v604 = vpop.f32.mrf.mxu0
  %v605 = vadd.f32 0.0, %v604
  %v606 = vpop.f32.mrf.mxu0
  %v607 = vadd.f32 0.0, %v606
  %608 = vmatmul.bf16.gmra.mxu0 %v461
  %v609 = vpop.f32.mrf.mxu0
  %v610 = vadd.f32 0.0, %v609
  %v611 = vpop.f32.mrf.mxu0
  %v612 = vadd.f32 0.0, %v611
  %613 = vmatmul.bf16.gmra.mxu0 %v464
  %v614 = vpop.f32.mrf.mxu0
  %v615 = vadd.f32 0.0, %v614
  %v616 = vpop.f32.mrf.mxu0
  %v617 = vadd.f32 0.0, %v616
  %618 = vmatmul.bf16.gmra.mxu0 %v467
  %v619 = vpop.f32.mrf.mxu0
  %v620 = vadd.f32 0.0, %v619
  %v621 = vpop.f32.mrf.mxu0
  %v622 = vadd.f32 0.0, %v621
  %623 = vmatmul.bf16.gmra.mxu0 %v470
  %v624 = vpop.f32.mrf.mxu0
  %v625 = vadd.f32 0.0, %v624
  %v626 = vpop.f32.mrf.mxu0
  %v627 = vadd.f32 0.0, %v626
  %628 = vmatmul.bf16.gmra.mxu0 %v473
  %v629 = vpop.f32.mrf.mxu0
  %v630 = vadd.f32 0.0, %v629
  %v631 = vpop.f32.mrf.mxu0
  %v632 = vadd.f32 0.0, %v631
  %633 = vmatmul.bf16.gmra.mxu0 %v476
  %v634 = vpop.f32.mrf.mxu0
  %v635 = vadd.f32 0.0, %v634
  %v636 = vpop.f32.mrf.mxu0
  %v637 = vadd.f32 0.0, %v636
  %638 = vmatmul.bf16.gmra.mxu0 %v479
  %v639 = vpop.f32.mrf.mxu0
  %v640 = vadd.f32 0.0, %v639
  %v641 = vpop.f32.mrf.mxu0
  %v642 = vadd.f32 0.0, %v641
  %643 = vmatmul.bf16.gmra.mxu0 %v482
  %v644 = vpop.f32.mrf.mxu0
  %v645 = vadd.f32 0.0, %v644
  %v646 = vpop.f32.mrf.mxu0
  %v647 = vadd.f32 0.0, %v646
  %648 = vmatmul.bf16.gmra.mxu0 %v485
  %v649 = vpop.f32.mrf.mxu0
  %v650 = vadd.f32 0.0, %v649
  %v651 = vpop.f32.mrf.mxu0
  %v652 = vadd.f32 0.0, %v651
  %653 = vmatmul.bf16.gmra.mxu0 %v488
  %v654 = vpop.f32.mrf.mxu0
  %v655 = vadd.f32 0.0, %v654
  %v656 = vpop.f32.mrf.mxu0
  %v657 = vadd.f32 0.0, %v656
  %658 = vdwg.mxu0
  %v667 = vunpack.c.l.b16 %v129
  %v668 = vunpack.c.l.b16 %v130
  %v669 = vunpack.c.l.b16 %v131
  %v670 = vunpack.c.l.b16 %v132
  %v671 = vunpack.c.l.b16 %v133
  %v672 = vunpack.c.l.b16 %v134
  %v673 = vunpack.c.l.b16 %v135
  %v674 = vunpack.c.l.b16 %v136
  %v675 = vpack.c.b16 %v668, %v667
  %v676 = vpack.c.b16 %v670, %v669
  %v677 = vpack.c.b16 %v672, %v671
  %v678 = vpack.c.b16 %v674, %v673
  %v684 = vsel %vm393, %v97, 0
  %v687 = vsel %vm393, %v98, 0
  %v690 = vsel %vm393, %v99, 0
  %v693 = vsel %vm393, %v100, 0
  %v696 = vsel %vm393, %v101, 0
  %v699 = vsel %vm393, %v102, 0
  %v702 = vsel %vm393, %v103, 0
  %v705 = vsel %vm393, %v104, 0
  %v708 = vsel %vm393, %v105, 0
  %v711 = vsel %vm393, %v106, 0
  %v714 = vsel %vm393, %v107, 0
  %v717 = vsel %vm393, %v108, 0
  %v720 = vsel %vm393, %v109, 0
  %v723 = vsel %vm393, %v110, 0
  %v726 = vsel %vm393, %v111, 0
  %v729 = vsel %vm393, %v112, 0
  %v732 = vsel %vm393, %v113, 0
  %v735 = vsel %vm393, %v114, 0
  %v738 = vsel %vm393, %v115, 0
  %v741 = vsel %vm393, %v116, 0
  %v744 = vsel %vm393, %v117, 0
  %v747 = vsel %vm393, %v118, 0
  %v750 = vsel %vm393, %v119, 0
  %v753 = vsel %vm393, %v120, 0
  %v756 = vsel %vm393, %v121, 0
  %v759 = vsel %vm393, %v122, 0
  %v762 = vsel %vm393, %v123, 0
  %v765 = vsel %vm393, %v124, 0
  %v768 = vsel %vm393, %v125, 0
  %v771 = vsel %vm393, %v126, 0
  %v774 = vsel %vm393, %v127, 0
  %v777 = vsel %vm393, %v128, 0
  %779 = vmatpush.bf16.msra.mxu0 0
  %780 = vmatpush.bf16.msra.mxu0 0
  %781 = vmatpush.bf16.msra.mxu0 0
  %782 = vmatpush.bf16.msra.mxu0 0
  %783 = vmatpush.bf16.msra.mxu0 %v678
  %784 = vmatpush.bf16.msra.mxu0 %v677
  %785 = vmatpush.bf16.msra.mxu0 %v676
  %786 = vmatpush.bf16.msra.mxu0 %v675
  %787 = vmatmul.bf16.gmra.mxu0 %v684
  %v788 = vpop.f32.mrf.mxu0
  %v789 = vadd.f32 %v500, %v788
  %v790 = vpop.f32.mrf.mxu0
  %v791 = vadd.f32 %v502, %v790
  %792 = vmatmul.bf16.gmra.mxu0 %v687
  %v793 = vpop.f32.mrf.mxu0
  %v794 = vadd.f32 %v505, %v793
  %v795 = vpop.f32.mrf.mxu0
  %v796 = vadd.f32 %v507, %v795
  %797 = vmatmul.bf16.gmra.mxu0 %v690
  %v798 = vpop.f32.mrf.mxu0
  %v799 = vadd.f32 %v510, %v798
  %v800 = vpop.f32.mrf.mxu0
  %v801 = vadd.f32 %v512, %v800
  %802 = vmatmul.bf16.gmra.mxu0 %v693
  %v803 = vpop.f32.mrf.mxu0
  %v804 = vadd.f32 %v515, %v803
  %v805 = vpop.f32.mrf.mxu0
  %v806 = vadd.f32 %v517, %v805
  %807 = vmatmul.bf16.gmra.mxu0 %v696
  %v808 = vpop.f32.mrf.mxu0
  %v809 = vadd.f32 %v520, %v808
  %v810 = vpop.f32.mrf.mxu0
  %v811 = vadd.f32 %v522, %v810
  %812 = vmatmul.bf16.gmra.mxu0 %v699
  %v813 = vpop.f32.mrf.mxu0
  %v814 = vadd.f32 %v525, %v813
  %v815 = vpop.f32.mrf.mxu0
  %v816 = vadd.f32 %v527, %v815
  %817 = vmatmul.bf16.gmra.mxu0 %v702
  %v818 = vpop.f32.mrf.mxu0
  %v819 = vadd.f32 %v530, %v818
  %v820 = vpop.f32.mrf.mxu0
  %v821 = vadd.f32 %v532, %v820
  %822 = vmatmul.bf16.gmra.mxu0 %v705
  %v823 = vpop.f32.mrf.mxu0
  %v824 = vadd.f32 %v535, %v823
  %v825 = vpop.f32.mrf.mxu0
  %v826 = vadd.f32 %v537, %v825
  %827 = vmatmul.bf16.gmra.mxu0 %v708
  %v828 = vpop.f32.mrf.mxu0
  %v829 = vadd.f32 %v540, %v828
  %v830 = vpop.f32.mrf.mxu0
  %v831 = vadd.f32 %v542, %v830
  %832 = vmatmul.bf16.gmra.mxu0 %v711
  %v833 = vpop.f32.mrf.mxu0
  %v834 = vadd.f32 %v545, %v833
  %v835 = vpop.f32.mrf.mxu0
  %v836 = vadd.f32 %v547, %v835
  %837 = vmatmul.bf16.gmra.mxu0 %v714
  %v838 = vpop.f32.mrf.mxu0
  %v839 = vadd.f32 %v550, %v838
  %v840 = vpop.f32.mrf.mxu0
  %v841 = vadd.f32 %v552, %v840
  %842 = vmatmul.bf16.gmra.mxu0 %v717
  %v843 = vpop.f32.mrf.mxu0
  %v844 = vadd.f32 %v555, %v843
  %v845 = vpop.f32.mrf.mxu0
  %v846 = vadd.f32 %v557, %v845
  %847 = vmatmul.bf16.gmra.mxu0 %v720
  %v848 = vpop.f32.mrf.mxu0
  %v849 = vadd.f32 %v560, %v848
  %v850 = vpop.f32.mrf.mxu0
  %v851 = vadd.f32 %v562, %v850
  %852 = vmatmul.bf16.gmra.mxu0 %v723
  %v853 = vpop.f32.mrf.mxu0
  %v854 = vadd.f32 %v565, %v853
  %v855 = vpop.f32.mrf.mxu0
  %v856 = vadd.f32 %v567, %v855
  %857 = vmatmul.bf16.gmra.mxu0 %v726
  %v858 = vpop.f32.mrf.mxu0
  %v859 = vadd.f32 %v570, %v858
  %v860 = vpop.f32.mrf.mxu0
  %v861 = vadd.f32 %v572, %v860
  %862 = vmatmul.bf16.gmra.mxu0 %v729
  %v863 = vpop.f32.mrf.mxu0
  %v864 = vadd.f32 %v575, %v863
  %v865 = vpop.f32.mrf.mxu0
  %v866 = vadd.f32 %v577, %v865
  %867 = vmatmul.bf16.gmra.mxu0 %v732
  %v868 = vpop.f32.mrf.mxu0
  %v869 = vadd.f32 %v580, %v868
  %v870 = vpop.f32.mrf.mxu0
  %v871 = vadd.f32 %v582, %v870
  %872 = vmatmul.bf16.gmra.mxu0 %v735
  %v873 = vpop.f32.mrf.mxu0
  %v874 = vadd.f32 %v585, %v873
  %v875 = vpop.f32.mrf.mxu0
  %v876 = vadd.f32 %v587, %v875
  %877 = vmatmul.bf16.gmra.mxu0 %v738
  %v878 = vpop.f32.mrf.mxu0
  %v879 = vadd.f32 %v590, %v878
  %v880 = vpop.f32.mrf.mxu0
  %v881 = vadd.f32 %v592, %v880
  %882 = vmatmul.bf16.gmra.mxu0 %v741
  %v883 = vpop.f32.mrf.mxu0
  %v884 = vadd.f32 %v595, %v883
  %v885 = vpop.f32.mrf.mxu0
  %v886 = vadd.f32 %v597, %v885
  %887 = vmatmul.bf16.gmra.mxu0 %v744
  %v888 = vpop.f32.mrf.mxu0
  %v889 = vadd.f32 %v600, %v888
  %v890 = vpop.f32.mrf.mxu0
  %v891 = vadd.f32 %v602, %v890
  %892 = vmatmul.bf16.gmra.mxu0 %v747
  %v893 = vpop.f32.mrf.mxu0
  %v894 = vadd.f32 %v605, %v893
  %v895 = vpop.f32.mrf.mxu0
  %v896 = vadd.f32 %v607, %v895
  %897 = vmatmul.bf16.gmra.mxu0 %v750
  %v898 = vpop.f32.mrf.mxu0
  %v899 = vadd.f32 %v610, %v898
  %v900 = vpop.f32.mrf.mxu0
  %v901 = vadd.f32 %v612, %v900
  %902 = vmatmul.bf16.gmra.mxu0 %v753
  %v903 = vpop.f32.mrf.mxu0
  %v904 = vadd.f32 %v615, %v903
  %v905 = vpop.f32.mrf.mxu0
  %v906 = vadd.f32 %v617, %v905
  %907 = vmatmul.bf16.gmra.mxu0 %v756
  %v908 = vpop.f32.mrf.mxu0
  %v909 = vadd.f32 %v620, %v908
  %v910 = vpop.f32.mrf.mxu0
  %v911 = vadd.f32 %v622, %v910
  %912 = vmatmul.bf16.gmra.mxu0 %v759
  %v913 = vpop.f32.mrf.mxu0
  %v914 = vadd.f32 %v625, %v913
  %v915 = vpop.f32.mrf.mxu0
  %v916 = vadd.f32 %v627, %v915
  %917 = vmatmul.bf16.gmra.mxu0 %v762
  %v918 = vpop.f32.mrf.mxu0
  %v919 = vadd.f32 %v630, %v918
  %v920 = vpop.f32.mrf.mxu0
  %v921 = vadd.f32 %v632, %v920
  %922 = vmatmul.bf16.gmra.mxu0 %v765
  %v923 = vpop.f32.mrf.mxu0
  %v924 = vadd.f32 %v635, %v923
  %v925 = vpop.f32.mrf.mxu0
  %v926 = vadd.f32 %v637, %v925
  %927 = vmatmul.bf16.gmra.mxu0 %v768
  %v928 = vpop.f32.mrf.mxu0
  %v929 = vadd.f32 %v640, %v928
  %v930 = vpop.f32.mrf.mxu0
  %v931 = vadd.f32 %v642, %v930
  %932 = vmatmul.bf16.gmra.mxu0 %v771
  %v933 = vpop.f32.mrf.mxu0
  %v934 = vadd.f32 %v645, %v933
  %v935 = vpop.f32.mrf.mxu0
  %v936 = vadd.f32 %v647, %v935
  %937 = vmatmul.bf16.gmra.mxu0 %v774
  %v938 = vpop.f32.mrf.mxu0
  %v939 = vadd.f32 %v650, %v938
  %v940 = vpop.f32.mrf.mxu0
  %v941 = vadd.f32 %v652, %v940
  %942 = vmatmul.bf16.gmra.mxu0 %v777
  %v943 = vpop.f32.mrf.mxu0
  %v944 = vadd.f32 %v655, %v943
  %v945 = vpop.f32.mrf.mxu0
  %v946 = vadd.f32 %v657, %v945
  %947 = vdwg.mxu0
  %v948 = vld [vmem:[%s3] sm:$0xf]
  %v949 = vld [vmem:[%s3 + $0x4] sm:$0xf]
  %v950 = vld [vmem:[%s3 + $0x8] sm:$0xf]
  %v951 = vld [vmem:[%s3 + $0xc] sm:$0xf]
  %v952 = vld [vmem:[%s3 + $0x10] sm:$0xf]
  %v953 = vld [vmem:[%s3 + $0x14] sm:$0xf]
  %v954 = vld [vmem:[%s3 + $0x18] sm:$0xf]
  %v955 = vld [vmem:[%s3 + $0x1c] sm:$0xf]
  %v956 = vld [vmem:[%s3 + $0x20] sm:$0xf]
  %v957 = vld [vmem:[%s3 + $0x24] sm:$0xf]
  %v958 = vld [vmem:[%s3 + $0x28] sm:$0xf]
  %v959 = vld [vmem:[%s3 + $0x2c] sm:$0xf]
  %v960 = vld [vmem:[%s3 + $0x30] sm:$0xf]
  %v961 = vld [vmem:[%s3 + $0x34] sm:$0xf]
  %v962 = vld [vmem:[%s3 + $0x38] sm:$0xf]
  %v963 = vld [vmem:[%s3 + $0x3c] sm:$0xf]
  %v964 = vld [vmem:[%s3 + $0x40] sm:$0xf]
  %v965 = vld [vmem:[%s3 + $0x44] sm:$0xf]
  %v966 = vld [vmem:[%s3 + $0x48] sm:$0xf]
  %v967 = vld [vmem:[%s3 + $0x4c] sm:$0xf]
  %v968 = vld [vmem:[%s3 + $0x50] sm:$0xf]
  %v969 = vld [vmem:[%s3 + $0x54] sm:$0xf]
  %v970 = vld [vmem:[%s3 + $0x58] sm:$0xf]
  %v971 = vld [vmem:[%s3 + $0x5c] sm:$0xf]
  %v972 = vld [vmem:[%s3 + $0x60] sm:$0xf]
  %v973 = vld [vmem:[%s3 + $0x64] sm:$0xf]
  %v974 = vld [vmem:[%s3 + $0x68] sm:$0xf]
  %v975 = vld [vmem:[%s3 + $0x6c] sm:$0xf]
  %v976 = vld [vmem:[%s3 + $0x70] sm:$0xf]
  %v977 = vld [vmem:[%s3 + $0x74] sm:$0xf]
  %v978 = vld [vmem:[%s3 + $0x78] sm:$0xf]
  %v979 = vld [vmem:[%s3 + $0x7c] sm:$0xf]
  %v980 = vld [vmem:[%s3 + $0x80] sm:$0xf]
  %v981 = vld [vmem:[%s3 + $0x84] sm:$0xf]
  %v982 = vld [vmem:[%s3 + $0x88] sm:$0xf]
  %v983 = vld [vmem:[%s3 + $0x8c] sm:$0xf]
  %v984 = vld [vmem:[%s3 + $0x90] sm:$0xf]
  %v985 = vld [vmem:[%s3 + $0x94] sm:$0xf]
  %v986 = vld [vmem:[%s3 + $0x98] sm:$0xf]
  %v987 = vld [vmem:[%s3 + $0x9c] sm:$0xf]
  %v988 = vld [vmem:[%s3 + $0xa0] sm:$0xf]
  %v989 = vld [vmem:[%s3 + $0xa4] sm:$0xf]
  %v990 = vld [vmem:[%s3 + $0xa8] sm:$0xf]
  %v991 = vld [vmem:[%s3 + $0xac] sm:$0xf]
  %v992 = vld [vmem:[%s3 + $0xb0] sm:$0xf]
  %v993 = vld [vmem:[%s3 + $0xb4] sm:$0xf]
  %v994 = vld [vmem:[%s3 + $0xb8] sm:$0xf]
  %v995 = vld [vmem:[%s3 + $0xbc] sm:$0xf]
  %v996 = vld [vmem:[%s3 + $0xc0] sm:$0xf]
  %v997 = vld [vmem:[%s3 + $0xc4] sm:$0xf]
  %v998 = vld [vmem:[%s3 + $0xc8] sm:$0xf]
  %v999 = vld [vmem:[%s3 + $0xcc] sm:$0xf]
  %v1000 = vld [vmem:[%s3 + $0xd0] sm:$0xf]
  %v1001 = vld [vmem:[%s3 + $0xd4] sm:$0xf]
  %v1002 = vld [vmem:[%s3 + $0xd8] sm:$0xf]
  %v1003 = vld [vmem:[%s3 + $0xdc] sm:$0xf]
  %v1004 = vld [vmem:[%s3 + $0xe0] sm:$0xf]
  %v1005 = vld [vmem:[%s3 + $0xe4] sm:$0xf]
  %v1006 = vld [vmem:[%s3 + $0xe8] sm:$0xf]
  %v1007 = vld [vmem:[%s3 + $0xec] sm:$0xf]
  %v1008 = vld [vmem:[%s3 + $0xf0] sm:$0xf]
  %v1009 = vld [vmem:[%s3 + $0xf4] sm:$0xf]
  %v1010 = vld [vmem:[%s3 + $0xf8] sm:$0xf]
  %v1011 = vld [vmem:[%s3 + $0xfc] sm:$0xf]
  %v1012 = vld [vmem:[%s5 + $0x40] sm:$0xf]
  %v1013 = vld [vmem:[%s5 + $0x44] sm:$0xf]
  %v1014 = vld [vmem:[%s5 + $0x48] sm:$0xf]
  %v1015 = vld [vmem:[%s5 + $0x4c] sm:$0xf]
  %v1016 = vld [vmem:[%s5 + $0x50] sm:$0xf]
  %v1017 = vld [vmem:[%s5 + $0x54] sm:$0xf]
  %v1018 = vld [vmem:[%s5 + $0x58] sm:$0xf]
  %v1019 = vld [vmem:[%s5 + $0x5c] sm:$0xf]
  %v1084 = vunpack.c.l.b16 %v948
  %v1085 = vunpack.c.l.b16 %v949
  %v1086 = vunpack.c.l.b16 %v950
  %v1087 = vunpack.c.l.b16 %v951
  %v1088 = vunpack.c.l.b16 %v952
  %v1089 = vunpack.c.l.b16 %v953
  %v1090 = vunpack.c.l.b16 %v954
  %v1091 = vunpack.c.l.b16 %v955
  %v1092 = vunpack.c.l.b16 %v956
  %v1093 = vunpack.c.l.b16 %v957
  %v1094 = vunpack.c.l.b16 %v958
  %v1095 = vunpack.c.l.b16 %v959
  %v1096 = vunpack.c.l.b16 %v960
  %v1097 = vunpack.c.l.b16 %v961
  %v1098 = vunpack.c.l.b16 %v962
  %v1099 = vunpack.c.l.b16 %v963
  %v1100 = vunpack.c.l.b16 %v964
  %v1101 = vunpack.c.l.b16 %v965
  %v1102 = vunpack.c.l.b16 %v966
  %v1103 = vunpack.c.l.b16 %v967
  %v1104 = vunpack.c.l.b16 %v968
  %v1105 = vunpack.c.l.b16 %v969
  %v1106 = vunpack.c.l.b16 %v970
  %v1107 = vunpack.c.l.b16 %v971
  %v1108 = vunpack.c.l.b16 %v972
  %v1109 = vunpack.c.l.b16 %v973
  %v1110 = vunpack.c.l.b16 %v974
  %v1111 = vunpack.c.l.b16 %v975
  %v1112 = vunpack.c.l.b16 %v976
  %v1113 = vunpack.c.l.b16 %v977
  %v1114 = vunpack.c.l.b16 %v978
  %v1115 = vunpack.c.l.b16 %v979
  %v1116 = vunpack.c.l.b16 %v980
  %v1117 = vunpack.c.l.b16 %v981
  %v1118 = vunpack.c.l.b16 %v982
  %v1119 = vunpack.c.l.b16 %v983
  %v1120 = vunpack.c.l.b16 %v984
  %v1121 = vunpack.c.l.b16 %v985
  %v1122 = vunpack.c.l.b16 %v986
  %v1123 = vunpack.c.l.b16 %v987
  %v1124 = vunpack.c.l.b16 %v988
  %v1125 = vunpack.c.l.b16 %v989
  %v1126 = vunpack.c.l.b16 %v990
  %v1127 = vunpack.c.l.b16 %v991
  %v1128 = vunpack.c.l.b16 %v992
  %v1129 = vunpack.c.l.b16 %v993
  %v1130 = vunpack.c.l.b16 %v994
  %v1131 = vunpack.c.l.b16 %v995
  %v1132 = vunpack.c.l.b16 %v996
  %v1133 = vunpack.c.l.b16 %v997
  %v1134 = vunpack.c.l.b16 %v998
  %v1135 = vunpack.c.l.b16 %v999
  %v1136 = vunpack.c.l.b16 %v1000
  %v1137 = vunpack.c.l.b16 %v1001
  %v1138 = vunpack.c.l.b16 %v1002
  %v1139 = vunpack.c.l.b16 %v1003
  %v1140 = vunpack.c.l.b16 %v1004
  %v1141 = vunpack.c.l.b16 %v1005
  %v1142 = vunpack.c.l.b16 %v1006
  %v1143 = vunpack.c.l.b16 %v1007
  %v1144 = vunpack.c.l.b16 %v1008
  %v1145 = vunpack.c.l.b16 %v1009
  %v1146 = vunpack.c.l.b16 %v1010
  %v1147 = vunpack.c.l.b16 %v1011
  %v1148 = vpack.c.b16 %v1085, %v1084
  %v1149 = vpack.c.b16 %v1087, %v1086
  %v1150 = vpack.c.b16 %v1089, %v1088
  %v1151 = vpack.c.b16 %v1091, %v1090
  %v1152 = vpack.c.b16 %v1093, %v1092
  %v1153 = vpack.c.b16 %v1095, %v1094
  %v1154 = vpack.c.b16 %v1097, %v1096
  %v1155 = vpack.c.b16 %v1099, %v1098
  %v1156 = vpack.c.b16 %v1101, %v1100
  %v1157 = vpack.c.b16 %v1103, %v1102
  %v1158 = vpack.c.b16 %v1105, %v1104
  %v1159 = vpack.c.b16 %v1107, %v1106
  %v1160 = vpack.c.b16 %v1109, %v1108
  %v1161 = vpack.c.b16 %v1111, %v1110
  %v1162 = vpack.c.b16 %v1113, %v1112
  %v1163 = vpack.c.b16 %v1115, %v1114
  %v1164 = vpack.c.b16 %v1117, %v1116
  %v1165 = vpack.c.b16 %v1119, %v1118
  %v1166 = vpack.c.b16 %v1121, %v1120
  %v1167 = vpack.c.b16 %v1123, %v1122
  %v1168 = vpack.c.b16 %v1125, %v1124
  %v1169 = vpack.c.b16 %v1127, %v1126
  %v1170 = vpack.c.b16 %v1129, %v1128
  %v1171 = vpack.c.b16 %v1131, %v1130
  %v1172 = vpack.c.b16 %v1133, %v1132
  %v1173 = vpack.c.b16 %v1135, %v1134
  %v1174 = vpack.c.b16 %v1137, %v1136
  %v1175 = vpack.c.b16 %v1139, %v1138
  %v1176 = vpack.c.b16 %v1141, %v1140
  %v1177 = vpack.c.b16 %v1143, %v1142
  %v1178 = vpack.c.b16 %v1145, %v1144
  %v1179 = vpack.c.b16 %v1147, %v1146
  %v1188 = vunpack.c.l.b16 %v1012
  %v1189 = vunpack.c.l.b16 %v1013
  %v1190 = vunpack.c.l.b16 %v1014
  %v1191 = vunpack.c.l.b16 %v1015
  %v1192 = vunpack.c.l.b16 %v1016
  %v1193 = vunpack.c.l.b16 %v1017
  %v1194 = vunpack.c.l.b16 %v1018
  %v1195 = vunpack.c.l.b16 %v1019
  %v1196 = vpack.c.b16 %v1189, %v1188
  %v1197 = vpack.c.b16 %v1191, %v1190
  %v1198 = vpack.c.b16 %v1193, %v1192
  %v1199 = vpack.c.b16 %v1195, %v1194
  %v1205 = vsel %vm393, %v1148, 0
  %v1208 = vsel %vm393, %v1149, 0
  %v1211 = vsel %vm393, %v1150, 0
  %v1214 = vsel %vm393, %v1151, 0
  %v1217 = vsel %vm393, %v1152, 0
  %v1220 = vsel %vm393, %v1153, 0
  %v1223 = vsel %vm393, %v1154, 0
  %v1226 = vsel %vm393, %v1155, 0
  %v1229 = vsel %vm393, %v1156, 0
  %v1232 = vsel %vm393, %v1157, 0
  %v1235 = vsel %vm393, %v1158, 0
  %v1238 = vsel %vm393, %v1159, 0
  %v1241 = vsel %vm393, %v1160, 0
  %v1244 = vsel %vm393, %v1161, 0
  %v1247 = vsel %vm393, %v1162, 0
  %v1250 = vsel %vm393, %v1163, 0
  %v1253 = vsel %vm393, %v1164, 0
  %v1256 = vsel %vm393, %v1165, 0
  %v1259 = vsel %vm393, %v1166, 0
  %v1262 = vsel %vm393, %v1167, 0
  %v1265 = vsel %vm393, %v1168, 0
  %v1268 = vsel %vm393, %v1169, 0
  %v1271 = vsel %vm393, %v1170, 0
  %v1274 = vsel %vm393, %v1171, 0
  %v1277 = vsel %vm393, %v1172, 0
  %v1280 = vsel %vm393, %v1173, 0
  %v1283 = vsel %vm393, %v1174, 0
  %v1286 = vsel %vm393, %v1175, 0
  %v1289 = vsel %vm393, %v1176, 0
  %v1292 = vsel %vm393, %v1177, 0
  %v1295 = vsel %vm393, %v1178, 0
  %v1298 = vsel %vm393, %v1179, 0
  %1300 = vmatpush.bf16.msra.mxu0 0
  %1301 = vmatpush.bf16.msra.mxu0 0
  %1302 = vmatpush.bf16.msra.mxu0 0
  %1303 = vmatpush.bf16.msra.mxu0 0
  %1304 = vmatpush.bf16.msra.mxu0 %v1199
  %1305 = vmatpush.bf16.msra.mxu0 %v1198
  %1306 = vmatpush.bf16.msra.mxu0 %v1197
  %1307 = vmatpush.bf16.msra.mxu0 %v1196
  %1308 = vmatmul.bf16.gmra.mxu0 %v1205
  %v1309 = vpop.f32.mrf.mxu0
  %v1310 = vadd.f32 0.0, %v1309
  %v1311 = vpop.f32.mrf.mxu0
  %v1312 = vadd.f32 0.0, %v1311
  %1313 = vmatmul.bf16.gmra.mxu0 %v1208
  %v1314 = vpop.f32.mrf.mxu0
  %v1315 = vadd.f32 0.0, %v1314
  %v1316 = vpop.f32.mrf.mxu0
  %v1317 = vadd.f32 0.0, %v1316
  %1318 = vmatmul.bf16.gmra.mxu0 %v1211
  %v1319 = vpop.f32.mrf.mxu0
  %v1320 = vadd.f32 0.0, %v1319
  %v1321 = vpop.f32.mrf.mxu0
  %v1322 = vadd.f32 0.0, %v1321
  %1323 = vmatmul.bf16.gmra.mxu0 %v1214
  %v1324 = vpop.f32.mrf.mxu0
  %v1325 = vadd.f32 0.0, %v1324
  %v1326 = vpop.f32.mrf.mxu0
  %v1327 = vadd.f32 0.0, %v1326
  %1328 = vmatmul.bf16.gmra.mxu0 %v1217
  %v1329 = vpop.f32.mrf.mxu0
  %v1330 = vadd.f32 0.0, %v1329
  %v1331 = vpop.f32.mrf.mxu0
  %v1332 = vadd.f32 0.0, %v1331
  %1333 = vmatmul.bf16.gmra.mxu0 %v1220
  %v1334 = vpop.f32.mrf.mxu0
  %v1335 = vadd.f32 0.0, %v1334
  %v1336 = vpop.f32.mrf.mxu0
  %v1337 = vadd.f32 0.0, %v1336
  %1338 = vmatmul.bf16.gmra.mxu0 %v1223
  %v1339 = vpop.f32.mrf.mxu0
  %v1340 = vadd.f32 0.0, %v1339
  %v1341 = vpop.f32.mrf.mxu0
  %v1342 = vadd.f32 0.0, %v1341
  %1343 = vmatmul.bf16.gmra.mxu0 %v1226
  %v1344 = vpop.f32.mrf.mxu0
  %v1345 = vadd.f32 0.0, %v1344
  %v1346 = vpop.f32.mrf.mxu0
  %v1347 = vadd.f32 0.0, %v1346
  %1348 = vmatmul.bf16.gmra.mxu0 %v1229
  %v1349 = vpop.f32.mrf.mxu0
  %v1350 = vadd.f32 0.0, %v1349
  %v1351 = vpop.f32.mrf.mxu0
  %v1352 = vadd.f32 0.0, %v1351
  %1353 = vmatmul.bf16.gmra.mxu0 %v1232
  %v1354 = vpop.f32.mrf.mxu0
  %v1355 = vadd.f32 0.0, %v1354
  %v1356 = vpop.f32.mrf.mxu0
  %v1357 = vadd.f32 0.0, %v1356
  %1358 = vmatmul.bf16.gmra.mxu0 %v1235
  %v1359 = vpop.f32.mrf.mxu0
  %v1360 = vadd.f32 0.0, %v1359
  %v1361 = vpop.f32.mrf.mxu0
  %v1362 = vadd.f32 0.0, %v1361
  %1363 = vmatmul.bf16.gmra.mxu0 %v1238
  %v1364 = vpop.f32.mrf.mxu0
  %v1365 = vadd.f32 0.0, %v1364
  %v1366 = vpop.f32.mrf.mxu0
  %v1367 = vadd.f32 0.0, %v1366
  %1368 = vmatmul.bf16.gmra.mxu0 %v1241
  %v1369 = vpop.f32.mrf.mxu0
  %v1370 = vadd.f32 0.0, %v1369
  %v1371 = vpop.f32.mrf.mxu0
  %v1372 = vadd.f32 0.0, %v1371
  %1373 = vmatmul.bf16.gmra.mxu0 %v1244
  %v1374 = vpop.f32.mrf.mxu0
  %v1375 = vadd.f32 0.0, %v1374
  %v1376 = vpop.f32.mrf.mxu0
  %v1377 = vadd.f32 0.0, %v1376
  %1378 = vmatmul.bf16.gmra.mxu0 %v1247
  %v1379 = vpop.f32.mrf.mxu0
  %v1380 = vadd.f32 0.0, %v1379
  %v1381 = vpop.f32.mrf.mxu0
  %v1382 = vadd.f32 0.0, %v1381
  %1383 = vmatmul.bf16.gmra.mxu0 %v1250
  %v1384 = vpop.f32.mrf.mxu0
  %v1385 = vadd.f32 0.0, %v1384
  %v1386 = vpop.f32.mrf.mxu0
  %v1387 = vadd.f32 0.0, %v1386
  %1388 = vmatmul.bf16.gmra.mxu0 %v1253
  %v1389 = vpop.f32.mrf.mxu0
  %v1390 = vadd.f32 0.0, %v1389
  %v1391 = vpop.f32.mrf.mxu0
  %v1392 = vadd.f32 0.0, %v1391
  %1393 = vmatmul.bf16.gmra.mxu0 %v1256
  %v1394 = vpop.f32.mrf.mxu0
  %v1395 = vadd.f32 0.0, %v1394
  %v1396 = vpop.f32.mrf.mxu0
  %v1397 = vadd.f32 0.0, %v1396
  %1398 = vmatmul.bf16.gmra.mxu0 %v1259
  %v1399 = vpop.f32.mrf.mxu0
  %v1400 = vadd.f32 0.0, %v1399
  %v1401 = vpop.f32.mrf.mxu0
  %v1402 = vadd.f32 0.0, %v1401
  %1403 = vmatmul.bf16.gmra.mxu0 %v1262
  %v1404 = vpop.f32.mrf.mxu0
  %v1405 = vadd.f32 0.0, %v1404
  %v1406 = vpop.f32.mrf.mxu0
  %v1407 = vadd.f32 0.0, %v1406
  %1408 = vmatmul.bf16.gmra.mxu0 %v1265
  %v1409 = vpop.f32.mrf.mxu0
  %v1410 = vadd.f32 0.0, %v1409
  %v1411 = vpop.f32.mrf.mxu0
  %v1412 = vadd.f32 0.0, %v1411
  %1413 = vmatmul.bf16.gmra.mxu0 %v1268
  %v1414 = vpop.f32.mrf.mxu0
  %v1415 = vadd.f32 0.0, %v1414
  %v1416 = vpop.f32.mrf.mxu0
  %v1417 = vadd.f32 0.0, %v1416
  %1418 = vmatmul.bf16.gmra.mxu0 %v1271
  %v1419 = vpop.f32.mrf.mxu0
  %v1420 = vadd.f32 0.0, %v1419
  %v1421 = vpop.f32.mrf.mxu0
  %v1422 = vadd.f32 0.0, %v1421
  %1423 = vmatmul.bf16.gmra.mxu0 %v1274
  %v1424 = vpop.f32.mrf.mxu0
  %v1425 = vadd.f32 0.0, %v1424
  %v1426 = vpop.f32.mrf.mxu0
  %v1427 = vadd.f32 0.0, %v1426
  %1428 = vmatmul.bf16.gmra.mxu0 %v1277
  %v1429 = vpop.f32.mrf.mxu0
  %v1430 = vadd.f32 0.0, %v1429
  %v1431 = vpop.f32.mrf.mxu0
  %v1432 = vadd.f32 0.0, %v1431
  %1433 = vmatmul.bf16.gmra.mxu0 %v1280
  %v1434 = vpop.f32.mrf.mxu0
  %v1435 = vadd.f32 0.0, %v1434
  %v1436 = vpop.f32.mrf.mxu0
  %v1437 = vadd.f32 0.0, %v1436
  %1438 = vmatmul.bf16.gmra.mxu0 %v1283
  %v1439 = vpop.f32.mrf.mxu0
  %v1440 = vadd.f32 0.0, %v1439
  %v1441 = vpop.f32.mrf.mxu0
  %v1442 = vadd.f32 0.0, %v1441
  %1443 = vmatmul.bf16.gmra.mxu0 %v1286
  %v1444 = vpop.f32.mrf.mxu0
  %v1445 = vadd.f32 0.0, %v1444
  %v1446 = vpop.f32.mrf.mxu0
  %v1447 = vadd.f32 0.0, %v1446
  %1448 = vmatmul.bf16.gmra.mxu0 %v1289
  %v1449 = vpop.f32.mrf.mxu0
  %v1450 = vadd.f32 0.0, %v1449
  %v1451 = vpop.f32.mrf.mxu0
  %v1452 = vadd.f32 0.0, %v1451
  %1453 = vmatmul.bf16.gmra.mxu0 %v1292
  %v1454 = vpop.f32.mrf.mxu0
  %v1455 = vadd.f32 0.0, %v1454
  %v1456 = vpop.f32.mrf.mxu0
  %v1457 = vadd.f32 0.0, %v1456
  %1458 = vmatmul.bf16.gmra.mxu0 %v1295
  %v1459 = vpop.f32.mrf.mxu0
  %v1460 = vadd.f32 0.0, %v1459
  %v1461 = vpop.f32.mrf.mxu0
  %v1462 = vadd.f32 0.0, %v1461
  %1463 = vmatmul.bf16.gmra.mxu0 %v1298
  %v1464 = vpop.f32.mrf.mxu0
  %v1465 = vadd.f32 0.0, %v1464
  %v1466 = vpop.f32.mrf.mxu0
  %v1467 = vadd.f32 0.0, %v1466
  %1468 = vdwg.mxu0
  %v1469 = vadd.f32 %v789, %v1310
  %v1470 = vadd.f32 %v791, %v1312
  %v1471 = vadd.f32 %v794, %v1315
  %v1472 = vadd.f32 %v796, %v1317
  %v1473 = vadd.f32 %v799, %v1320
  %v1474 = vadd.f32 %v801, %v1322
  %v1475 = vadd.f32 %v804, %v1325
  %v1476 = vadd.f32 %v806, %v1327
  %v1477 = vadd.f32 %v809, %v1330
  %v1478 = vadd.f32 %v811, %v1332
  %v1479 = vadd.f32 %v814, %v1335
  %v1480 = vadd.f32 %v816, %v1337
  %v1481 = vadd.f32 %v819, %v1340
  %v1482 = vadd.f32 %v821, %v1342
  %v1483 = vadd.f32 %v824, %v1345
  %v1484 = vadd.f32 %v826, %v1347
  %v1485 = vadd.f32 %v829, %v1350
  %v1486 = vadd.f32 %v831, %v1352
  %v1487 = vadd.f32 %v834, %v1355
  %v1488 = vadd.f32 %v836, %v1357
  %v1489 = vadd.f32 %v839, %v1360
  %v1490 = vadd.f32 %v841, %v1362
  %v1491 = vadd.f32 %v844, %v1365
  %v1492 = vadd.f32 %v846, %v1367
  %v1493 = vadd.f32 %v849, %v1370
  %v1494 = vadd.f32 %v851, %v1372
  %v1495 = vadd.f32 %v854, %v1375
  %v1496 = vadd.f32 %v856, %v1377
  %v1497 = vadd.f32 %v859, %v1380
  %v1498 = vadd.f32 %v861, %v1382
  %v1499 = vadd.f32 %v864, %v1385
  %v1500 = vadd.f32 %v866, %v1387
  %v1501 = vadd.f32 %v869, %v1390
  %v1502 = vadd.f32 %v871, %v1392
  %v1503 = vadd.f32 %v874, %v1395
  %v1504 = vadd.f32 %v876, %v1397
  %v1505 = vadd.f32 %v879, %v1400
  %v1506 = vadd.f32 %v881, %v1402
  %v1507 = vadd.f32 %v884, %v1405
  %v1508 = vadd.f32 %v886, %v1407
  %v1509 = vadd.f32 %v889, %v1410
  %v1510 = vadd.f32 %v891, %v1412
  %v1511 = vadd.f32 %v894, %v1415
  %v1512 = vadd.f32 %v896, %v1417
  %v1513 = vadd.f32 %v899, %v1420
  %v1514 = vadd.f32 %v901, %v1422
  %v1515 = vadd.f32 %v904, %v1425
  %v1516 = vadd.f32 %v906, %v1427
  %v1517 = vadd.f32 %v909, %v1430
  %v1518 = vadd.f32 %v911, %v1432
  %v1519 = vadd.f32 %v914, %v1435
  %v1520 = vadd.f32 %v916, %v1437
  %v1521 = vadd.f32 %v919, %v1440
  %v1522 = vadd.f32 %v921, %v1442
  %v1523 = vadd.f32 %v924, %v1445
  %v1524 = vadd.f32 %v926, %v1447
  %v1525 = vadd.f32 %v929, %v1450
  %v1526 = vadd.f32 %v931, %v1452
  %v1527 = vadd.f32 %v934, %v1455
  %v1528 = vadd.f32 %v936, %v1457
  %v1529 = vadd.f32 %v939, %v1460
  %v1530 = vadd.f32 %v941, %v1462
  %v1531 = vadd.f32 %v944, %v1465
  %v1532 = vadd.f32 %v946, %v1467
  %v1533 = vld [vmem:[%s4] sm:$0xf]
  %v1534 = vld [vmem:[%s4 + $0x4] sm:$0xf]
  %v1535 = vld [vmem:[%s4 + $0x8] sm:$0xf]
  %v1536 = vld [vmem:[%s4 + $0xc] sm:$0xf]
  %v1537 = vld [vmem:[%s4 + $0x10] sm:$0xf]
  %v1538 = vld [vmem:[%s4 + $0x14] sm:$0xf]
  %v1539 = vld [vmem:[%s4 + $0x18] sm:$0xf]
  %v1540 = vld [vmem:[%s4 + $0x1c] sm:$0xf]
  %v1541 = vld [vmem:[%s4 + $0x20] sm:$0xf]
  %v1542 = vld [vmem:[%s4 + $0x24] sm:$0xf]
  %v1543 = vld [vmem:[%s4 + $0x28] sm:$0xf]
  %v1544 = vld [vmem:[%s4 + $0x2c] sm:$0xf]
  %v1545 = vld [vmem:[%s4 + $0x30] sm:$0xf]
  %v1546 = vld [vmem:[%s4 + $0x34] sm:$0xf]
  %v1547 = vld [vmem:[%s4 + $0x38] sm:$0xf]
  %v1548 = vld [vmem:[%s4 + $0x3c] sm:$0xf]
  %v1549 = vld [vmem:[%s4 + $0x40] sm:$0xf]
  %v1550 = vld [vmem:[%s4 + $0x44] sm:$0xf]
  %v1551 = vld [vmem:[%s4 + $0x48] sm:$0xf]
  %v1552 = vld [vmem:[%s4 + $0x4c] sm:$0xf]
  %v1553 = vld [vmem:[%s4 + $0x50] sm:$0xf]
  %v1554 = vld [vmem:[%s4 + $0x54] sm:$0xf]
  %v1555 = vld [vmem:[%s4 + $0x58] sm:$0xf]
  %v1556 = vld [vmem:[%s4 + $0x5c] sm:$0xf]
  %v1557 = vld [vmem:[%s4 + $0x60] sm:$0xf]
  %v1558 = vld [vmem:[%s4 + $0x64] sm:$0xf]
  %v1559 = vld [vmem:[%s4 + $0x68] sm:$0xf]
  %v1560 = vld [vmem:[%s4 + $0x6c] sm:$0xf]
  %v1561 = vld [vmem:[%s4 + $0x70] sm:$0xf]
  %v1562 = vld [vmem:[%s4 + $0x74] sm:$0xf]
  %v1563 = vld [vmem:[%s4 + $0x78] sm:$0xf]
  %v1564 = vld [vmem:[%s4 + $0x7c] sm:$0xf]
  %v1565 = vld [vmem:[%s4 + $0x80] sm:$0xf]
  %v1566 = vld [vmem:[%s4 + $0x84] sm:$0xf]
  %v1567 = vld [vmem:[%s4 + $0x88] sm:$0xf]
  %v1568 = vld [vmem:[%s4 + $0x8c] sm:$0xf]
  %v1569 = vld [vmem:[%s4 + $0x90] sm:$0xf]
  %v1570 = vld [vmem:[%s4 + $0x94] sm:$0xf]
  %v1571 = vld [vmem:[%s4 + $0x98] sm:$0xf]
  %v1572 = vld [vmem:[%s4 + $0x9c] sm:$0xf]
  %v1573 = vld [vmem:[%s4 + $0xa0] sm:$0xf]
  %v1574 = vld [vmem:[%s4 + $0xa4] sm:$0xf]
  %v1575 = vld [vmem:[%s4 + $0xa8] sm:$0xf]
  %v1576 = vld [vmem:[%s4 + $0xac] sm:$0xf]
  %v1577 = vld [vmem:[%s4 + $0xb0] sm:$0xf]
  %v1578 = vld [vmem:[%s4 + $0xb4] sm:$0xf]
  %v1579 = vld [vmem:[%s4 + $0xb8] sm:$0xf]
  %v1580 = vld [vmem:[%s4 + $0xbc] sm:$0xf]
  %v1581 = vld [vmem:[%s4 + $0xc0] sm:$0xf]
  %v1582 = vld [vmem:[%s4 + $0xc4] sm:$0xf]
  %v1583 = vld [vmem:[%s4 + $0xc8] sm:$0xf]
  %v1584 = vld [vmem:[%s4 + $0xcc] sm:$0xf]
  %v1585 = vld [vmem:[%s4 + $0xd0] sm:$0xf]
  %v1586 = vld [vmem:[%s4 + $0xd4] sm:$0xf]
  %v1587 = vld [vmem:[%s4 + $0xd8] sm:$0xf]
  %v1588 = vld [vmem:[%s4 + $0xdc] sm:$0xf]
  %v1589 = vld [vmem:[%s4 + $0xe0] sm:$0xf]
  %v1590 = vld [vmem:[%s4 + $0xe4] sm:$0xf]
  %v1591 = vld [vmem:[%s4 + $0xe8] sm:$0xf]
  %v1592 = vld [vmem:[%s4 + $0xec] sm:$0xf]
  %v1593 = vld [vmem:[%s4 + $0xf0] sm:$0xf]
  %v1594 = vld [vmem:[%s4 + $0xf4] sm:$0xf]
  %v1595 = vld [vmem:[%s4 + $0xf8] sm:$0xf]
  %v1596 = vld [vmem:[%s4 + $0xfc] sm:$0xf]
  %v1597 = vld [vmem:[%s5 + $0x60] sm:$0xf]
  %v1598 = vld [vmem:[%s5 + $0x64] sm:$0xf]
  %v1599 = vld [vmem:[%s5 + $0x68] sm:$0xf]
  %v1600 = vld [vmem:[%s5 + $0x6c] sm:$0xf]
  %v1601 = vld [vmem:[%s5 + $0x70] sm:$0xf]
  %v1602 = vld [vmem:[%s5 + $0x74] sm:$0xf]
  %v1603 = vld [vmem:[%s5 + $0x78] sm:$0xf]
  %v1604 = vld [vmem:[%s5 + $0x7c] sm:$0xf]
  %v1669 = vunpack.c.l.b16 %v1533
  %v1670 = vunpack.c.l.b16 %v1534
  %v1671 = vunpack.c.l.b16 %v1535
  %v1672 = vunpack.c.l.b16 %v1536
  %v1673 = vunpack.c.l.b16 %v1537
  %v1674 = vunpack.c.l.b16 %v1538
  %v1675 = vunpack.c.l.b16 %v1539
  %v1676 = vunpack.c.l.b16 %v1540
  %v1677 = vunpack.c.l.b16 %v1541
  %v1678 = vunpack.c.l.b16 %v1542
  %v1679 = vunpack.c.l.b16 %v1543
  %v1680 = vunpack.c.l.b16 %v1544
  %v1681 = vunpack.c.l.b16 %v1545
  %v1682 = vunpack.c.l.b16 %v1546
  %v1683 = vunpack.c.l.b16 %v1547
  %v1684 = vunpack.c.l.b16 %v1548
  %v1685 = vunpack.c.l.b16 %v1549
  %v1686 = vunpack.c.l.b16 %v1550
  %v1687 = vunpack.c.l.b16 %v1551
  %v1688 = vunpack.c.l.b16 %v1552
  %v1689 = vunpack.c.l.b16 %v1553
  %v1690 = vunpack.c.l.b16 %v1554
  %v1691 = vunpack.c.l.b16 %v1555
  %v1692 = vunpack.c.l.b16 %v1556
  %v1693 = vunpack.c.l.b16 %v1557
  %v1694 = vunpack.c.l.b16 %v1558
  %v1695 = vunpack.c.l.b16 %v1559
  %v1696 = vunpack.c.l.b16 %v1560
  %v1697 = vunpack.c.l.b16 %v1561
  %v1698 = vunpack.c.l.b16 %v1562
  %v1699 = vunpack.c.l.b16 %v1563
  %v1700 = vunpack.c.l.b16 %v1564
  %v1701 = vunpack.c.l.b16 %v1565
  %v1702 = vunpack.c.l.b16 %v1566
  %v1703 = vunpack.c.l.b16 %v1567
  %v1704 = vunpack.c.l.b16 %v1568
  %v1705 = vunpack.c.l.b16 %v1569
  %v1706 = vunpack.c.l.b16 %v1570
  %v1707 = vunpack.c.l.b16 %v1571
  %v1708 = vunpack.c.l.b16 %v1572
  %v1709 = vunpack.c.l.b16 %v1573
  %v1710 = vunpack.c.l.b16 %v1574
  %v1711 = vunpack.c.l.b16 %v1575
  %v1712 = vunpack.c.l.b16 %v1576
  %v1713 = vunpack.c.l.b16 %v1577
  %v1714 = vunpack.c.l.b16 %v1578
  %v1715 = vunpack.c.l.b16 %v1579
  %v1716 = vunpack.c.l.b16 %v1580
  %v1717 = vunpack.c.l.b16 %v1581
  %v1718 = vunpack.c.l.b16 %v1582
  %v1719 = vunpack.c.l.b16 %v1583
  %v1720 = vunpack.c.l.b16 %v1584
  %v1721 = vunpack.c.l.b16 %v1585
  %v1722 = vunpack.c.l.b16 %v1586
  %v1723 = vunpack.c.l.b16 %v1587
  %v1724 = vunpack.c.l.b16 %v1588
  %v1725 = vunpack.c.l.b16 %v1589
  %v1726 = vunpack.c.l.b16 %v1590
  %v1727 = vunpack.c.l.b16 %v1591
  %v1728 = vunpack.c.l.b16 %v1592
  %v1729 = vunpack.c.l.b16 %v1593
  %v1730 = vunpack.c.l.b16 %v1594
  %v1731 = vunpack.c.l.b16 %v1595
  %v1732 = vunpack.c.l.b16 %v1596
  %v1733 = vpack.c.b16 %v1670, %v1669
  %v1734 = vpack.c.b16 %v1672, %v1671
  %v1735 = vpack.c.b16 %v1674, %v1673
  %v1736 = vpack.c.b16 %v1676, %v1675
  %v1737 = vpack.c.b16 %v1678, %v1677
  %v1738 = vpack.c.b16 %v1680, %v1679
  %v1739 = vpack.c.b16 %v1682, %v1681
  %v1740 = vpack.c.b16 %v1684, %v1683
  %v1741 = vpack.c.b16 %v1686, %v1685
  %v1742 = vpack.c.b16 %v1688, %v1687
  %v1743 = vpack.c.b16 %v1690, %v1689
  %v1744 = vpack.c.b16 %v1692, %v1691
  %v1745 = vpack.c.b16 %v1694, %v1693
  %v1746 = vpack.c.b16 %v1696, %v1695
  %v1747 = vpack.c.b16 %v1698, %v1697
  %v1748 = vpack.c.b16 %v1700, %v1699
  %v1749 = vpack.c.b16 %v1702, %v1701
  %v1750 = vpack.c.b16 %v1704, %v1703
  %v1751 = vpack.c.b16 %v1706, %v1705
  %v1752 = vpack.c.b16 %v1708, %v1707
  %v1753 = vpack.c.b16 %v1710, %v1709
  %v1754 = vpack.c.b16 %v1712, %v1711
  %v1755 = vpack.c.b16 %v1714, %v1713
  %v1756 = vpack.c.b16 %v1716, %v1715
  %v1757 = vpack.c.b16 %v1718, %v1717
  %v1758 = vpack.c.b16 %v1720, %v1719
  %v1759 = vpack.c.b16 %v1722, %v1721
  %v1760 = vpack.c.b16 %v1724, %v1723
  %v1761 = vpack.c.b16 %v1726, %v1725
  %v1762 = vpack.c.b16 %v1728, %v1727
  %v1763 = vpack.c.b16 %v1730, %v1729
  %v1764 = vpack.c.b16 %v1732, %v1731
  %v1773 = vunpack.c.l.b16 %v1597
  %v1774 = vunpack.c.l.b16 %v1598
  %v1775 = vunpack.c.l.b16 %v1599
  %v1776 = vunpack.c.l.b16 %v1600
  %v1777 = vunpack.c.l.b16 %v1601
  %v1778 = vunpack.c.l.b16 %v1602
  %v1779 = vunpack.c.l.b16 %v1603
  %v1780 = vunpack.c.l.b16 %v1604
  %v1781 = vpack.c.b16 %v1774, %v1773
  %v1782 = vpack.c.b16 %v1776, %v1775
  %v1783 = vpack.c.b16 %v1778, %v1777
  %v1784 = vpack.c.b16 %v1780, %v1779
  %v1790 = vsel %vm393, %v1733, 0
  %v1793 = vsel %vm393, %v1734, 0
  %v1796 = vsel %vm393, %v1735, 0
  %v1799 = vsel %vm393, %v1736, 0
  %v1802 = vsel %vm393, %v1737, 0
  %v1805 = vsel %vm393, %v1738, 0
  %v1808 = vsel %vm393, %v1739, 0
  %v1811 = vsel %vm393, %v1740, 0
  %v1814 = vsel %vm393, %v1741, 0
  %v1817 = vsel %vm393, %v1742, 0
  %v1820 = vsel %vm393, %v1743, 0
  %v1823 = vsel %vm393, %v1744, 0
  %v1826 = vsel %vm393, %v1745, 0
  %v1829 = vsel %vm393, %v1746, 0
  %v1832 = vsel %vm393, %v1747, 0
  %v1835 = vsel %vm393, %v1748, 0
  %v1838 = vsel %vm393, %v1749, 0
  %v1841 = vsel %vm393, %v1750, 0
  %v1844 = vsel %vm393, %v1751, 0
  %v1847 = vsel %vm393, %v1752, 0
  %v1850 = vsel %vm393, %v1753, 0
  %v1853 = vsel %vm393, %v1754, 0
  %v1856 = vsel %vm393, %v1755, 0
  %v1859 = vsel %vm393, %v1756, 0
  %v1862 = vsel %vm393, %v1757, 0
  %v1865 = vsel %vm393, %v1758, 0
  %v1868 = vsel %vm393, %v1759, 0
  %v1871 = vsel %vm393, %v1760, 0
  %v1874 = vsel %vm393, %v1761, 0
  %v1877 = vsel %vm393, %v1762, 0
  %v1880 = vsel %vm393, %v1763, 0
  %v1883 = vsel %vm393, %v1764, 0
  %1885 = vmatpush.bf16.msra.mxu0 0
  %1886 = vmatpush.bf16.msra.mxu0 0
  %1887 = vmatpush.bf16.msra.mxu0 0
  %1888 = vmatpush.bf16.msra.mxu0 0
  %1889 = vmatpush.bf16.msra.mxu0 %v1784
  %1890 = vmatpush.bf16.msra.mxu0 %v1783
  %1891 = vmatpush.bf16.msra.mxu0 %v1782
  %1892 = vmatpush.bf16.msra.mxu0 %v1781
  %1893 = vmatmul.bf16.gmra.mxu0 %v1790
  %v1894 = vpop.f32.mrf.mxu0
  %v1895 = vadd.f32 0.0, %v1894
  %v1896 = vpop.f32.mrf.mxu0
  %v1897 = vadd.f32 0.0, %v1896
  %1898 = vmatmul.bf16.gmra.mxu0 %v1793
  %v1899 = vpop.f32.mrf.mxu0
  %v1900 = vadd.f32 0.0, %v1899
  %v1901 = vpop.f32.mrf.mxu0
  %v1902 = vadd.f32 0.0, %v1901
  %1903 = vmatmul.bf16.gmra.mxu0 %v1796
  %v1904 = vpop.f32.mrf.mxu0
  %v1905 = vadd.f32 0.0, %v1904
  %v1906 = vpop.f32.mrf.mxu0
  %v1907 = vadd.f32 0.0, %v1906
  %1908 = vmatmul.bf16.gmra.mxu0 %v1799
  %v1909 = vpop.f32.mrf.mxu0
  %v1910 = vadd.f32 0.0, %v1909
  %v1911 = vpop.f32.mrf.mxu0
  %v1912 = vadd.f32 0.0, %v1911
  %1913 = vmatmul.bf16.gmra.mxu0 %v1802
  %v1914 = vpop.f32.mrf.mxu0
  %v1915 = vadd.f32 0.0, %v1914
  %v1916 = vpop.f32.mrf.mxu0
  %v1917 = vadd.f32 0.0, %v1916
  %1918 = vmatmul.bf16.gmra.mxu0 %v1805
  %v1919 = vpop.f32.mrf.mxu0
  %v1920 = vadd.f32 0.0, %v1919
  %v1921 = vpop.f32.mrf.mxu0
  %v1922 = vadd.f32 0.0, %v1921
  %1923 = vmatmul.bf16.gmra.mxu0 %v1808
  %v1924 = vpop.f32.mrf.mxu0
  %v1925 = vadd.f32 0.0, %v1924
  %v1926 = vpop.f32.mrf.mxu0
  %v1927 = vadd.f32 0.0, %v1926
  %1928 = vmatmul.bf16.gmra.mxu0 %v1811
  %v1929 = vpop.f32.mrf.mxu0
  %v1930 = vadd.f32 0.0, %v1929
  %v1931 = vpop.f32.mrf.mxu0
  %v1932 = vadd.f32 0.0, %v1931
  %1933 = vmatmul.bf16.gmra.mxu0 %v1814
  %v1934 = vpop.f32.mrf.mxu0
  %v1935 = vadd.f32 0.0, %v1934
  %v1936 = vpop.f32.mrf.mxu0
  %v1937 = vadd.f32 0.0, %v1936
  %1938 = vmatmul.bf16.gmra.mxu0 %v1817
  %v1939 = vpop.f32.mrf.mxu0
  %v1940 = vadd.f32 0.0, %v1939
  %v1941 = vpop.f32.mrf.mxu0
  %v1942 = vadd.f32 0.0, %v1941
  %1943 = vmatmul.bf16.gmra.mxu0 %v1820
  %v1944 = vpop.f32.mrf.mxu0
  %v1945 = vadd.f32 0.0, %v1944
  %v1946 = vpop.f32.mrf.mxu0
  %v1947 = vadd.f32 0.0, %v1946
  %1948 = vmatmul.bf16.gmra.mxu0 %v1823
  %v1949 = vpop.f32.mrf.mxu0
  %v1950 = vadd.f32 0.0, %v1949
  %v1951 = vpop.f32.mrf.mxu0
  %v1952 = vadd.f32 0.0, %v1951
  %1953 = vmatmul.bf16.gmra.mxu0 %v1826
  %v1954 = vpop.f32.mrf.mxu0
  %v1955 = vadd.f32 0.0, %v1954
  %v1956 = vpop.f32.mrf.mxu0
  %v1957 = vadd.f32 0.0, %v1956
  %1958 = vmatmul.bf16.gmra.mxu0 %v1829
  %v1959 = vpop.f32.mrf.mxu0
  %v1960 = vadd.f32 0.0, %v1959
  %v1961 = vpop.f32.mrf.mxu0
  %v1962 = vadd.f32 0.0, %v1961
  %1963 = vmatmul.bf16.gmra.mxu0 %v1832
  %v1964 = vpop.f32.mrf.mxu0
  %v1965 = vadd.f32 0.0, %v1964
  %v1966 = vpop.f32.mrf.mxu0
  %v1967 = vadd.f32 0.0, %v1966
  %1968 = vmatmul.bf16.gmra.mxu0 %v1835
  %v1969 = vpop.f32.mrf.mxu0
  %v1970 = vadd.f32 0.0, %v1969
  %v1971 = vpop.f32.mrf.mxu0
  %v1972 = vadd.f32 0.0, %v1971
  %1973 = vmatmul.bf16.gmra.mxu0 %v1838
  %v1974 = vpop.f32.mrf.mxu0
  %v1975 = vadd.f32 0.0, %v1974
  %v1976 = vpop.f32.mrf.mxu0
  %v1977 = vadd.f32 0.0, %v1976
  %1978 = vmatmul.bf16.gmra.mxu0 %v1841
  %v1979 = vpop.f32.mrf.mxu0
  %v1980 = vadd.f32 0.0, %v1979
  %v1981 = vpop.f32.mrf.mxu0
  %v1982 = vadd.f32 0.0, %v1981
  %1983 = vmatmul.bf16.gmra.mxu0 %v1844
  %v1984 = vpop.f32.mrf.mxu0
  %v1985 = vadd.f32 0.0, %v1984
  %v1986 = vpop.f32.mrf.mxu0
  %v1987 = vadd.f32 0.0, %v1986
  %1988 = vmatmul.bf16.gmra.mxu0 %v1847
  %v1989 = vpop.f32.mrf.mxu0
  %v1990 = vadd.f32 0.0, %v1989
  %v1991 = vpop.f32.mrf.mxu0
  %v1992 = vadd.f32 0.0, %v1991
  %1993 = vmatmul.bf16.gmra.mxu0 %v1850
  %v1994 = vpop.f32.mrf.mxu0
  %v1995 = vadd.f32 0.0, %v1994
  %v1996 = vpop.f32.mrf.mxu0
  %v1997 = vadd.f32 0.0, %v1996
  %1998 = vmatmul.bf16.gmra.mxu0 %v1853
  %v1999 = vpop.f32.mrf.mxu0
  %v2000 = vadd.f32 0.0, %v1999
  %v2001 = vpop.f32.mrf.mxu0
  %v2002 = vadd.f32 0.0, %v2001
  %2003 = vmatmul.bf16.gmra.mxu0 %v1856
  %v2004 = vpop.f32.mrf.mxu0
  %v2005 = vadd.f32 0.0, %v2004
  %v2006 = vpop.f32.mrf.mxu0
  %v2007 = vadd.f32 0.0, %v2006
  %2008 = vmatmul.bf16.gmra.mxu0 %v1859
  %v2009 = vpop.f32.mrf.mxu0
  %v2010 = vadd.f32 0.0, %v2009
  %v2011 = vpop.f32.mrf.mxu0
  %v2012 = vadd.f32 0.0, %v2011
  %2013 = vmatmul.bf16.gmra.mxu0 %v1862
  %v2014 = vpop.f32.mrf.mxu0
  %v2015 = vadd.f32 0.0, %v2014
  %v2016 = vpop.f32.mrf.mxu0
  %v2017 = vadd.f32 0.0, %v2016
  %2018 = vmatmul.bf16.gmra.mxu0 %v1865
  %v2019 = vpop.f32.mrf.mxu0
  %v2020 = vadd.f32 0.0, %v2019
  %v2021 = vpop.f32.mrf.mxu0
  %v2022 = vadd.f32 0.0, %v2021
  %2023 = vmatmul.bf16.gmra.mxu0 %v1868
  %v2024 = vpop.f32.mrf.mxu0
  %v2025 = vadd.f32 0.0, %v2024
  %v2026 = vpop.f32.mrf.mxu0
  %v2027 = vadd.f32 0.0, %v2026
  %2028 = vmatmul.bf16.gmra.mxu0 %v1871
  %v2029 = vpop.f32.mrf.mxu0
  %v2030 = vadd.f32 0.0, %v2029
  %v2031 = vpop.f32.mrf.mxu0
  %v2032 = vadd.f32 0.0, %v2031
  %2033 = vmatmul.bf16.gmra.mxu0 %v1874
  %v2034 = vpop.f32.mrf.mxu0
  %v2035 = vadd.f32 0.0, %v2034
  %v2036 = vpop.f32.mrf.mxu0
  %v2037 = vadd.f32 0.0, %v2036
  %2038 = vmatmul.bf16.gmra.mxu0 %v1877
  %v2039 = vpop.f32.mrf.mxu0
  %v2040 = vadd.f32 0.0, %v2039
  %v2041 = vpop.f32.mrf.mxu0
  %v2042 = vadd.f32 0.0, %v2041
  %2043 = vmatmul.bf16.gmra.mxu0 %v1880
  %v2044 = vpop.f32.mrf.mxu0
  %v2045 = vadd.f32 0.0, %v2044
  %v2046 = vpop.f32.mrf.mxu0
  %v2047 = vadd.f32 0.0, %v2046
  %2048 = vmatmul.bf16.gmra.mxu0 %v1883
  %v2049 = vpop.f32.mrf.mxu0
  %v2050 = vadd.f32 0.0, %v2049
  %v2051 = vpop.f32.mrf.mxu0
  %v2052 = vadd.f32 0.0, %v2051
  %2053 = vdwg.mxu0
  %v2054 = vadd.f32 %v1469, %v1895
  %v2055 = vadd.f32 %v1470, %v1897
  %v2056 = vadd.f32 %v1471, %v1900
  %v2057 = vadd.f32 %v1472, %v1902
  %v2058 = vadd.f32 %v1473, %v1905
  %v2059 = vadd.f32 %v1474, %v1907
  %v2060 = vadd.f32 %v1475, %v1910
  %v2061 = vadd.f32 %v1476, %v1912
  %v2062 = vadd.f32 %v1477, %v1915
  %v2063 = vadd.f32 %v1478, %v1917
  %v2064 = vadd.f32 %v1479, %v1920
  %v2065 = vadd.f32 %v1480, %v1922
  %v2066 = vadd.f32 %v1481, %v1925
  %v2067 = vadd.f32 %v1482, %v1927
  %v2068 = vadd.f32 %v1483, %v1930
  %v2069 = vadd.f32 %v1484, %v1932
  %v2070 = vadd.f32 %v1485, %v1935
  %v2071 = vadd.f32 %v1486, %v1937
  %v2072 = vadd.f32 %v1487, %v1940
  %v2073 = vadd.f32 %v1488, %v1942
  %v2074 = vadd.f32 %v1489, %v1945
  %v2075 = vadd.f32 %v1490, %v1947
  %v2076 = vadd.f32 %v1491, %v1950
  %v2077 = vadd.f32 %v1492, %v1952
  %v2078 = vadd.f32 %v1493, %v1955
  %v2079 = vadd.f32 %v1494, %v1957
  %v2080 = vadd.f32 %v1495, %v1960
  %v2081 = vadd.f32 %v1496, %v1962
  %v2082 = vadd.f32 %v1497, %v1965
  %v2083 = vadd.f32 %v1498, %v1967
  %v2084 = vadd.f32 %v1499, %v1970
  %v2085 = vadd.f32 %v1500, %v1972
  %v2086 = vadd.f32 %v1501, %v1975
  %v2087 = vadd.f32 %v1502, %v1977
  %v2088 = vadd.f32 %v1503, %v1980
  %v2089 = vadd.f32 %v1504, %v1982
  %v2090 = vadd.f32 %v1505, %v1985
  %v2091 = vadd.f32 %v1506, %v1987
  %v2092 = vadd.f32 %v1507, %v1990
  %v2093 = vadd.f32 %v1508, %v1992
  %v2094 = vadd.f32 %v1509, %v1995
  %v2095 = vadd.f32 %v1510, %v1997
  %v2096 = vadd.f32 %v1511, %v2000
  %v2097 = vadd.f32 %v1512, %v2002
  %v2098 = vadd.f32 %v1513, %v2005
  %v2099 = vadd.f32 %v1514, %v2007
  %v2100 = vadd.f32 %v1515, %v2010
  %v2101 = vadd.f32 %v1516, %v2012
  %v2102 = vadd.f32 %v1517, %v2015
  %v2103 = vadd.f32 %v1518, %v2017
  %v2104 = vadd.f32 %v1519, %v2020
  %v2105 = vadd.f32 %v1520, %v2022
  %v2106 = vadd.f32 %v1521, %v2025
  %v2107 = vadd.f32 %v1522, %v2027
  %v2108 = vadd.f32 %v1523, %v2030
  %v2109 = vadd.f32 %v1524, %v2032
  %v2110 = vadd.f32 %v1525, %v2035
  %v2111 = vadd.f32 %v1526, %v2037
  %v2112 = vadd.f32 %v1527, %v2040
  %v2113 = vadd.f32 %v1528, %v2042
  %v2114 = vadd.f32 %v1529, %v2045
  %v2115 = vadd.f32 %v1530, %v2047
  %v2116 = vadd.f32 %v1531, %v2050
  %v2117 = vadd.f32 %v1532, %v2052
  %v2118 = vld [vmem:[%s6] sm:$0x1]
  %v2120 = vperm.slane %v2118, 0
  %v2122 = vadd.f32 %v2054, %v2120
  %v2123 = vadd.f32 %v2055, %v2120
  %v2124 = vadd.f32 %v2056, %v2120
  %v2125 = vadd.f32 %v2057, %v2120
  %v2126 = vadd.f32 %v2058, %v2120
  %v2127 = vadd.f32 %v2059, %v2120
  %v2128 = vadd.f32 %v2060, %v2120
  %v2129 = vadd.f32 %v2061, %v2120
  %v2130 = vadd.f32 %v2062, %v2120
  %v2131 = vadd.f32 %v2063, %v2120
  %v2132 = vadd.f32 %v2064, %v2120
  %v2133 = vadd.f32 %v2065, %v2120
  %v2134 = vadd.f32 %v2066, %v2120
  %v2135 = vadd.f32 %v2067, %v2120
  %v2136 = vadd.f32 %v2068, %v2120
  %v2137 = vadd.f32 %v2069, %v2120
  %v2138 = vadd.f32 %v2070, %v2120
  %v2139 = vadd.f32 %v2071, %v2120
  %v2140 = vadd.f32 %v2072, %v2120
  %v2141 = vadd.f32 %v2073, %v2120
  %v2142 = vadd.f32 %v2074, %v2120
  %v2143 = vadd.f32 %v2075, %v2120
  %v2144 = vadd.f32 %v2076, %v2120
  %v2145 = vadd.f32 %v2077, %v2120
  %v2146 = vadd.f32 %v2078, %v2120
  %v2147 = vadd.f32 %v2079, %v2120
  %v2148 = vadd.f32 %v2080, %v2120
  %v2149 = vadd.f32 %v2081, %v2120
  %v2150 = vadd.f32 %v2082, %v2120
  %v2151 = vadd.f32 %v2083, %v2120
  %v2152 = vadd.f32 %v2084, %v2120
  %v2153 = vadd.f32 %v2085, %v2120
  %v2154 = vadd.f32 %v2086, %v2120
  %v2155 = vadd.f32 %v2087, %v2120
  %v2156 = vadd.f32 %v2088, %v2120
  %v2157 = vadd.f32 %v2089, %v2120
  %v2158 = vadd.f32 %v2090, %v2120
  %v2159 = vadd.f32 %v2091, %v2120
  %v2160 = vadd.f32 %v2092, %v2120
  %v2161 = vadd.f32 %v2093, %v2120
  %v2162 = vadd.f32 %v2094, %v2120
  %v2163 = vadd.f32 %v2095, %v2120
  %v2164 = vadd.f32 %v2096, %v2120
  %v2165 = vadd.f32 %v2097, %v2120
  %v2166 = vadd.f32 %v2098, %v2120
  %v2167 = vadd.f32 %v2099, %v2120
  %v2168 = vadd.f32 %v2100, %v2120
  %v2169 = vadd.f32 %v2101, %v2120
  %v2170 = vadd.f32 %v2102, %v2120
  %v2171 = vadd.f32 %v2103, %v2120
  %v2172 = vadd.f32 %v2104, %v2120
  %v2173 = vadd.f32 %v2105, %v2120
  %v2174 = vadd.f32 %v2106, %v2120
  %v2175 = vadd.f32 %v2107, %v2120
  %v2176 = vadd.f32 %v2108, %v2120
  %v2177 = vadd.f32 %v2109, %v2120
  %v2178 = vadd.f32 %v2110, %v2120
  %v2179 = vadd.f32 %v2111, %v2120
  %v2180 = vadd.f32 %v2112, %v2120
  %v2181 = vadd.f32 %v2113, %v2120
  %v2182 = vadd.f32 %v2114, %v2120
  %v2183 = vadd.f32 %v2115, %v2120
  %v2184 = vadd.f32 %v2116, %v2120
  %v2185 = vadd.f32 %v2117, %v2120
  %v2186 = vpack.c.bf16 %v2123, %v2122
  %v2187 = vpack.c.bf16 %v2125, %v2124
  %v2188 = vpack.c.bf16 %v2127, %v2126
  %v2189 = vpack.c.bf16 %v2129, %v2128
  %v2190 = vpack.c.bf16 %v2131, %v2130
  %v2191 = vpack.c.bf16 %v2133, %v2132
  %v2192 = vpack.c.bf16 %v2135, %v2134
  %v2193 = vpack.c.bf16 %v2137, %v2136
  %v2194 = vpack.c.bf16 %v2139, %v2138
  %v2195 = vpack.c.bf16 %v2141, %v2140
  %v2196 = vpack.c.bf16 %v2143, %v2142
  %v2197 = vpack.c.bf16 %v2145, %v2144
  %v2198 = vpack.c.bf16 %v2147, %v2146
  %v2199 = vpack.c.bf16 %v2149, %v2148
  %v2200 = vpack.c.bf16 %v2151, %v2150
  %v2201 = vpack.c.bf16 %v2153, %v2152
  %v2202 = vpack.c.bf16 %v2155, %v2154
  %v2203 = vpack.c.bf16 %v2157, %v2156
  %v2204 = vpack.c.bf16 %v2159, %v2158
  %v2205 = vpack.c.bf16 %v2161, %v2160
  %v2206 = vpack.c.bf16 %v2163, %v2162
  %v2207 = vpack.c.bf16 %v2165, %v2164
  %v2208 = vpack.c.bf16 %v2167, %v2166
  %v2209 = vpack.c.bf16 %v2169, %v2168
  %v2210 = vpack.c.bf16 %v2171, %v2170
  %v2211 = vpack.c.bf16 %v2173, %v2172
  %v2212 = vpack.c.bf16 %v2175, %v2174
  %v2213 = vpack.c.bf16 %v2177, %v2176
  %v2214 = vpack.c.bf16 %v2179, %v2178
  %v2215 = vpack.c.bf16 %v2181, %v2180
  %v2216 = vpack.c.bf16 %v2183, %v2182
  %v2217 = vpack.c.bf16 %v2185, %v2184
  %v2218 = vld [vmem:[%s0] sm:$0xff]
  %v2219 = vld [vmem:[%s0 + $0x8] sm:$0xff]
  %v2220 = vld [vmem:[%s0 + $0x10] sm:$0xff]
  %v2221 = vld [vmem:[%s0 + $0x18] sm:$0xff]
  %v2222 = vld [vmem:[%s0 + $0x20] sm:$0xff]
  %v2223 = vld [vmem:[%s0 + $0x28] sm:$0xff]
  %v2224 = vld [vmem:[%s0 + $0x30] sm:$0xff]
  %v2225 = vld [vmem:[%s0 + $0x38] sm:$0xff]
  %v2226 = vld [vmem:[%s0 + $0x40] sm:$0xff]
  %v2227 = vld [vmem:[%s0 + $0x48] sm:$0xff]
  %v2228 = vld [vmem:[%s0 + $0x50] sm:$0xff]
  %v2229 = vld [vmem:[%s0 + $0x58] sm:$0xff]
  %v2230 = vld [vmem:[%s0 + $0x60] sm:$0xff]
  %v2231 = vld [vmem:[%s0 + $0x68] sm:$0xff]
  %v2232 = vld [vmem:[%s0 + $0x70] sm:$0xff]
  %v2233 = vld [vmem:[%s0 + $0x78] sm:$0xff]
  %v2234 = vld [vmem:[%s0 + $0x80] sm:$0xff]
  %v2235 = vld [vmem:[%s0 + $0x88] sm:$0xff]
  %v2236 = vld [vmem:[%s0 + $0x90] sm:$0xff]
  %v2237 = vld [vmem:[%s0 + $0x98] sm:$0xff]
  %v2238 = vld [vmem:[%s0 + $0xa0] sm:$0xff]
  %v2239 = vld [vmem:[%s0 + $0xa8] sm:$0xff]
  %v2240 = vld [vmem:[%s0 + $0xb0] sm:$0xff]
  %v2241 = vld [vmem:[%s0 + $0xb8] sm:$0xff]
  %v2242 = vld [vmem:[%s0 + $0xc0] sm:$0xff]
  %v2243 = vld [vmem:[%s0 + $0xc8] sm:$0xff]
  %v2244 = vld [vmem:[%s0 + $0xd0] sm:$0xff]
  %v2245 = vld [vmem:[%s0 + $0xd8] sm:$0xff]
  %v2246 = vld [vmem:[%s0 + $0xe0] sm:$0xff]
  %v2247 = vld [vmem:[%s0 + $0xe8] sm:$0xff]
  %v2248 = vld [vmem:[%s0 + $0xf0] sm:$0xff]
  %v2249 = vld [vmem:[%s0 + $0xf8] sm:$0xff]
  %v2250 = vld [vmem:[%s0 + $0x100] sm:$0xff]
  %v2251 = vld [vmem:[%s0 + $0x108] sm:$0xff]
  %v2252 = vld [vmem:[%s0 + $0x110] sm:$0xff]
  %v2253 = vld [vmem:[%s0 + $0x118] sm:$0xff]
  %v2254 = vld [vmem:[%s0 + $0x120] sm:$0xff]
  %v2255 = vld [vmem:[%s0 + $0x128] sm:$0xff]
  %v2256 = vld [vmem:[%s0 + $0x130] sm:$0xff]
  %v2257 = vld [vmem:[%s0 + $0x138] sm:$0xff]
  %v2258 = vld [vmem:[%s0 + $0x140] sm:$0xff]
  %v2259 = vld [vmem:[%s0 + $0x148] sm:$0xff]
  %v2260 = vld [vmem:[%s0 + $0x150] sm:$0xff]
  %v2261 = vld [vmem:[%s0 + $0x158] sm:$0xff]
  %v2262 = vld [vmem:[%s0 + $0x160] sm:$0xff]
  %v2263 = vld [vmem:[%s0 + $0x168] sm:$0xff]
  %v2264 = vld [vmem:[%s0 + $0x170] sm:$0xff]
  %v2265 = vld [vmem:[%s0 + $0x178] sm:$0xff]
  %v2266 = vld [vmem:[%s0 + $0x180] sm:$0xff]
  %v2267 = vld [vmem:[%s0 + $0x188] sm:$0xff]
  %v2268 = vld [vmem:[%s0 + $0x190] sm:$0xff]
  %v2269 = vld [vmem:[%s0 + $0x198] sm:$0xff]
  %v2270 = vld [vmem:[%s0 + $0x1a0] sm:$0xff]
  %v2271 = vld [vmem:[%s0 + $0x1a8] sm:$0xff]
  %v2272 = vld [vmem:[%s0 + $0x1b0] sm:$0xff]
  %v2273 = vld [vmem:[%s0 + $0x1b8] sm:$0xff]
  %v2274 = vld [vmem:[%s0 + $0x1c0] sm:$0xff]
  %v2275 = vld [vmem:[%s0 + $0x1c8] sm:$0xff]
  %v2276 = vld [vmem:[%s0 + $0x1d0] sm:$0xff]
  %v2277 = vld [vmem:[%s0 + $0x1d8] sm:$0xff]
  %v2278 = vld [vmem:[%s0 + $0x1e0] sm:$0xff]
  %v2279 = vld [vmem:[%s0 + $0x1e8] sm:$0xff]
  %v2280 = vld [vmem:[%s0 + $0x1f0] sm:$0xff]
  %v2281 = vld [vmem:[%s0 + $0x1f8] sm:$0xff]
  %v2282 = vpack.c.bf16 %v2219, %v2218
  %v2283 = vpack.c.bf16 %v2221, %v2220
  %v2284 = vpack.c.bf16 %v2223, %v2222
  %v2285 = vpack.c.bf16 %v2225, %v2224
  %v2286 = vpack.c.bf16 %v2227, %v2226
  %v2287 = vpack.c.bf16 %v2229, %v2228
  %v2288 = vpack.c.bf16 %v2231, %v2230
  %v2289 = vpack.c.bf16 %v2233, %v2232
  %v2290 = vpack.c.bf16 %v2235, %v2234
  %v2291 = vpack.c.bf16 %v2237, %v2236
  %v2292 = vpack.c.bf16 %v2239, %v2238
  %v2293 = vpack.c.bf16 %v2241, %v2240
  %v2294 = vpack.c.bf16 %v2243, %v2242
  %v2295 = vpack.c.bf16 %v2245, %v2244
  %v2296 = vpack.c.bf16 %v2247, %v2246
  %v2297 = vpack.c.bf16 %v2249, %v2248
  %v2298 = vpack.c.bf16 %v2251, %v2250
  %v2299 = vpack.c.bf16 %v2253, %v2252
  %v2300 = vpack.c.bf16 %v2255, %v2254
  %v2301 = vpack.c.bf16 %v2257, %v2256
  %v2302 = vpack.c.bf16 %v2259, %v2258
  %v2303 = vpack.c.bf16 %v2261, %v2260
  %v2304 = vpack.c.bf16 %v2263, %v2262
  %v2305 = vpack.c.bf16 %v2265, %v2264
  %v2306 = vpack.c.bf16 %v2267, %v2266
  %v2307 = vpack.c.bf16 %v2269, %v2268
  %v2308 = vpack.c.bf16 %v2271, %v2270
  %v2309 = vpack.c.bf16 %v2273, %v2272
  %v2310 = vpack.c.bf16 %v2275, %v2274
  %v2311 = vpack.c.bf16 %v2277, %v2276
  %v2312 = vpack.c.bf16 %v2279, %v2278
  %v2313 = vpack.c.bf16 %v2281, %v2280
  %v2314 = vld [vmem:[%s7] sm:$0xf]
  %v2315 = vld [vmem:[%s7 + $0x4] sm:$0xf]
  %v2316 = vld [vmem:[%s7 + $0x8] sm:$0xf]
  %v2317 = vld [vmem:[%s7 + $0xc] sm:$0xf]
  %v2318 = vld [vmem:[%s7 + $0x10] sm:$0xf]
  %v2319 = vld [vmem:[%s7 + $0x14] sm:$0xf]
  %v2320 = vld [vmem:[%s7 + $0x18] sm:$0xf]
  %v2321 = vld [vmem:[%s7 + $0x1c] sm:$0xf]
  %v2322 = vld [vmem:[%s7 + $0x20] sm:$0xf]
  %v2323 = vld [vmem:[%s7 + $0x24] sm:$0xf]
  %v2324 = vld [vmem:[%s7 + $0x28] sm:$0xf]
  %v2325 = vld [vmem:[%s7 + $0x2c] sm:$0xf]
  %v2326 = vld [vmem:[%s7 + $0x30] sm:$0xf]
  %v2327 = vld [vmem:[%s7 + $0x34] sm:$0xf]
  %v2328 = vld [vmem:[%s7 + $0x38] sm:$0xf]
  %v2329 = vld [vmem:[%s7 + $0x3c] sm:$0xf]
  %v2330 = vld [vmem:[%s7 + $0x40] sm:$0xf]
  %v2331 = vld [vmem:[%s7 + $0x44] sm:$0xf]
  %v2332 = vld [vmem:[%s7 + $0x48] sm:$0xf]
  %v2333 = vld [vmem:[%s7 + $0x4c] sm:$0xf]
  %v2334 = vld [vmem:[%s7 + $0x50] sm:$0xf]
  %v2335 = vld [vmem:[%s7 + $0x54] sm:$0xf]
  %v2336 = vld [vmem:[%s7 + $0x58] sm:$0xf]
  %v2337 = vld [vmem:[%s7 + $0x5c] sm:$0xf]
  %v2338 = vld [vmem:[%s7 + $0x60] sm:$0xf]
  %v2339 = vld [vmem:[%s7 + $0x64] sm:$0xf]
  %v2340 = vld [vmem:[%s7 + $0x68] sm:$0xf]
  %v2341 = vld [vmem:[%s7 + $0x6c] sm:$0xf]
  %v2342 = vld [vmem:[%s7 + $0x70] sm:$0xf]
  %v2343 = vld [vmem:[%s7 + $0x74] sm:$0xf]
  %v2344 = vld [vmem:[%s7 + $0x78] sm:$0xf]
  %v2345 = vld [vmem:[%s7 + $0x7c] sm:$0xf]
  %v2362 = vunpack.c.l.b16 %v2330
  %v2363 = vunpack.c.l.b16 %v2331
  %v2364 = vunpack.c.l.b16 %v2332
  %v2365 = vunpack.c.l.b16 %v2333
  %v2366 = vunpack.c.l.b16 %v2334
  %v2367 = vunpack.c.l.b16 %v2335
  %v2368 = vunpack.c.l.b16 %v2336
  %v2369 = vunpack.c.l.b16 %v2337
  %v2370 = vunpack.c.l.b16 %v2338
  %v2371 = vunpack.c.l.b16 %v2339
  %v2372 = vunpack.c.l.b16 %v2340
  %v2373 = vunpack.c.l.b16 %v2341
  %v2374 = vunpack.c.l.b16 %v2342
  %v2375 = vunpack.c.l.b16 %v2343
  %v2376 = vunpack.c.l.b16 %v2344
  %v2377 = vunpack.c.l.b16 %v2345
  %v2378 = vpack.c.b16 %v2363, %v2362
  %v2379 = vpack.c.b16 %v2365, %v2364
  %v2380 = vpack.c.b16 %v2367, %v2366
  %v2381 = vpack.c.b16 %v2369, %v2368
  %v2382 = vpack.c.b16 %v2371, %v2370
  %v2383 = vpack.c.b16 %v2373, %v2372
  %v2384 = vpack.c.b16 %v2375, %v2374
  %v2385 = vpack.c.b16 %v2377, %v2376
  %2394 = vmatpush.bf16.msra.mxu0 %v2385
  %2395 = vmatpush.bf16.msra.mxu0 %v2384
  %2396 = vmatpush.bf16.msra.mxu0 %v2383
  %2397 = vmatpush.bf16.msra.mxu0 %v2382
  %2398 = vmatpush.bf16.msra.mxu0 %v2381
  %2399 = vmatpush.bf16.msra.mxu0 %v2380
  %2400 = vmatpush.bf16.msra.mxu0 %v2379
  %2401 = vmatpush.bf16.msra.mxu0 %v2378
  %2402 = vmatmul.bf16.gmra.mxu0 %v2186
  %v2403 = vpop.f32.mrf.mxu0
  %v2404 = vadd.f32 0.0, %v2403
  %v2405 = vpop.f32.mrf.mxu0
  %v2406 = vadd.f32 0.0, %v2405
  %2407 = vmatmul.bf16.gmra.mxu0 %v2187
  %v2408 = vpop.f32.mrf.mxu0
  %v2409 = vadd.f32 0.0, %v2408
  %v2410 = vpop.f32.mrf.mxu0
  %v2411 = vadd.f32 0.0, %v2410
  %2412 = vmatmul.bf16.gmra.mxu0 %v2188
  %v2413 = vpop.f32.mrf.mxu0
  %v2414 = vadd.f32 0.0, %v2413
  %v2415 = vpop.f32.mrf.mxu0
  %v2416 = vadd.f32 0.0, %v2415
  %2417 = vmatmul.bf16.gmra.mxu0 %v2189
  %v2418 = vpop.f32.mrf.mxu0
  %v2419 = vadd.f32 0.0, %v2418
  %v2420 = vpop.f32.mrf.mxu0
  %v2421 = vadd.f32 0.0, %v2420
  %2422 = vmatmul.bf16.gmra.mxu0 %v2190
  %v2423 = vpop.f32.mrf.mxu0
  %v2424 = vadd.f32 0.0, %v2423
  %v2425 = vpop.f32.mrf.mxu0
  %v2426 = vadd.f32 0.0, %v2425
  %2427 = vmatmul.bf16.gmra.mxu0 %v2191
  %v2428 = vpop.f32.mrf.mxu0
  %v2429 = vadd.f32 0.0, %v2428
  %v2430 = vpop.f32.mrf.mxu0
  %v2431 = vadd.f32 0.0, %v2430
  %2432 = vmatmul.bf16.gmra.mxu0 %v2192
  %v2433 = vpop.f32.mrf.mxu0
  %v2434 = vadd.f32 0.0, %v2433
  %v2435 = vpop.f32.mrf.mxu0
  %v2436 = vadd.f32 0.0, %v2435
  %2437 = vmatmul.bf16.gmra.mxu0 %v2193
  %v2438 = vpop.f32.mrf.mxu0
  %v2439 = vadd.f32 0.0, %v2438
  %v2440 = vpop.f32.mrf.mxu0
  %v2441 = vadd.f32 0.0, %v2440
  %2442 = vmatmul.bf16.gmra.mxu0 %v2194
  %v2443 = vpop.f32.mrf.mxu0
  %v2444 = vadd.f32 0.0, %v2443
  %v2445 = vpop.f32.mrf.mxu0
  %v2446 = vadd.f32 0.0, %v2445
  %2447 = vmatmul.bf16.gmra.mxu0 %v2195
  %v2448 = vpop.f32.mrf.mxu0
  %v2449 = vadd.f32 0.0, %v2448
  %v2450 = vpop.f32.mrf.mxu0
  %v2451 = vadd.f32 0.0, %v2450
  %2452 = vmatmul.bf16.gmra.mxu0 %v2196
  %v2453 = vpop.f32.mrf.mxu0
  %v2454 = vadd.f32 0.0, %v2453
  %v2455 = vpop.f32.mrf.mxu0
  %v2456 = vadd.f32 0.0, %v2455
  %2457 = vmatmul.bf16.gmra.mxu0 %v2197
  %v2458 = vpop.f32.mrf.mxu0
  %v2459 = vadd.f32 0.0, %v2458
  %v2460 = vpop.f32.mrf.mxu0
  %v2461 = vadd.f32 0.0, %v2460
  %2462 = vmatmul.bf16.gmra.mxu0 %v2198
  %v2463 = vpop.f32.mrf.mxu0
  %v2464 = vadd.f32 0.0, %v2463
  %v2465 = vpop.f32.mrf.mxu0
  %v2466 = vadd.f32 0.0, %v2465
  %2467 = vmatmul.bf16.gmra.mxu0 %v2199
  %v2468 = vpop.f32.mrf.mxu0
  %v2469 = vadd.f32 0.0, %v2468
  %v2470 = vpop.f32.mrf.mxu0
  %v2471 = vadd.f32 0.0, %v2470
  %2472 = vmatmul.bf16.gmra.mxu0 %v2200
  %v2473 = vpop.f32.mrf.mxu0
  %v2474 = vadd.f32 0.0, %v2473
  %v2475 = vpop.f32.mrf.mxu0
  %v2476 = vadd.f32 0.0, %v2475
  %2477 = vmatmul.bf16.gmra.mxu0 %v2201
  %v2478 = vpop.f32.mrf.mxu0
  %v2479 = vadd.f32 0.0, %v2478
  %v2480 = vpop.f32.mrf.mxu0
  %v2481 = vadd.f32 0.0, %v2480
  %2482 = vmatmul.bf16.gmra.mxu0 %v2202
  %v2483 = vpop.f32.mrf.mxu0
  %v2484 = vadd.f32 0.0, %v2483
  %v2485 = vpop.f32.mrf.mxu0
  %v2486 = vadd.f32 0.0, %v2485
  %2487 = vmatmul.bf16.gmra.mxu0 %v2203
  %v2488 = vpop.f32.mrf.mxu0
  %v2489 = vadd.f32 0.0, %v2488
  %v2490 = vpop.f32.mrf.mxu0
  %v2491 = vadd.f32 0.0, %v2490
  %2492 = vmatmul.bf16.gmra.mxu0 %v2204
  %v2493 = vpop.f32.mrf.mxu0
  %v2494 = vadd.f32 0.0, %v2493
  %v2495 = vpop.f32.mrf.mxu0
  %v2496 = vadd.f32 0.0, %v2495
  %2497 = vmatmul.bf16.gmra.mxu0 %v2205
  %v2498 = vpop.f32.mrf.mxu0
  %v2499 = vadd.f32 0.0, %v2498
  %v2500 = vpop.f32.mrf.mxu0
  %v2501 = vadd.f32 0.0, %v2500
  %2502 = vmatmul.bf16.gmra.mxu0 %v2206
  %v2503 = vpop.f32.mrf.mxu0
  %v2504 = vadd.f32 0.0, %v2503
  %v2505 = vpop.f32.mrf.mxu0
  %v2506 = vadd.f32 0.0, %v2505
  %2507 = vmatmul.bf16.gmra.mxu0 %v2207
  %v2508 = vpop.f32.mrf.mxu0
  %v2509 = vadd.f32 0.0, %v2508
  %v2510 = vpop.f32.mrf.mxu0
  %v2511 = vadd.f32 0.0, %v2510
  %2512 = vmatmul.bf16.gmra.mxu0 %v2208
  %v2513 = vpop.f32.mrf.mxu0
  %v2514 = vadd.f32 0.0, %v2513
  %v2515 = vpop.f32.mrf.mxu0
  %v2516 = vadd.f32 0.0, %v2515
  %2517 = vmatmul.bf16.gmra.mxu0 %v2209
  %v2518 = vpop.f32.mrf.mxu0
  %v2519 = vadd.f32 0.0, %v2518
  %v2520 = vpop.f32.mrf.mxu0
  %v2521 = vadd.f32 0.0, %v2520
  %2522 = vmatmul.bf16.gmra.mxu0 %v2210
  %v2523 = vpop.f32.mrf.mxu0
  %v2524 = vadd.f32 0.0, %v2523
  %v2525 = vpop.f32.mrf.mxu0
  %v2526 = vadd.f32 0.0, %v2525
  %2527 = vmatmul.bf16.gmra.mxu0 %v2211
  %v2528 = vpop.f32.mrf.mxu0
  %v2529 = vadd.f32 0.0, %v2528
  %v2530 = vpop.f32.mrf.mxu0
  %v2531 = vadd.f32 0.0, %v2530
  %2532 = vmatmul.bf16.gmra.mxu0 %v2212
  %v2533 = vpop.f32.mrf.mxu0
  %v2534 = vadd.f32 0.0, %v2533
  %v2535 = vpop.f32.mrf.mxu0
  %v2536 = vadd.f32 0.0, %v2535
  %2537 = vmatmul.bf16.gmra.mxu0 %v2213
  %v2538 = vpop.f32.mrf.mxu0
  %v2539 = vadd.f32 0.0, %v2538
  %v2540 = vpop.f32.mrf.mxu0
  %v2541 = vadd.f32 0.0, %v2540
  %2542 = vmatmul.bf16.gmra.mxu0 %v2214
  %v2543 = vpop.f32.mrf.mxu0
  %v2544 = vadd.f32 0.0, %v2543
  %v2545 = vpop.f32.mrf.mxu0
  %v2546 = vadd.f32 0.0, %v2545
  %2547 = vmatmul.bf16.gmra.mxu0 %v2215
  %v2548 = vpop.f32.mrf.mxu0
  %v2549 = vadd.f32 0.0, %v2548
  %v2550 = vpop.f32.mrf.mxu0
  %v2551 = vadd.f32 0.0, %v2550
  %2552 = vmatmul.bf16.gmra.mxu0 %v2216
  %v2553 = vpop.f32.mrf.mxu0
  %v2554 = vadd.f32 0.0, %v2553
  %v2555 = vpop.f32.mrf.mxu0
  %v2556 = vadd.f32 0.0, %v2555
  %2557 = vmatmul.bf16.gmra.mxu0 %v2217
  %v2558 = vpop.f32.mrf.mxu0
  %v2559 = vadd.f32 0.0, %v2558
  %v2560 = vpop.f32.mrf.mxu0
  %v2561 = vadd.f32 0.0, %v2560
  %2562 = vdwg.mxu0
  %v2579 = vunpack.c.l.b16 %v2314
  %v2580 = vunpack.c.l.b16 %v2315
  %v2581 = vunpack.c.l.b16 %v2316
  %v2582 = vunpack.c.l.b16 %v2317
  %v2583 = vunpack.c.l.b16 %v2318
  %v2584 = vunpack.c.l.b16 %v2319
  %v2585 = vunpack.c.l.b16 %v2320
  %v2586 = vunpack.c.l.b16 %v2321
  %v2587 = vunpack.c.l.b16 %v2322
  %v2588 = vunpack.c.l.b16 %v2323
  %v2589 = vunpack.c.l.b16 %v2324
  %v2590 = vunpack.c.l.b16 %v2325
  %v2591 = vunpack.c.l.b16 %v2326
  %v2592 = vunpack.c.l.b16 %v2327
  %v2593 = vunpack.c.l.b16 %v2328
  %v2594 = vunpack.c.l.b16 %v2329
  %v2595 = vpack.c.b16 %v2580, %v2579
  %v2596 = vpack.c.b16 %v2582, %v2581
  %v2597 = vpack.c.b16 %v2584, %v2583
  %v2598 = vpack.c.b16 %v2586, %v2585
  %v2599 = vpack.c.b16 %v2588, %v2587
  %v2600 = vpack.c.b16 %v2590, %v2589
  %v2601 = vpack.c.b16 %v2592, %v2591
  %v2602 = vpack.c.b16 %v2594, %v2593
  %2611 = vmatpush.bf16.msra.mxu0 %v2602
  %2612 = vmatpush.bf16.msra.mxu0 %v2601
  %2613 = vmatpush.bf16.msra.mxu0 %v2600
  %2614 = vmatpush.bf16.msra.mxu0 %v2599
  %2615 = vmatpush.bf16.msra.mxu0 %v2598
  %2616 = vmatpush.bf16.msra.mxu0 %v2597
  %2617 = vmatpush.bf16.msra.mxu0 %v2596
  %2618 = vmatpush.bf16.msra.mxu0 %v2595
  %2619 = vmatmul.bf16.gmra.mxu0 %v2282
  %v2620 = vpop.f32.mrf.mxu0
  %v2621 = vadd.f32 %v2404, %v2620
  %v2622 = vpop.f32.mrf.mxu0
  %v2623 = vadd.f32 %v2406, %v2622
  %2624 = vmatmul.bf16.gmra.mxu0 %v2283
  %v2625 = vpop.f32.mrf.mxu0
  %v2626 = vadd.f32 %v2409, %v2625
  %v2627 = vpop.f32.mrf.mxu0
  %v2628 = vadd.f32 %v2411, %v2627
  %2629 = vmatmul.bf16.gmra.mxu0 %v2284
  %v2630 = vpop.f32.mrf.mxu0
  %v2631 = vadd.f32 %v2414, %v2630
  %v2632 = vpop.f32.mrf.mxu0
  %v2633 = vadd.f32 %v2416, %v2632
  %2634 = vmatmul.bf16.gmra.mxu0 %v2285
  %v2635 = vpop.f32.mrf.mxu0
  %v2636 = vadd.f32 %v2419, %v2635
  %v2637 = vpop.f32.mrf.mxu0
  %v2638 = vadd.f32 %v2421, %v2637
  %2639 = vmatmul.bf16.gmra.mxu0 %v2286
  %v2640 = vpop.f32.mrf.mxu0
  %v2641 = vadd.f32 %v2424, %v2640
  %v2642 = vpop.f32.mrf.mxu0
  %v2643 = vadd.f32 %v2426, %v2642
  %2644 = vmatmul.bf16.gmra.mxu0 %v2287
  %v2645 = vpop.f32.mrf.mxu0
  %v2646 = vadd.f32 %v2429, %v2645
  %v2647 = vpop.f32.mrf.mxu0
  %v2648 = vadd.f32 %v2431, %v2647
  %2649 = vmatmul.bf16.gmra.mxu0 %v2288
  %v2650 = vpop.f32.mrf.mxu0
  %v2651 = vadd.f32 %v2434, %v2650
  %v2652 = vpop.f32.mrf.mxu0
  %v2653 = vadd.f32 %v2436, %v2652
  %2654 = vmatmul.bf16.gmra.mxu0 %v2289
  %v2655 = vpop.f32.mrf.mxu0
  %v2656 = vadd.f32 %v2439, %v2655
  %v2657 = vpop.f32.mrf.mxu0
  %v2658 = vadd.f32 %v2441, %v2657
  %2659 = vmatmul.bf16.gmra.mxu0 %v2290
  %v2660 = vpop.f32.mrf.mxu0
  %v2661 = vadd.f32 %v2444, %v2660
  %v2662 = vpop.f32.mrf.mxu0
  %v2663 = vadd.f32 %v2446, %v2662
  %2664 = vmatmul.bf16.gmra.mxu0 %v2291
  %v2665 = vpop.f32.mrf.mxu0
  %v2666 = vadd.f32 %v2449, %v2665
  %v2667 = vpop.f32.mrf.mxu0
  %v2668 = vadd.f32 %v2451, %v2667
  %2669 = vmatmul.bf16.gmra.mxu0 %v2292
  %v2670 = vpop.f32.mrf.mxu0
  %v2671 = vadd.f32 %v2454, %v2670
  %v2672 = vpop.f32.mrf.mxu0
  %v2673 = vadd.f32 %v2456, %v2672
  %2674 = vmatmul.bf16.gmra.mxu0 %v2293
  %v2675 = vpop.f32.mrf.mxu0
  %v2676 = vadd.f32 %v2459, %v2675
  %v2677 = vpop.f32.mrf.mxu0
  %v2678 = vadd.f32 %v2461, %v2677
  %2679 = vmatmul.bf16.gmra.mxu0 %v2294
  %v2680 = vpop.f32.mrf.mxu0
  %v2681 = vadd.f32 %v2464, %v2680
  %v2682 = vpop.f32.mrf.mxu0
  %v2683 = vadd.f32 %v2466, %v2682
  %2684 = vmatmul.bf16.gmra.mxu0 %v2295
  %v2685 = vpop.f32.mrf.mxu0
  %v2686 = vadd.f32 %v2469, %v2685
  %v2687 = vpop.f32.mrf.mxu0
  %v2688 = vadd.f32 %v2471, %v2687
  %2689 = vmatmul.bf16.gmra.mxu0 %v2296
  %v2690 = vpop.f32.mrf.mxu0
  %v2691 = vadd.f32 %v2474, %v2690
  %v2692 = vpop.f32.mrf.mxu0
  %v2693 = vadd.f32 %v2476, %v2692
  %2694 = vmatmul.bf16.gmra.mxu0 %v2297
  %v2695 = vpop.f32.mrf.mxu0
  %v2696 = vadd.f32 %v2479, %v2695
  %v2697 = vpop.f32.mrf.mxu0
  %v2698 = vadd.f32 %v2481, %v2697
  %2699 = vmatmul.bf16.gmra.mxu0 %v2298
  %v2700 = vpop.f32.mrf.mxu0
  %v2701 = vadd.f32 %v2484, %v2700
  %v2702 = vpop.f32.mrf.mxu0
  %v2703 = vadd.f32 %v2486, %v2702
  %2704 = vmatmul.bf16.gmra.mxu0 %v2299
  %v2705 = vpop.f32.mrf.mxu0
  %v2706 = vadd.f32 %v2489, %v2705
  %v2707 = vpop.f32.mrf.mxu0
  %v2708 = vadd.f32 %v2491, %v2707
  %2709 = vmatmul.bf16.gmra.mxu0 %v2300
  %v2710 = vpop.f32.mrf.mxu0
  %v2711 = vadd.f32 %v2494, %v2710
  %v2712 = vpop.f32.mrf.mxu0
  %v2713 = vadd.f32 %v2496, %v2712
  %2714 = vmatmul.bf16.gmra.mxu0 %v2301
  %v2715 = vpop.f32.mrf.mxu0
  %v2716 = vadd.f32 %v2499, %v2715
  %v2717 = vpop.f32.mrf.mxu0
  %v2718 = vadd.f32 %v2501, %v2717
  %2719 = vmatmul.bf16.gmra.mxu0 %v2302
  %v2720 = vpop.f32.mrf.mxu0
  %v2721 = vadd.f32 %v2504, %v2720
  %v2722 = vpop.f32.mrf.mxu0
  %v2723 = vadd.f32 %v2506, %v2722
  %2724 = vmatmul.bf16.gmra.mxu0 %v2303
  %v2725 = vpop.f32.mrf.mxu0
  %v2726 = vadd.f32 %v2509, %v2725
  %v2727 = vpop.f32.mrf.mxu0
  %v2728 = vadd.f32 %v2511, %v2727
  %2729 = vmatmul.bf16.gmra.mxu0 %v2304
  %v2730 = vpop.f32.mrf.mxu0
  %v2731 = vadd.f32 %v2514, %v2730
  %v2732 = vpop.f32.mrf.mxu0
  %v2733 = vadd.f32 %v2516, %v2732
  %2734 = vmatmul.bf16.gmra.mxu0 %v2305
  %v2735 = vpop.f32.mrf.mxu0
  %v2736 = vadd.f32 %v2519, %v2735
  %v2737 = vpop.f32.mrf.mxu0
  %v2738 = vadd.f32 %v2521, %v2737
  %2739 = vmatmul.bf16.gmra.mxu0 %v2306
  %v2740 = vpop.f32.mrf.mxu0
  %v2741 = vadd.f32 %v2524, %v2740
  %v2742 = vpop.f32.mrf.mxu0
  %v2743 = vadd.f32 %v2526, %v2742
  %2744 = vmatmul.bf16.gmra.mxu0 %v2307
  %v2745 = vpop.f32.mrf.mxu0
  %v2746 = vadd.f32 %v2529, %v2745
  %v2747 = vpop.f32.mrf.mxu0
  %v2748 = vadd.f32 %v2531, %v2747
  %2749 = vmatmul.bf16.gmra.mxu0 %v2308
  %v2750 = vpop.f32.mrf.mxu0
  %v2751 = vadd.f32 %v2534, %v2750
  %v2752 = vpop.f32.mrf.mxu0
  %v2753 = vadd.f32 %v2536, %v2752
  %2754 = vmatmul.bf16.gmra.mxu0 %v2309
  %v2755 = vpop.f32.mrf.mxu0
  %v2756 = vadd.f32 %v2539, %v2755
  %v2757 = vpop.f32.mrf.mxu0
  %v2758 = vadd.f32 %v2541, %v2757
  %2759 = vmatmul.bf16.gmra.mxu0 %v2310
  %v2760 = vpop.f32.mrf.mxu0
  %v2761 = vadd.f32 %v2544, %v2760
  %v2762 = vpop.f32.mrf.mxu0
  %v2763 = vadd.f32 %v2546, %v2762
  %2764 = vmatmul.bf16.gmra.mxu0 %v2311
  %v2765 = vpop.f32.mrf.mxu0
  %v2766 = vadd.f32 %v2549, %v2765
  %v2767 = vpop.f32.mrf.mxu0
  %v2768 = vadd.f32 %v2551, %v2767
  %2769 = vmatmul.bf16.gmra.mxu0 %v2312
  %v2770 = vpop.f32.mrf.mxu0
  %v2771 = vadd.f32 %v2554, %v2770
  %v2772 = vpop.f32.mrf.mxu0
  %v2773 = vadd.f32 %v2556, %v2772
  %2774 = vmatmul.bf16.gmra.mxu0 %v2313
  %v2775 = vpop.f32.mrf.mxu0
  %v2776 = vadd.f32 %v2559, %v2775
  %v2777 = vpop.f32.mrf.mxu0
  %v2778 = vadd.f32 %v2561, %v2777
  %2779 = vdwg.mxu0
  %v2780 = vld [vmem:[%s8] sm:$0x1]
  %v2782 = vperm.slane %v2780, 0
  %v2784 = vadd.f32 %v2621, %v2782
  %v2785 = vadd.f32 %v2623, %v2782
  %v2786 = vadd.f32 %v2626, %v2782
  %v2787 = vadd.f32 %v2628, %v2782
  %v2788 = vadd.f32 %v2631, %v2782
  %v2789 = vadd.f32 %v2633, %v2782
  %v2790 = vadd.f32 %v2636, %v2782
  %v2791 = vadd.f32 %v2638, %v2782
  %v2792 = vadd.f32 %v2641, %v2782
  %v2793 = vadd.f32 %v2643, %v2782
  %v2794 = vadd.f32 %v2646, %v2782
  %v2795 = vadd.f32 %v2648, %v2782
  %v2796 = vadd.f32 %v2651, %v2782
  %v2797 = vadd.f32 %v2653, %v2782
  %v2798 = vadd.f32 %v2656, %v2782
  %v2799 = vadd.f32 %v2658, %v2782
  %v2800 = vadd.f32 %v2661, %v2782
  %v2801 = vadd.f32 %v2663, %v2782
  %v2802 = vadd.f32 %v2666, %v2782
  %v2803 = vadd.f32 %v2668, %v2782
  %v2804 = vadd.f32 %v2671, %v2782
  %v2805 = vadd.f32 %v2673, %v2782
  %v2806 = vadd.f32 %v2676, %v2782
  %v2807 = vadd.f32 %v2678, %v2782
  %v2808 = vadd.f32 %v2681, %v2782
  %v2809 = vadd.f32 %v2683, %v2782
  %v2810 = vadd.f32 %v2686, %v2782
  %v2811 = vadd.f32 %v2688, %v2782
  %v2812 = vadd.f32 %v2691, %v2782
  %v2813 = vadd.f32 %v2693, %v2782
  %v2814 = vadd.f32 %v2696, %v2782
  %v2815 = vadd.f32 %v2698, %v2782
  %v2816 = vadd.f32 %v2701, %v2782
  %v2817 = vadd.f32 %v2703, %v2782
  %v2818 = vadd.f32 %v2706, %v2782
  %v2819 = vadd.f32 %v2708, %v2782
  %v2820 = vadd.f32 %v2711, %v2782
  %v2821 = vadd.f32 %v2713, %v2782
  %v2822 = vadd.f32 %v2716, %v2782
  %v2823 = vadd.f32 %v2718, %v2782
  %v2824 = vadd.f32 %v2721, %v2782
  %v2825 = vadd.f32 %v2723, %v2782
  %v2826 = vadd.f32 %v2726, %v2782
  %v2827 = vadd.f32 %v2728, %v2782
  %v2828 = vadd.f32 %v2731, %v2782
  %v2829 = vadd.f32 %v2733, %v2782
  %v2830 = vadd.f32 %v2736, %v2782
  %v2831 = vadd.f32 %v2738, %v2782
  %v2832 = vadd.f32 %v2741, %v2782
  %v2833 = vadd.f32 %v2743, %v2782
  %v2834 = vadd.f32 %v2746, %v2782
  %v2835 = vadd.f32 %v2748, %v2782
  %v2836 = vadd.f32 %v2751, %v2782
  %v2837 = vadd.f32 %v2753, %v2782
  %v2838 = vadd.f32 %v2756, %v2782
  %v2839 = vadd.f32 %v2758, %v2782
  %v2840 = vadd.f32 %v2761, %v2782
  %v2841 = vadd.f32 %v2763, %v2782
  %v2842 = vadd.f32 %v2766, %v2782
  %v2843 = vadd.f32 %v2768, %v2782
  %v2844 = vadd.f32 %v2771, %v2782
  %v2845 = vadd.f32 %v2773, %v2782
  %v2846 = vadd.f32 %v2776, %v2782
  %v2847 = vadd.f32 %v2778, %v2782
  %2848 = vst.msk [vmem:[%s9] sm:$0xff] %vm393, %v2784
  %2849 = vst.msk [vmem:[%s9 + $0x8] sm:$0xff] %vm393, %v2785
  %2850 = vst.msk [vmem:[%s9 + $0x10] sm:$0xff] %vm393, %v2786
  %2851 = vst.msk [vmem:[%s9 + $0x18] sm:$0xff] %vm393, %v2787
  %2852 = vst.msk [vmem:[%s9 + $0x20] sm:$0xff] %vm393, %v2788
  %2853 = vst.msk [vmem:[%s9 + $0x28] sm:$0xff] %vm393, %v2789
  %2854 = vst.msk [vmem:[%s9 + $0x30] sm:$0xff] %vm393, %v2790
  %2855 = vst.msk [vmem:[%s9 + $0x38] sm:$0xff] %vm393, %v2791
  %2856 = vst.msk [vmem:[%s9 + $0x40] sm:$0xff] %vm393, %v2792
  %2857 = vst.msk [vmem:[%s9 + $0x48] sm:$0xff] %vm393, %v2793
  %2858 = vst.msk [vmem:[%s9 + $0x50] sm:$0xff] %vm393, %v2794
  %2859 = vst.msk [vmem:[%s9 + $0x58] sm:$0xff] %vm393, %v2795
  %2860 = vst.msk [vmem:[%s9 + $0x60] sm:$0xff] %vm393, %v2796
  %2861 = vst.msk [vmem:[%s9 + $0x68] sm:$0xff] %vm393, %v2797
  %2862 = vst.msk [vmem:[%s9 + $0x70] sm:$0xff] %vm393, %v2798
  %2863 = vst.msk [vmem:[%s9 + $0x78] sm:$0xff] %vm393, %v2799
  %2864 = vst.msk [vmem:[%s9 + $0x80] sm:$0xff] %vm393, %v2800
  %2865 = vst.msk [vmem:[%s9 + $0x88] sm:$0xff] %vm393, %v2801
  %2866 = vst.msk [vmem:[%s9 + $0x90] sm:$0xff] %vm393, %v2802
  %2867 = vst.msk [vmem:[%s9 + $0x98] sm:$0xff] %vm393, %v2803
  %2868 = vst.msk [vmem:[%s9 + $0xa0] sm:$0xff] %vm393, %v2804
  %2869 = vst.msk [vmem:[%s9 + $0xa8] sm:$0xff] %vm393, %v2805
  %2870 = vst.msk [vmem:[%s9 + $0xb0] sm:$0xff] %vm393, %v2806
  %2871 = vst.msk [vmem:[%s9 + $0xb8] sm:$0xff] %vm393, %v2807
  %2872 = vst.msk [vmem:[%s9 + $0xc0] sm:$0xff] %vm393, %v2808
  %2873 = vst.msk [vmem:[%s9 + $0xc8] sm:$0xff] %vm393, %v2809
  %2874 = vst.msk [vmem:[%s9 + $0xd0] sm:$0xff] %vm393, %v2810
  %2875 = vst.msk [vmem:[%s9 + $0xd8] sm:$0xff] %vm393, %v2811
  %2876 = vst.msk [vmem:[%s9 + $0xe0] sm:$0xff] %vm393, %v2812
  %2877 = vst.msk [vmem:[%s9 + $0xe8] sm:$0xff] %vm393, %v2813
  %2878 = vst.msk [vmem:[%s9 + $0xf0] sm:$0xff] %vm393, %v2814
  %2879 = vst.msk [vmem:[%s9 + $0xf8] sm:$0xff] %vm393, %v2815
  %2880 = vst.msk [vmem:[%s9 + $0x100] sm:$0xff] %vm393, %v2816
  %2881 = vst.msk [vmem:[%s9 + $0x108] sm:$0xff] %vm393, %v2817
  %2882 = vst.msk [vmem:[%s9 + $0x110] sm:$0xff] %vm393, %v2818
  %2883 = vst.msk [vmem:[%s9 + $0x118] sm:$0xff] %vm393, %v2819
  %2884 = vst.msk [vmem:[%s9 + $0x120] sm:$0xff] %vm393, %v2820
  %2885 = vst.msk [vmem:[%s9 + $0x128] sm:$0xff] %vm393, %v2821
  %2886 = vst.msk [vmem:[%s9 + $0x130] sm:$0xff] %vm393, %v2822
  %2887 = vst.msk [vmem:[%s9 + $0x138] sm:$0xff] %vm393, %v2823
  %2888 = vst.msk [vmem:[%s9 + $0x140] sm:$0xff] %vm393, %v2824
  %2889 = vst.msk [vmem:[%s9 + $0x148] sm:$0xff] %vm393, %v2825
  %2890 = vst.msk [vmem:[%s9 + $0x150] sm:$0xff] %vm393, %v2826
  %2891 = vst.msk [vmem:[%s9 + $0x158] sm:$0xff] %vm393, %v2827
  %2892 = vst.msk [vmem:[%s9 + $0x160] sm:$0xff] %vm393, %v2828
  %2893 = vst.msk [vmem:[%s9 + $0x168] sm:$0xff] %vm393, %v2829
  %2894 = vst.msk [vmem:[%s9 + $0x170] sm:$0xff] %vm393, %v2830
  %2895 = vst.msk [vmem:[%s9 + $0x178] sm:$0xff] %vm393, %v2831
  %2896 = vst.msk [vmem:[%s9 + $0x180] sm:$0xff] %vm393, %v2832
  %2897 = vst.msk [vmem:[%s9 + $0x188] sm:$0xff] %vm393, %v2833
  %2898 = vst.msk [vmem:[%s9 + $0x190] sm:$0xff] %vm393, %v2834
  %2899 = vst.msk [vmem:[%s9 + $0x198] sm:$0xff] %vm393, %v2835
  %2900 = vst.msk [vmem:[%s9 + $0x1a0] sm:$0xff] %vm393, %v2836
  %2901 = vst.msk [vmem:[%s9 + $0x1a8] sm:$0xff] %vm393, %v2837
  %2902 = vst.msk [vmem:[%s9 + $0x1b0] sm:$0xff] %vm393, %v2838
  %2903 = vst.msk [vmem:[%s9 + $0x1b8] sm:$0xff] %vm393, %v2839
  %2904 = vst.msk [vmem:[%s9 + $0x1c0] sm:$0xff] %vm393, %v2840
  %2905 = vst.msk [vmem:[%s9 + $0x1c8] sm:$0xff] %vm393, %v2841
  %2906 = vst.msk [vmem:[%s9 + $0x1d0] sm:$0xff] %vm393, %v2842
  %2907 = vst.msk [vmem:[%s9 + $0x1d8] sm:$0xff] %vm393, %v2843
  %2908 = vst.msk [vmem:[%s9 + $0x1e0] sm:$0xff] %vm393, %v2844
  %2909 = vst.msk [vmem:[%s9 + $0x1e8] sm:$0xff] %vm393, %v2845
  %2910 = vst.msk [vmem:[%s9 + $0x1f0] sm:$0xff] %vm393, %v2846
  %2911 = vst.msk [vmem:[%s9 + $0x1f8] sm:$0xff] %vm393, %v2847
  // Predicated region
  $region38: #{pem_forward.15} parent=0 // pred_check
    _
  $region39: #{pem_forward.15} parent=0 // pred_check_branch
    %2913 = sbr.rel (0) target = $region41
  $region40: #{pem_forward.15} parent=0 // pred_region
    _
  $region41: #{pem_forward.15} parent=0 // pred_fallthru
    _
  // Predicated region
  $region42: #{pem_forward.15} parent=0 // pred_check
    _
  $region43: #{pem_forward.15} parent=0 // pred_check_branch
    %2915 = sbr.rel (0) target = $region45
  $region44: #{pem_forward.15} parent=0 // pred_region
    _
  $region45: #{pem_forward.15} parent=0 // pred_fallthru
    _

</llo_original>
